<compile_context>
chip_gen: v7x
topology: tpu7x:2x2x1
jax: 0.10.0
libtpu: 0.0.40
codegen_flags: <defaults>
</compile_context>

<pallas_src>
import functools

import jax
import jax.numpy as jnp
from jax.experimental import pallas as pl
from jax.experimental.pallas import tpu as pltpu


def _round_up(v, m):
    return ((v + m - 1) // m) * m


def make_fused_convlstm_kernel(H, W, Cin, hid, kh, kw, Cpad, TR):
    """Fused T-step ConvLSTM recurrence for one batch element.

    grid = (B, T); scratch (comb slab, h, c) persists across the inner T axis.
    """
    ph, pw = kh // 2, kw // 2
    Hp, Wp = H + 2 * ph, W + 2 * pw
    C = Cin + hid
    assert Cpad >= C
    NR = H // TR
    assert H % TR == 0

    def kernel(x_ref, hc0_ref, w_ref, b_ref, hc_out_ref,
               comb_ref, h_ref, c_ref):
        f32 = jnp.float32
        t = pl.program_id(1)

        @pl.when(t == 0)
        def _init():
            # Zero the padded combined slab ONCE per sequence: this provides
            # the "same"-conv zero border and the per-tap channel zero-pad;
            # later steps only rewrite the interior (h|x) channels.
            comb_ref[...] = jnp.zeros_like(comb_ref)
            hc0 = hc0_ref[0].astype(f32)            # [H, W, 2*hid] (h | c)
            h_ref[...] = hc0[..., :hid]
            c_ref[...] = hc0[..., hid:2 * hid]

        # Build this step's combined (h | x) interior.  Slab channel order is
        # [h (hid), x (Cin), zeros] -- h first so the per-step recurrent-h copy
        # lands lane-aligned at offset 0 of the 64-lane tap block.  The weight
        # packing (pack_convlstm_params) matches this order.
        comb_ref[ph:ph + H, pw:pw + W, 0:hid] = h_ref[...]
        comb_ref[ph:ph + H, pw:pw + W, hid:hid + Cin] = x_ref[0, 0].astype(f32)

        b = b_ref[0].astype(f32)                    # [4*hid]

        def row_tile(r, carry):
            r0 = pl.multiple_of(r * TR, TR)
            # im2col for TR rows: 9 taps, each tap block 64-lane aligned.
            pieces = [comb_ref[pl.ds(r0 + ki, TR), kj:kj + W, :]
                      for ki in range(kh) for kj in range(kw)]
            patches = jnp.concatenate(pieces, axis=-1)       # [TR, W, kh*kw*Cpad]

            # Whole convolution for this row tile = ONE MXU matmul.
            acc = jax.lax.dot_general(
                patches, w_ref[...].astype(f32),
                dimension_numbers=(((2,), (0,)), ((), ())),
                preferred_element_type=f32)                   # [TR, W, 4*hid]
            acc = acc + b

            # Single transcendental pass over all 128 gate lanes:
            #   sigmoid(x) = 0.5 * (1 + tanh(x / 2))   (i, f, o lanes)
            #   tanh(x)                                 (g lanes)
            lane = jax.lax.broadcasted_iota(jnp.int32, acc.shape, 2)
            is_sig = lane < 3 * hid
            th = jnp.tanh(jnp.where(is_sig, 0.5 * acc, acc))
            act = jnp.where(is_sig, 0.5 * (th + 1.0), th)

            # Gate order matches torch.split(combined_conv, hidden_dim, dim=1).
            i = act[..., 0 * hid:1 * hid]
            f = act[..., 1 * hid:2 * hid]
            o = act[..., 2 * hid:3 * hid]
            g = act[..., 3 * hid:4 * hid]

            c_cur = c_ref[pl.ds(r0, TR), :, :]
            c_next = f * c_cur + i * g
            h_next = o * jnp.tanh(c_next)

            # h_ref / c_ref hold the state for the NEXT step; the comb slab
            # already holds this step's h snapshot, so no read/write hazard.
            c_ref[pl.ds(r0, TR), :, :] = c_next
            h_ref[pl.ds(r0, TR), :, :] = h_next
            return carry

        jax.lax.fori_loop(0, NR, row_tile, 0, unroll=True)

        @pl.when(t == pl.num_programs(1) - 1)
        def _finalize():
            # Single packed (h | c) writeback, once per sequence.
            hc_out_ref[0] = jnp.concatenate(
                [h_ref[...], c_ref[...]], axis=-1).astype(hc_out_ref.dtype)

    return kernel


def pack_convlstm_params(weight, bias):
    """One-time repack of the PyTorch Conv2d params for the Pallas kernel.

    weight: [4*hid, Cin+hid, kh, kw] (OIHW)
       ->   [kh*kw*Cpad, 4*hid], per-tap channel order [h, x, zero-pad],
            Cpad = round_up(Cin+hid, 64) so each tap is 64-lane aligned.
    bias:   [4*hid] -> [1, 4*hid]
    """
    O, C, kh, kw = weight.shape
    hid = O // 4
    Cin = C - hid
    Cpad = _round_up(C, 64)
    w = jnp.transpose(weight, (2, 3, 1, 0))                  # [kh, kw, C, 4*hid]
    w = jnp.concatenate(
        [w[:, :, Cin:, :],                                   # h channels first
         w[:, :, :Cin, :],                                   # then x channels
         jnp.zeros((kh, kw, Cpad - C, O), w.dtype)],         # zero K rows
        axis=2)                                              # [kh, kw, Cpad, O]
    return w.reshape(kh * kw * Cpad, O), bias.reshape(1, O)


@functools.partial(jax.jit,
                   static_argnames=("input_dim", "hidden_dim", "kernel_size"))
def convlstm_seq_fast(xs, hc0, w_packed, b_packed, *,
                      input_dim, hidden_dim, kernel_size):
    """Fused T-step recurrence (hot path).

    xs:       [B, T, H, W, Cin]           (NHWC per step)
    hc0:      [B, H, W, 2*hid]            packed (h | c) initial state
    w_packed: [kh*kw*Cpad, 4*hid]         (from pack_convlstm_params)
    b_packed: [1, 4*hid]
    Returns final packed state hc_T: [B, H, W, 2*hid].
    """
    B, T, H, W, Cin = xs.shape
    hid = hidden_dim
    kh, kw = kernel_size
    C = Cin + hid
    Cpad = _round_up(C, 64)
    K = kh * kw * Cpad
    assert Cin == input_dim
    assert hc0.shape == (B, H, W, 2 * hid)
    assert w_packed.shape == (K, 4 * hid)
    assert b_packed.shape == (1, 4 * hid)

    # Rows per inner tile: keep the im2col patch slab ~<=40 vregs.
    TR = next((tr for tr in (8, 4, 2, 1)
               if H % tr == 0 and tr * W * K <= 40960), 1)

    ph, pw = kh // 2, kw // 2
    Hp, Wp = H + 2 * ph, W + 2 * pw

    kern = make_fused_convlstm_kernel(H, W, Cin, hid, kh, kw, Cpad, TR)
    return pl.pallas_call(
        kern,
        out_shape=jax.ShapeDtypeStruct((B, H, W, 2 * hid), xs.dtype),
        grid_spec=pltpu.PrefetchScalarGridSpec(
            num_scalar_prefetch=0,
            # B outer "parallel" (both v7x TensorCores run an independent
            # recurrence), T inner "arbitrary" (serial recurrence, state and
            # weights stay VMEM-resident across it).
            grid=(B, T),
            in_specs=[
                pl.BlockSpec((1, 1, H, W, Cin), lambda b, t: (b, t, 0, 0, 0)),
                pl.BlockSpec((1, H, W, 2 * hid), lambda b, t: (b, 0, 0, 0)),
                pl.BlockSpec((K, 4 * hid), lambda b, t: (0, 0)),
                pl.BlockSpec((1, 4 * hid), lambda b, t: (0, 0)),
            ],
            out_specs=pl.BlockSpec((1, H, W, 2 * hid),
                                   lambda b, t: (b, 0, 0, 0)),
            scratch_shapes=[
                pltpu.VMEM((Hp, Wp, Cpad), jnp.float32),   # padded (h|x) slab
                pltpu.VMEM((H, W, hid), jnp.float32),      # h state
                pltpu.VMEM((H, W, hid), jnp.float32),      # c state
            ]),
        compiler_params=pltpu.CompilerParams(
            dimension_semantics=("parallel", "arbitrary")),
    )(xs, hc0, w_packed, b_packed)


def convlstm_cell(x, h_cur, c_cur, weight, bias, kernel_size):
    """PyTorch-convention ConvLSTMCell.forward (NCHW in / NCHW out), T=1.

    Layout glue (transposes, state packing, weight repack) lives only at this
    model boundary; recurrent loops should call convlstm_seq_fast with a
    persistent NHWC packed state instead.
    """
    hid = h_cur.shape[1]
    Cin = x.shape[1]
    w_packed, b_packed = pack_convlstm_params(weight, bias)
    xs = jnp.transpose(x, (0, 2, 3, 1))[:, None]            # [B, 1, H, W, Cin]
    hc0 = jnp.concatenate([jnp.transpose(h_cur, (0, 2, 3, 1)),
                           jnp.transpose(c_cur, (0, 2, 3, 1))], axis=-1)
    hc1 = convlstm_seq_fast(xs, hc0, w_packed, b_packed,
                            input_dim=Cin, hidden_dim=hid,
                            kernel_size=tuple(kernel_size))
    h_next = jnp.transpose(hc1[..., :hid], (0, 3, 1, 2))
    c_next = jnp.transpose(hc1[..., hid:], (0, 3, 1, 2))
    return h_next, c_next


def convlstm_cell_reference(x, h_cur, c_cur, weight, bias):
    """Pure-JAX reference mirroring the PyTorch forward (for verification)."""
    combined = jnp.concatenate([x, h_cur], axis=1)
    ph, pw = weight.shape[2] // 2, weight.shape[3] // 2
    conv = jax.lax.conv_general_dilated(
        combined, weight, window_strides=(1, 1),
        padding=((ph, ph), (pw, pw)),
        dimension_numbers=("NCHW", "OIHW", "NCHW"),
        precision=jax.lax.Precision.HIGHEST)
    conv = conv + bias[None, :, None, None]
    hid = h_cur.shape[1]
    cc_i, cc_f, cc_o, cc_g = jnp.split(conv, 4, axis=1)
    i = jax.nn.sigmoid(cc_i)
    f = jax.nn.sigmoid(cc_f)
    o = jax.nn.sigmoid(cc_o)
    g = jnp.tanh(cc_g)
    c_next = f * c_cur + i * g
    h_next = o * jnp.tanh(c_next)
    return h_next, c_next


if __name__ == "__main__":
    # Shapes consistent with the module: batch=2, input_dim=4, hidden_dim=32,
    # spatial 16x16, kernel_size=(3, 3), bias=True, sequence length 8.
    B, Cin, hid, H, W, T = 2, 4, 32, 16, 16, 8
    kh, kw = 3, 3
    C = Cin + hid

    key = jax.random.PRNGKey(0)
    kxs, kh_, kc_, kw_, kb_ = jax.random.split(key, 5)

    xs = jax.random.normal(kxs, (B, T, Cin, H, W), jnp.float32)
    h0 = jax.random.normal(kh_, (B, hid, H, W), jnp.float32)
    c0 = jax.random.normal(kc_, (B, hid, H, W), jnp.float32)

    # Deterministic Conv2d-style init: U(-1/sqrt(fan_in), 1/sqrt(fan_in)).
    fan_in = C * kh * kw
    bound = 1.0 / (fan_in ** 0.5)
    weight = jax.random.uniform(kw_, (4 * hid, C, kh, kw), jnp.float32,
                                -bound, bound)
    bias = jax.random.uniform(kb_, (4 * hid,), jnp.float32, -bound, bound)

    # --- Single-step check through the PyTorch-convention (NCHW) wrapper. ---
    h1, c1 = convlstm_cell(xs[:, 0], h0, c0, weight, bias, (kh, kw))
    jax.block_until_ready((h1, c1))
    h1_ref, c1_ref = convlstm_cell_reference(xs[:, 0], h0, c0, weight, bias)
    assert jnp.allclose(h1, h1_ref, rtol=1e-5, atol=1e-5), "h_next mismatch"
    assert jnp.allclose(c1, c1_ref, rtol=1e-5, atol=1e-5), "c_next mismatch"

    # --- Fused T-step recurrence: one pallas_call for the whole sequence. ---
    w_packed, b_packed = pack_convlstm_params(weight, bias)
    xs_nhwc = jnp.transpose(xs, (0, 1, 3, 4, 2))             # [B, T, H, W, Cin]
    hc0 = jnp.concatenate([jnp.transpose(h0, (0, 2, 3, 1)),
                           jnp.transpose(c0, (0, 2, 3, 1))], axis=-1)
    hcT = convlstm_seq_fast(xs_nhwc, hc0, w_packed, b_packed,
                            input_dim=Cin, hidden_dim=hid,
                            kernel_size=(kh, kw))
    jax.block_until_ready(hcT)

    h_ref, c_ref = h0, c0
    for step in range(T):
        h_ref, c_ref = convlstm_cell_reference(xs[:, step], h_ref, c_ref,
                                               weight, bias)
    h_fast = jnp.transpose(hcT[..., :hid], (0, 3, 1, 2))
    c_fast = jnp.transpose(hcT[..., hid:], (0, 3, 1, 2))
    assert jnp.allclose(h_fast, h_ref, rtol=1e-4, atol=1e-4), "fused h mismatch"
    assert jnp.allclose(c_fast, c_ref, rtol=1e-4, atol=1e-4), "fused c mismatch"

    print("KERNEL_OK")
</pallas_src>

<mosaic_0001>
module attributes {stable_mosaic.version = 11 : i64} {
  func.func @kernel(%arg0: i32, %arg1: i32, %arg2: memref<1x1x16x16x4xf32, #tpu.memory_space<vmem>>, %arg3: memref<1x16x16x64xf32, #tpu.memory_space<vmem>>, %arg4: memref<576x128xf32, #tpu.memory_space<vmem>>, %arg5: memref<1x128xf32, #tpu.memory_space<vmem>>, %arg6: memref<1x16x16x64xf32, #tpu.memory_space<vmem>>, %arg7: memref<18x18x64xf32, #tpu.memory_space<vmem>>, %arg8: memref<16x16x32xf32, #tpu.memory_space<vmem>>, %arg9: memref<16x16x32xf32, #tpu.memory_space<vmem>>) attributes {dimension_semantics = [#tpu.dimension_semantics<parallel>, #tpu.dimension_semantics<arbitrary>], iteration_bounds = array<i64: 2, 1>, scalar_prefetch = 0 : i64, scratch_operands = 3 : i64, tpu.core_type = #tpu.core_type<tc>, window_params = [{transform_indices = @transform_0, window_bounds = array<i64: 1, 1, 16, 16, 4>}, {transform_indices = @transform_1, window_bounds = array<i64: 1, 16, 16, 64>}, {pipeline_mode = #tpu.pipeline_mode<synchronous>, transform_indices = @transform_2, window_bounds = array<i64: 576, 128>}, {pipeline_mode = #tpu.pipeline_mode<synchronous>, transform_indices = @transform_3, window_bounds = array<i64: 1, 128>}, {transform_indices = @transform_4, window_bounds = array<i64: 1, 16, 16, 64>}]} {
    %c0_i32 = arith.constant 0 : i32
    %0 = arith.cmpi eq, %arg1, %c0_i32 : i32
    %1 = arith.extui %0 : i1 to i32
    %c0_i32_0 = arith.constant 0 : i32
    %2 = arith.cmpi ne, %1, %c0_i32_0 : i32
    scf.if %2 {
      %cst_178 = arith.constant 0.000000e+00 : f32
      %261 = vector.broadcast %cst_178 : f32 to vector<18x18x64xf32>
      %c0_179 = arith.constant 0 : index
      %c0_180 = arith.constant 0 : index
      %c0_181 = arith.constant 0 : index
      %262 = vector.load %arg7[%c0_179, %c0_180, %c0_181] : memref<18x18x64xf32, #tpu.memory_space<vmem>>, vector<18x18x64xf32>
      tpu.vector_store %arg7[%c0_179, %c0_180, %c0_181], %261 {strides = array<i32>} : memref<18x18x64xf32, #tpu.memory_space<vmem>>, vector<18x18x64xf32>,
      %c0_182 = arith.constant 0 : index
      %c0_183 = arith.constant 0 : index
      %c0_184 = arith.constant 0 : index
      %c0_185 = arith.constant 0 : index
      %263 = vector.load %arg3[%c0_182, %c0_183, %c0_184, %c0_185] : memref<1x16x16x64xf32, #tpu.memory_space<vmem>>, vector<1x16x16x64xf32>
      %264 = vector.shape_cast %263 : vector<1x16x16x64xf32> to vector<16x16x64xf32>
      %265 = vector.extract_strided_slice %264 {offsets = [0, 0, 0], sizes = [16, 16, 32], strides = [1, 1, 1]} : vector<16x16x64xf32> to vector<16x16x32xf32>
      %c0_186 = arith.constant 0 : index
      %c0_187 = arith.constant 0 : index
      %c0_188 = arith.constant 0 : index
      %266 = vector.load %arg8[%c0_186, %c0_187, %c0_188] : memref<16x16x32xf32, #tpu.memory_space<vmem>>, vector<16x16x32xf32>
      tpu.vector_store %arg8[%c0_186, %c0_187, %c0_188], %265 {strides = array<i32>} : memref<16x16x32xf32, #tpu.memory_space<vmem>>, vector<16x16x32xf32>,
      %267 = vector.extract_strided_slice %264 {offsets = [0, 0, 32], sizes = [16, 16, 32], strides = [1, 1, 1]} : vector<16x16x64xf32> to vector<16x16x32xf32>
      %c0_189 = arith.constant 0 : index
      %c0_190 = arith.constant 0 : index
      %c0_191 = arith.constant 0 : index
      %268 = vector.load %arg9[%c0_189, %c0_190, %c0_191] : memref<16x16x32xf32, #tpu.memory_space<vmem>>, vector<16x16x32xf32>
      tpu.vector_store %arg9[%c0_189, %c0_190, %c0_191], %267 {strides = array<i32>} : memref<16x16x32xf32, #tpu.memory_space<vmem>>, vector<16x16x32xf32>,
    } else {
    }
    %c0 = arith.constant 0 : index
    %c0_1 = arith.constant 0 : index
    %c0_2 = arith.constant 0 : index
    %3 = vector.load %arg8[%c0, %c0_1, %c0_2] : memref<16x16x32xf32, #tpu.memory_space<vmem>>, vector<16x16x32xf32>
    %c1 = arith.constant 1 : index
    %c1_3 = arith.constant 1 : index
    %c0_4 = arith.constant 0 : index
    %4 = vector.load %arg7[%c1, %c1_3, %c0_4] : memref<18x18x64xf32, #tpu.memory_space<vmem>>, vector<16x16x32xf32>
    tpu.vector_store %arg7[%c1, %c1_3, %c0_4], %3 {strides = array<i32>} : memref<18x18x64xf32, #tpu.memory_space<vmem>>, vector<16x16x32xf32>,
    %c0_5 = arith.constant 0 : index
    %c0_6 = arith.constant 0 : index
    %c0_7 = arith.constant 0 : index
    %c0_8 = arith.constant 0 : index
    %c0_9 = arith.constant 0 : index
    %5 = vector.load %arg2[%c0_5, %c0_6, %c0_7, %c0_8, %c0_9] : memref<1x1x16x16x4xf32, #tpu.memory_space<vmem>>, vector<1x1x16x16x4xf32>
    %6 = vector.shape_cast %5 : vector<1x1x16x16x4xf32> to vector<16x16x4xf32>
    %c1_10 = arith.constant 1 : index
    %c1_11 = arith.constant 1 : index
    %c32 = arith.constant 32 : index
    %7 = vector.load %arg7[%c1_10, %c1_11, %c32] : memref<18x18x64xf32, #tpu.memory_space<vmem>>, vector<16x16x4xf32>
    tpu.vector_store %arg7[%c1_10, %c1_11, %c32], %6 {strides = array<i32>} : memref<18x18x64xf32, #tpu.memory_space<vmem>>, vector<16x16x4xf32>,
    %c0_12 = arith.constant 0 : index
    %c0_13 = arith.constant 0 : index
    %8 = vector.load %arg5[%c0_12, %c0_13] : memref<1x128xf32, #tpu.memory_space<vmem>>, vector<1x128xf32>
    %9 = vector.shape_cast %8 : vector<1x128xf32> to vector<128xf32>
    %c0_i32_14 = arith.constant 0 : i32
    %c4_i32 = arith.constant 4 : i32
    %10 = arith.muli %c0_i32_14, %c4_i32 : i32
    %11 = tpu.assume_multiple %10, 4 : i32
    %c0_i32_15 = arith.constant 0 : i32
    %12 = arith.addi %11, %c0_i32_15 : i32
    %13 = arith.index_cast %12 : i32 to index
    %c0_16 = arith.constant 0 : index
    %c0_17 = arith.constant 0 : index
    %14 = vector.load %arg7[%13, %c0_16, %c0_17] : memref<18x18x64xf32, #tpu.memory_space<vmem>>, vector<4x16x64xf32>
    %c0_i32_18 = arith.constant 0 : i32
    %15 = arith.addi %11, %c0_i32_18 : i32
    %16 = arith.index_cast %15 : i32 to index
    %c1_19 = arith.constant 1 : index
    %c0_20 = arith.constant 0 : index
    %17 = vector.load %arg7[%16, %c1_19, %c0_20] : memref<18x18x64xf32, #tpu.memory_space<vmem>>, vector<4x16x64xf32>
    %c0_i32_21 = arith.constant 0 : i32
    %18 = arith.addi %11, %c0_i32_21 : i32
    %19 = arith.index_cast %18 : i32 to index
    %c2 = arith.constant 2 : index
    %c0_22 = arith.constant 0 : index
    %20 = vector.load %arg7[%19, %c2, %c0_22] : memref<18x18x64xf32, #tpu.memory_space<vmem>>, vector<4x16x64xf32>
    %c1_i32 = arith.constant 1 : i32
    %21 = arith.addi %11, %c1_i32 : i32
    %22 = arith.index_cast %21 : i32 to index
    %c0_23 = arith.constant 0 : index
    %c0_24 = arith.constant 0 : index
    %23 = vector.load %arg7[%22, %c0_23, %c0_24] : memref<18x18x64xf32, #tpu.memory_space<vmem>>, vector<4x16x64xf32>
    %c1_i32_25 = arith.constant 1 : i32
    %24 = arith.addi %11, %c1_i32_25 : i32
    %25 = arith.index_cast %24 : i32 to index
    %c1_26 = arith.constant 1 : index
    %c0_27 = arith.constant 0 : index
    %26 = vector.load %arg7[%25, %c1_26, %c0_27] : memref<18x18x64xf32, #tpu.memory_space<vmem>>, vector<4x16x64xf32>
    %c1_i32_28 = arith.constant 1 : i32
    %27 = arith.addi %11, %c1_i32_28 : i32
    %28 = arith.index_cast %27 : i32 to index
    %c2_29 = arith.constant 2 : index
    %c0_30 = arith.constant 0 : index
    %29 = vector.load %arg7[%28, %c2_29, %c0_30] : memref<18x18x64xf32, #tpu.memory_space<vmem>>, vector<4x16x64xf32>
    %c2_i32 = arith.constant 2 : i32
    %30 = arith.addi %11, %c2_i32 : i32
    %31 = arith.index_cast %30 : i32 to index
    %c0_31 = arith.constant 0 : index
    %c0_32 = arith.constant 0 : index
    %32 = vector.load %arg7[%31, %c0_31, %c0_32] : memref<18x18x64xf32, #tpu.memory_space<vmem>>, vector<4x16x64xf32>
    %c2_i32_33 = arith.constant 2 : i32
    %33 = arith.addi %11, %c2_i32_33 : i32
    %34 = arith.index_cast %33 : i32 to index
    %c1_34 = arith.constant 1 : index
    %c0_35 = arith.constant 0 : index
    %35 = vector.load %arg7[%34, %c1_34, %c0_35] : memref<18x18x64xf32, #tpu.memory_space<vmem>>, vector<4x16x64xf32>
    %c2_i32_36 = arith.constant 2 : i32
    %36 = arith.addi %11, %c2_i32_36 : i32
    %37 = arith.index_cast %36 : i32 to index
    %c2_37 = arith.constant 2 : index
    %c0_38 = arith.constant 0 : index
    %38 = vector.load %arg7[%37, %c2_37, %c0_38] : memref<18x18x64xf32, #tpu.memory_space<vmem>>, vector<4x16x64xf32>
    %39 = tpu.concatenate %14, %17, %20, %23, %26, %29, %32, %35, %38 in 2 : vector<4x16x64xf32>, vector<4x16x64xf32>, vector<4x16x64xf32>, vector<4x16x64xf32>, vector<4x16x64xf32>, vector<4x16x64xf32>, vector<4x16x64xf32>, vector<4x16x64xf32>, vector<4x16x64xf32> -> vector<4x16x576xf32>
    %c0_39 = arith.constant 0 : index
    %c0_40 = arith.constant 0 : index
    %40 = vector.load %arg4[%c0_39, %c0_40] : memref<576x128xf32, #tpu.memory_space<vmem>>, vector<576x128xf32>
    %cst = arith.constant dense<0.000000e+00> : vector<4x16x128xf32>
    %41 = tpu.matmul %39, %40, %cst {dimension_numbers = #tpu.dot_dimension_numbers<[2], [0], [0, 1], [1], [0, 0, 0, 1, 1, 1], [], []>} : vector<4x16x576xf32>, vector<576x128xf32>, vector<4x16x128xf32> -> vector<4x16x128xf32>
    %42 = vector.shape_cast %9 : vector<128xf32> to vector<1x1x128xf32>
    %43 = vector.broadcast %42 : vector<1x1x128xf32> to vector<4x16x128xf32>
    %44 = arith.addf %41, %43 : vector<4x16x128xf32>
    %45 = tpu.iota {dimensions = array<i32: 2>} : vector<4x16x128xi32>
    %c96_i32 = arith.constant 96 : i32
    %46 = vector.broadcast %c96_i32 : i32 to vector<4x16x128xi32>
    %47 = arith.cmpi slt, %45, %46 : vector<4x16x128xi32>
    %cst_41 = arith.constant 5.000000e-01 : f32
    %48 = vector.broadcast %cst_41 : f32 to vector<4x16x128xf32>
    %49 = arith.mulf %48, %44 : vector<4x16x128xf32>
    %50 = arith.select %47, %49, %44 : vector<4x16x128xi1>, vector<4x16x128xf32>
    %51 = math.tanh %50 : vector<4x16x128xf32>
    %cst_42 = arith.constant 1.000000e+00 : f32
    %52 = vector.broadcast %cst_42 : f32 to vector<4x16x128xf32>
    %53 = arith.addf %51, %52 : vector<4x16x128xf32>
    %cst_43 = arith.constant 5.000000e-01 : f32
    %54 = vector.broadcast %cst_43 : f32 to vector<4x16x128xf32>
    %55 = arith.mulf %54, %53 : vector<4x16x128xf32>
    %56 = arith.select %47, %55, %51 : vector<4x16x128xi1>, vector<4x16x128xf32>
    %57 = vector.extract_strided_slice %56 {offsets = [0, 0, 0], sizes = [4, 16, 32], strides = [1, 1, 1]} : vector<4x16x128xf32> to vector<4x16x32xf32>
    %58 = vector.extract_strided_slice %56 {offsets = [0, 0, 32], sizes = [4, 16, 32], strides = [1, 1, 1]} : vector<4x16x128xf32> to vector<4x16x32xf32>
    %59 = vector.extract_strided_slice %56 {offsets = [0, 0, 64], sizes = [4, 16, 32], strides = [1, 1, 1]} : vector<4x16x128xf32> to vector<4x16x32xf32>
    %60 = vector.extract_strided_slice %56 {offsets = [0, 0, 96], sizes = [4, 16, 32], strides = [1, 1, 1]} : vector<4x16x128xf32> to vector<4x16x32xf32>
    %61 = arith.index_cast %11 : i32 to index
    %c0_44 = arith.constant 0 : index
    %c0_45 = arith.constant 0 : index
    %62 = vector.load %arg9[%61, %c0_44, %c0_45] : memref<16x16x32xf32, #tpu.memory_space<vmem>>, vector<4x16x32xf32>
    %63 = arith.mulf %58, %62 : vector<4x16x32xf32>
    %64 = arith.mulf %57, %60 : vector<4x16x32xf32>
    %65 = arith.addf %63, %64 : vector<4x16x32xf32>
    %66 = math.tanh %65 : vector<4x16x32xf32>
    %67 = arith.mulf %59, %66 : vector<4x16x32xf32>
    %68 = arith.index_cast %11 : i32 to index
    %c0_46 = arith.constant 0 : index
    %c0_47 = arith.constant 0 : index
    %69 = vector.load %arg9[%68, %c0_46, %c0_47] : memref<16x16x32xf32, #tpu.memory_space<vmem>>, vector<4x16x32xf32>
    tpu.vector_store %arg9[%68, %c0_46, %c0_47], %65 {strides = array<i32>} : memref<16x16x32xf32, #tpu.memory_space<vmem>>, vector<4x16x32xf32>,
    %70 = arith.index_cast %11 : i32 to index
    %c0_48 = arith.constant 0 : index
    %c0_49 = arith.constant 0 : index
    %71 = vector.load %arg8[%70, %c0_48, %c0_49] : memref<16x16x32xf32, #tpu.memory_space<vmem>>, vector<4x16x32xf32>
    tpu.vector_store %arg8[%70, %c0_48, %c0_49], %67 {strides = array<i32>} : memref<16x16x32xf32, #tpu.memory_space<vmem>>, vector<4x16x32xf32>,
    %c1_i32_50 = arith.constant 1 : i32
    %c4_i32_51 = arith.constant 4 : i32
    %72 = arith.muli %c1_i32_50, %c4_i32_51 : i32
    %73 = tpu.assume_multiple %72, 4 : i32
    %c0_i32_52 = arith.constant 0 : i32
    %74 = arith.addi %73, %c0_i32_52 : i32
    %75 = arith.index_cast %74 : i32 to index
    %c0_53 = arith.constant 0 : index
    %c0_54 = arith.constant 0 : index
    %76 = vector.load %arg7[%75, %c0_53, %c0_54] : memref<18x18x64xf32, #tpu.memory_space<vmem>>, vector<4x16x64xf32>
    %c0_i32_55 = arith.constant 0 : i32
    %77 = arith.addi %73, %c0_i32_55 : i32
    %78 = arith.index_cast %77 : i32 to index
    %c1_56 = arith.constant 1 : index
    %c0_57 = arith.constant 0 : index
    %79 = vector.load %arg7[%78, %c1_56, %c0_57] : memref<18x18x64xf32, #tpu.memory_space<vmem>>, vector<4x16x64xf32>
    %c0_i32_58 = arith.constant 0 : i32
    %80 = arith.addi %73, %c0_i32_58 : i32
    %81 = arith.index_cast %80 : i32 to index
    %c2_59 = arith.constant 2 : index
    %c0_60 = arith.constant 0 : index
    %82 = vector.load %arg7[%81, %c2_59, %c0_60] : memref<18x18x64xf32, #tpu.memory_space<vmem>>, vector<4x16x64xf32>
    %c1_i32_61 = arith.constant 1 : i32
    %83 = arith.addi %73, %c1_i32_61 : i32
    %84 = arith.index_cast %83 : i32 to index
    %c0_62 = arith.constant 0 : index
    %c0_63 = arith.constant 0 : index
    %85 = vector.load %arg7[%84, %c0_62, %c0_63] : memref<18x18x64xf32, #tpu.memory_space<vmem>>, vector<4x16x64xf32>
    %c1_i32_64 = arith.constant 1 : i32
    %86 = arith.addi %73, %c1_i32_64 : i32
    %87 = arith.index_cast %86 : i32 to index
    %c1_65 = arith.constant 1 : index
    %c0_66 = arith.constant 0 : index
    %88 = vector.load %arg7[%87, %c1_65, %c0_66] : memref<18x18x64xf32, #tpu.memory_space<vmem>>, vector<4x16x64xf32>
    %c1_i32_67 = arith.constant 1 : i32
    %89 = arith.addi %73, %c1_i32_67 : i32
    %90 = arith.index_cast %89 : i32 to index
    %c2_68 = arith.constant 2 : index
    %c0_69 = arith.constant 0 : index
    %91 = vector.load %arg7[%90, %c2_68, %c0_69] : memref<18x18x64xf32, #tpu.memory_space<vmem>>, vector<4x16x64xf32>
    %c2_i32_70 = arith.constant 2 : i32
    %92 = arith.addi %73, %c2_i32_70 : i32
    %93 = arith.index_cast %92 : i32 to index
    %c0_71 = arith.constant 0 : index
    %c0_72 = arith.constant 0 : index
    %94 = vector.load %arg7[%93, %c0_71, %c0_72] : memref<18x18x64xf32, #tpu.memory_space<vmem>>, vector<4x16x64xf32>
    %c2_i32_73 = arith.constant 2 : i32
    %95 = arith.addi %73, %c2_i32_73 : i32
    %96 = arith.index_cast %95 : i32 to index
    %c1_74 = arith.constant 1 : index
    %c0_75 = arith.constant 0 : index
    %97 = vector.load %arg7[%96, %c1_74, %c0_75] : memref<18x18x64xf32, #tpu.memory_space<vmem>>, vector<4x16x64xf32>
    %c2_i32_76 = arith.constant 2 : i32
    %98 = arith.addi %73, %c2_i32_76 : i32
    %99 = arith.index_cast %98 : i32 to index
    %c2_77 = arith.constant 2 : index
    %c0_78 = arith.constant 0 : index
    %100 = vector.load %arg7[%99, %c2_77, %c0_78] : memref<18x18x64xf32, #tpu.memory_space<vmem>>, vector<4x16x64xf32>
    %101 = tpu.concatenate %76, %79, %82, %85, %88, %91, %94, %97, %100 in 2 : vector<4x16x64xf32>, vector<4x16x64xf32>, vector<4x16x64xf32>, vector<4x16x64xf32>, vector<4x16x64xf32>, vector<4x16x64xf32>, vector<4x16x64xf32>, vector<4x16x64xf32>, vector<4x16x64xf32> -> vector<4x16x576xf32>
    %c0_79 = arith.constant 0 : index
    %c0_80 = arith.constant 0 : index
    %102 = vector.load %arg4[%c0_79, %c0_80] : memref<576x128xf32, #tpu.memory_space<vmem>>, vector<576x128xf32>
    %cst_81 = arith.constant dense<0.000000e+00> : vector<4x16x128xf32>
    %103 = tpu.matmul %101, %102, %cst_81 {dimension_numbers = #tpu.dot_dimension_numbers<[2], [0], [0, 1], [1], [0, 0, 0, 1, 1, 1], [], []>} : vector<4x16x576xf32>, vector<576x128xf32>, vector<4x16x128xf32> -> vector<4x16x128xf32>
    %104 = vector.shape_cast %9 : vector<128xf32> to vector<1x1x128xf32>
    %105 = vector.broadcast %104 : vector<1x1x128xf32> to vector<4x16x128xf32>
    %106 = arith.addf %103, %105 : vector<4x16x128xf32>
    %107 = tpu.iota {dimensions = array<i32: 2>} : vector<4x16x128xi32>
    %c96_i32_82 = arith.constant 96 : i32
    %108 = vector.broadcast %c96_i32_82 : i32 to vector<4x16x128xi32>
    %109 = arith.cmpi slt, %107, %108 : vector<4x16x128xi32>
    %cst_83 = arith.constant 5.000000e-01 : f32
    %110 = vector.broadcast %cst_83 : f32 to vector<4x16x128xf32>
    %111 = arith.mulf %110, %106 : vector<4x16x128xf32>
    %112 = arith.select %109, %111, %106 : vector<4x16x128xi1>, vector<4x16x128xf32>
    %113 = math.tanh %112 : vector<4x16x128xf32>
    %cst_84 = arith.constant 1.000000e+00 : f32
    %114 = vector.broadcast %cst_84 : f32 to vector<4x16x128xf32>
    %115 = arith.addf %113, %114 : vector<4x16x128xf32>
    %cst_85 = arith.constant 5.000000e-01 : f32
    %116 = vector.broadcast %cst_85 : f32 to vector<4x16x128xf32>
    %117 = arith.mulf %116, %115 : vector<4x16x128xf32>
    %118 = arith.select %109, %117, %113 : vector<4x16x128xi1>, vector<4x16x128xf32>
    %119 = vector.extract_strided_slice %118 {offsets = [0, 0, 0], sizes = [4, 16, 32], strides = [1, 1, 1]} : vector<4x16x128xf32> to vector<4x16x32xf32>
    %120 = vector.extract_strided_slice %118 {offsets = [0, 0, 32], sizes = [4, 16, 32], strides = [1, 1, 1]} : vector<4x16x128xf32> to vector<4x16x32xf32>
    %121 = vector.extract_strided_slice %118 {offsets = [0, 0, 64], sizes = [4, 16, 32], strides = [1, 1, 1]} : vector<4x16x128xf32> to vector<4x16x32xf32>
    %122 = vector.extract_strided_slice %118 {offsets = [0, 0, 96], sizes = [4, 16, 32], strides = [1, 1, 1]} : vector<4x16x128xf32> to vector<4x16x32xf32>
    %123 = arith.index_cast %73 : i32 to index
    %c0_86 = arith.constant 0 : index
    %c0_87 = arith.constant 0 : index
    %124 = vector.load %arg9[%123, %c0_86, %c0_87] : memref<16x16x32xf32, #tpu.memory_space<vmem>>, vector<4x16x32xf32>
    %125 = arith.mulf %120, %124 : vector<4x16x32xf32>
    %126 = arith.mulf %119, %122 : vector<4x16x32xf32>
    %127 = arith.addf %125, %126 : vector<4x16x32xf32>
    %128 = math.tanh %127 : vector<4x16x32xf32>
    %129 = arith.mulf %121, %128 : vector<4x16x32xf32>
    %130 = arith.index_cast %73 : i32 to index
    %c0_88 = arith.constant 0 : index
    %c0_89 = arith.constant 0 : index
    %131 = vector.load %arg9[%130, %c0_88, %c0_89] : memref<16x16x32xf32, #tpu.memory_space<vmem>>, vector<4x16x32xf32>
    tpu.vector_store %arg9[%130, %c0_88, %c0_89], %127 {strides = array<i32>} : memref<16x16x32xf32, #tpu.memory_space<vmem>>, vector<4x16x32xf32>,
    %132 = arith.index_cast %73 : i32 to index
    %c0_90 = arith.constant 0 : index
    %c0_91 = arith.constant 0 : index
    %133 = vector.load %arg8[%132, %c0_90, %c0_91] : memref<16x16x32xf32, #tpu.memory_space<vmem>>, vector<4x16x32xf32>
    tpu.vector_store %arg8[%132, %c0_90, %c0_91], %129 {strides = array<i32>} : memref<16x16x32xf32, #tpu.memory_space<vmem>>, vector<4x16x32xf32>,
    %c2_i32_92 = arith.constant 2 : i32
    %c4_i32_93 = arith.constant 4 : i32
    %134 = arith.muli %c2_i32_92, %c4_i32_93 : i32
    %135 = tpu.assume_multiple %134, 4 : i32
    %c0_i32_94 = arith.constant 0 : i32
    %136 = arith.addi %135, %c0_i32_94 : i32
    %137 = arith.index_cast %136 : i32 to index
    %c0_95 = arith.constant 0 : index
    %c0_96 = arith.constant 0 : index
    %138 = vector.load %arg7[%137, %c0_95, %c0_96] : memref<18x18x64xf32, #tpu.memory_space<vmem>>, vector<4x16x64xf32>
    %c0_i32_97 = arith.constant 0 : i32
    %139 = arith.addi %135, %c0_i32_97 : i32
    %140 = arith.index_cast %139 : i32 to index
    %c1_98 = arith.constant 1 : index
    %c0_99 = arith.constant 0 : index
    %141 = vector.load %arg7[%140, %c1_98, %c0_99] : memref<18x18x64xf32, #tpu.memory_space<vmem>>, vector<4x16x64xf32>
    %c0_i32_100 = arith.constant 0 : i32
    %142 = arith.addi %135, %c0_i32_100 : i32
    %143 = arith.index_cast %142 : i32 to index
    %c2_101 = arith.constant 2 : index
    %c0_102 = arith.constant 0 : index
    %144 = vector.load %arg7[%143, %c2_101, %c0_102] : memref<18x18x64xf32, #tpu.memory_space<vmem>>, vector<4x16x64xf32>
    %c1_i32_103 = arith.constant 1 : i32
    %145 = arith.addi %135, %c1_i32_103 : i32
    %146 = arith.index_cast %145 : i32 to index
    %c0_104 = arith.constant 0 : index
    %c0_105 = arith.constant 0 : index
    %147 = vector.load %arg7[%146, %c0_104, %c0_105] : memref<18x18x64xf32, #tpu.memory_space<vmem>>, vector<4x16x64xf32>
    %c1_i32_106 = arith.constant 1 : i32
    %148 = arith.addi %135, %c1_i32_106 : i32
    %149 = arith.index_cast %148 : i32 to index
    %c1_107 = arith.constant 1 : index
    %c0_108 = arith.constant 0 : index
    %150 = vector.load %arg7[%149, %c1_107, %c0_108] : memref<18x18x64xf32, #tpu.memory_space<vmem>>, vector<4x16x64xf32>
    %c1_i32_109 = arith.constant 1 : i32
    %151 = arith.addi %135, %c1_i32_109 : i32
    %152 = arith.index_cast %151 : i32 to index
    %c2_110 = arith.constant 2 : index
    %c0_111 = arith.constant 0 : index
    %153 = vector.load %arg7[%152, %c2_110, %c0_111] : memref<18x18x64xf32, #tpu.memory_space<vmem>>, vector<4x16x64xf32>
    %c2_i32_112 = arith.constant 2 : i32
    %154 = arith.addi %135, %c2_i32_112 : i32
    %155 = arith.index_cast %154 : i32 to index
    %c0_113 = arith.constant 0 : index
    %c0_114 = arith.constant 0 : index
    %156 = vector.load %arg7[%155, %c0_113, %c0_114] : memref<18x18x64xf32, #tpu.memory_space<vmem>>, vector<4x16x64xf32>
    %c2_i32_115 = arith.constant 2 : i32
    %157 = arith.addi %135, %c2_i32_115 : i32
    %158 = arith.index_cast %157 : i32 to index
    %c1_116 = arith.constant 1 : index
    %c0_117 = arith.constant 0 : index
    %159 = vector.load %arg7[%158, %c1_116, %c0_117] : memref<18x18x64xf32, #tpu.memory_space<vmem>>, vector<4x16x64xf32>
    %c2_i32_118 = arith.constant 2 : i32
    %160 = arith.addi %135, %c2_i32_118 : i32
    %161 = arith.index_cast %160 : i32 to index
    %c2_119 = arith.constant 2 : index
    %c0_120 = arith.constant 0 : index
    %162 = vector.load %arg7[%161, %c2_119, %c0_120] : memref<18x18x64xf32, #tpu.memory_space<vmem>>, vector<4x16x64xf32>
    %163 = tpu.concatenate %138, %141, %144, %147, %150, %153, %156, %159, %162 in 2 : vector<4x16x64xf32>, vector<4x16x64xf32>, vector<4x16x64xf32>, vector<4x16x64xf32>, vector<4x16x64xf32>, vector<4x16x64xf32>, vector<4x16x64xf32>, vector<4x16x64xf32>, vector<4x16x64xf32> -> vector<4x16x576xf32>
    %c0_121 = arith.constant 0 : index
    %c0_122 = arith.constant 0 : index
    %164 = vector.load %arg4[%c0_121, %c0_122] : memref<576x128xf32, #tpu.memory_space<vmem>>, vector<576x128xf32>
    %cst_123 = arith.constant dense<0.000000e+00> : vector<4x16x128xf32>
    %165 = tpu.matmul %163, %164, %cst_123 {dimension_numbers = #tpu.dot_dimension_numbers<[2], [0], [0, 1], [1], [0, 0, 0, 1, 1, 1], [], []>} : vector<4x16x576xf32>, vector<576x128xf32>, vector<4x16x128xf32> -> vector<4x16x128xf32>
    %166 = vector.shape_cast %9 : vector<128xf32> to vector<1x1x128xf32>
    %167 = vector.broadcast %166 : vector<1x1x128xf32> to vector<4x16x128xf32>
    %168 = arith.addf %165, %167 : vector<4x16x128xf32>
    %169 = tpu.iota {dimensions = array<i32: 2>} : vector<4x16x128xi32>
    %c96_i32_124 = arith.constant 96 : i32
    %170 = vector.broadcast %c96_i32_124 : i32 to vector<4x16x128xi32>
    %171 = arith.cmpi slt, %169, %170 : vector<4x16x128xi32>
    %cst_125 = arith.constant 5.000000e-01 : f32
    %172 = vector.broadcast %cst_125 : f32 to vector<4x16x128xf32>
    %173 = arith.mulf %172, %168 : vector<4x16x128xf32>
    %174 = arith.select %171, %173, %168 : vector<4x16x128xi1>, vector<4x16x128xf32>
    %175 = math.tanh %174 : vector<4x16x128xf32>
    %cst_126 = arith.constant 1.000000e+00 : f32
    %176 = vector.broadcast %cst_126 : f32 to vector<4x16x128xf32>
    %177 = arith.addf %175, %176 : vector<4x16x128xf32>
    %cst_127 = arith.constant 5.000000e-01 : f32
    %178 = vector.broadcast %cst_127 : f32 to vector<4x16x128xf32>
    %179 = arith.mulf %178, %177 : vector<4x16x128xf32>
    %180 = arith.select %171, %179, %175 : vector<4x16x128xi1>, vector<4x16x128xf32>
    %181 = vector.extract_strided_slice %180 {offsets = [0, 0, 0], sizes = [4, 16, 32], strides = [1, 1, 1]} : vector<4x16x128xf32> to vector<4x16x32xf32>
    %182 = vector.extract_strided_slice %180 {offsets = [0, 0, 32], sizes = [4, 16, 32], strides = [1, 1, 1]} : vector<4x16x128xf32> to vector<4x16x32xf32>
    %183 = vector.extract_strided_slice %180 {offsets = [0, 0, 64], sizes = [4, 16, 32], strides = [1, 1, 1]} : vector<4x16x128xf32> to vector<4x16x32xf32>
    %184 = vector.extract_strided_slice %180 {offsets = [0, 0, 96], sizes = [4, 16, 32], strides = [1, 1, 1]} : vector<4x16x128xf32> to vector<4x16x32xf32>
    %185 = arith.index_cast %135 : i32 to index
    %c0_128 = arith.constant 0 : index
    %c0_129 = arith.constant 0 : index
    %186 = vector.load %arg9[%185, %c0_128, %c0_129] : memref<16x16x32xf32, #tpu.memory_space<vmem>>, vector<4x16x32xf32>
    %187 = arith.mulf %182, %186 : vector<4x16x32xf32>
    %188 = arith.mulf %181, %184 : vector<4x16x32xf32>
    %189 = arith.addf %187, %188 : vector<4x16x32xf32>
    %190 = math.tanh %189 : vector<4x16x32xf32>
    %191 = arith.mulf %183, %190 : vector<4x16x32xf32>
    %192 = arith.index_cast %135 : i32 to index
    %c0_130 = arith.constant 0 : index
    %c0_131 = arith.constant 0 : index
    %193 = vector.load %arg9[%192, %c0_130, %c0_131] : memref<16x16x32xf32, #tpu.memory_space<vmem>>, vector<4x16x32xf32>
    tpu.vector_store %arg9[%192, %c0_130, %c0_131], %189 {strides = array<i32>} : memref<16x16x32xf32, #tpu.memory_space<vmem>>, vector<4x16x32xf32>,
    %194 = arith.index_cast %135 : i32 to index
    %c0_132 = arith.constant 0 : index
    %c0_133 = arith.constant 0 : index
    %195 = vector.load %arg8[%194, %c0_132, %c0_133] : memref<16x16x32xf32, #tpu.memory_space<vmem>>, vector<4x16x32xf32>
    tpu.vector_store %arg8[%194, %c0_132, %c0_133], %191 {strides = array<i32>} : memref<16x16x32xf32, #tpu.memory_space<vmem>>, vector<4x16x32xf32>,
    %c3_i32 = arith.constant 3 : i32
    %c4_i32_134 = arith.constant 4 : i32
    %196 = arith.muli %c3_i32, %c4_i32_134 : i32
    %197 = tpu.assume_multiple %196, 4 : i32
    %c0_i32_135 = arith.constant 0 : i32
    %198 = arith.addi %197, %c0_i32_135 : i32
    %199 = arith.index_cast %198 : i32 to index
    %c0_136 = arith.constant 0 : index
    %c0_137 = arith.constant 0 : index
    %200 = vector.load %arg7[%199, %c0_136, %c0_137] : memref<18x18x64xf32, #tpu.memory_space<vmem>>, vector<4x16x64xf32>
    %c0_i32_138 = arith.constant 0 : i32
    %201 = arith.addi %197, %c0_i32_138 : i32
    %202 = arith.index_cast %201 : i32 to index
    %c1_139 = arith.constant 1 : index
    %c0_140 = arith.constant 0 : index
    %203 = vector.load %arg7[%202, %c1_139, %c0_140] : memref<18x18x64xf32, #tpu.memory_space<vmem>>, vector<4x16x64xf32>
    %c0_i32_141 = arith.constant 0 : i32
    %204 = arith.addi %197, %c0_i32_141 : i32
    %205 = arith.index_cast %204 : i32 to index
    %c2_142 = arith.constant 2 : index
    %c0_143 = arith.constant 0 : index
    %206 = vector.load %arg7[%205, %c2_142, %c0_143] : memref<18x18x64xf32, #tpu.memory_space<vmem>>, vector<4x16x64xf32>
    %c1_i32_144 = arith.constant 1 : i32
    %207 = arith.addi %197, %c1_i32_144 : i32
    %208 = arith.index_cast %207 : i32 to index
    %c0_145 = arith.constant 0 : index
    %c0_146 = arith.constant 0 : index
    %209 = vector.load %arg7[%208, %c0_145, %c0_146] : memref<18x18x64xf32, #tpu.memory_space<vmem>>, vector<4x16x64xf32>
    %c1_i32_147 = arith.constant 1 : i32
    %210 = arith.addi %197, %c1_i32_147 : i32
    %211 = arith.index_cast %210 : i32 to index
    %c1_148 = arith.constant 1 : index
    %c0_149 = arith.constant 0 : index
    %212 = vector.load %arg7[%211, %c1_148, %c0_149] : memref<18x18x64xf32, #tpu.memory_space<vmem>>, vector<4x16x64xf32>
    %c1_i32_150 = arith.constant 1 : i32
    %213 = arith.addi %197, %c1_i32_150 : i32
    %214 = arith.index_cast %213 : i32 to index
    %c2_151 = arith.constant 2 : index
    %c0_152 = arith.constant 0 : index
    %215 = vector.load %arg7[%214, %c2_151, %c0_152] : memref<18x18x64xf32, #tpu.memory_space<vmem>>, vector<4x16x64xf32>
    %c2_i32_153 = arith.constant 2 : i32
    %216 = arith.addi %197, %c2_i32_153 : i32
    %217 = arith.index_cast %216 : i32 to index
    %c0_154 = arith.constant 0 : index
    %c0_155 = arith.constant 0 : index
    %218 = vector.load %arg7[%217, %c0_154, %c0_155] : memref<18x18x64xf32, #tpu.memory_space<vmem>>, vector<4x16x64xf32>
    %c2_i32_156 = arith.constant 2 : i32
    %219 = arith.addi %197, %c2_i32_156 : i32
    %220 = arith.index_cast %219 : i32 to index
    %c1_157 = arith.constant 1 : index
    %c0_158 = arith.constant 0 : index
    %221 = vector.load %arg7[%220, %c1_157, %c0_158] : memref<18x18x64xf32, #tpu.memory_space<vmem>>, vector<4x16x64xf32>
    %c2_i32_159 = arith.constant 2 : i32
    %222 = arith.addi %197, %c2_i32_159 : i32
    %223 = arith.index_cast %222 : i32 to index
    %c2_160 = arith.constant 2 : index
    %c0_161 = arith.constant 0 : index
    %224 = vector.load %arg7[%223, %c2_160, %c0_161] : memref<18x18x64xf32, #tpu.memory_space<vmem>>, vector<4x16x64xf32>
    %225 = tpu.concatenate %200, %203, %206, %209, %212, %215, %218, %221, %224 in 2 : vector<4x16x64xf32>, vector<4x16x64xf32>, vector<4x16x64xf32>, vector<4x16x64xf32>, vector<4x16x64xf32>, vector<4x16x64xf32>, vector<4x16x64xf32>, vector<4x16x64xf32>, vector<4x16x64xf32> -> vector<4x16x576xf32>
    %c0_162 = arith.constant 0 : index
    %c0_163 = arith.constant 0 : index
    %226 = vector.load %arg4[%c0_162, %c0_163] : memref<576x128xf32, #tpu.memory_space<vmem>>, vector<576x128xf32>
    %cst_164 = arith.constant dense<0.000000e+00> : vector<4x16x128xf32>
    %227 = tpu.matmul %225, %226, %cst_164 {dimension_numbers = #tpu.dot_dimension_numbers<[2], [0], [0, 1], [1], [0, 0, 0, 1, 1, 1], [], []>} : vector<4x16x576xf32>, vector<576x128xf32>, vector<4x16x128xf32> -> vector<4x16x128xf32>
    %228 = vector.shape_cast %9 : vector<128xf32> to vector<1x1x128xf32>
    %229 = vector.broadcast %228 : vector<1x1x128xf32> to vector<4x16x128xf32>
    %230 = arith.addf %227, %229 : vector<4x16x128xf32>
    %231 = tpu.iota {dimensions = array<i32: 2>} : vector<4x16x128xi32>
    %c96_i32_165 = arith.constant 96 : i32
    %232 = vector.broadcast %c96_i32_165 : i32 to vector<4x16x128xi32>
    %233 = arith.cmpi slt, %231, %232 : vector<4x16x128xi32>
    %cst_166 = arith.constant 5.000000e-01 : f32
    %234 = vector.broadcast %cst_166 : f32 to vector<4x16x128xf32>
    %235 = arith.mulf %234, %230 : vector<4x16x128xf32>
    %236 = arith.select %233, %235, %230 : vector<4x16x128xi1>, vector<4x16x128xf32>
    %237 = math.tanh %236 : vector<4x16x128xf32>
    %cst_167 = arith.constant 1.000000e+00 : f32
    %238 = vector.broadcast %cst_167 : f32 to vector<4x16x128xf32>
    %239 = arith.addf %237, %238 : vector<4x16x128xf32>
    %cst_168 = arith.constant 5.000000e-01 : f32
    %240 = vector.broadcast %cst_168 : f32 to vector<4x16x128xf32>
    %241 = arith.mulf %240, %239 : vector<4x16x128xf32>
    %242 = arith.select %233, %241, %237 : vector<4x16x128xi1>, vector<4x16x128xf32>
    %243 = vector.extract_strided_slice %242 {offsets = [0, 0, 0], sizes = [4, 16, 32], strides = [1, 1, 1]} : vector<4x16x128xf32> to vector<4x16x32xf32>
    %244 = vector.extract_strided_slice %242 {offsets = [0, 0, 32], sizes = [4, 16, 32], strides = [1, 1, 1]} : vector<4x16x128xf32> to vector<4x16x32xf32>
    %245 = vector.extract_strided_slice %242 {offsets = [0, 0, 64], sizes = [4, 16, 32], strides = [1, 1, 1]} : vector<4x16x128xf32> to vector<4x16x32xf32>
    %246 = vector.extract_strided_slice %242 {offsets = [0, 0, 96], sizes = [4, 16, 32], strides = [1, 1, 1]} : vector<4x16x128xf32> to vector<4x16x32xf32>
    %247 = arith.index_cast %197 : i32 to index
    %c0_169 = arith.constant 0 : index
    %c0_170 = arith.constant 0 : index
    %248 = vector.load %arg9[%247, %c0_169, %c0_170] : memref<16x16x32xf32, #tpu.memory_space<vmem>>, vector<4x16x32xf32>
    %249 = arith.mulf %244, %248 : vector<4x16x32xf32>
    %250 = arith.mulf %243, %246 : vector<4x16x32xf32>
    %251 = arith.addf %249, %250 : vector<4x16x32xf32>
    %252 = math.tanh %251 : vector<4x16x32xf32>
    %253 = arith.mulf %245, %252 : vector<4x16x32xf32>
    %254 = arith.index_cast %197 : i32 to index
    %c0_171 = arith.constant 0 : index
    %c0_172 = arith.constant 0 : index
    %255 = vector.load %arg9[%254, %c0_171, %c0_172] : memref<16x16x32xf32, #tpu.memory_space<vmem>>, vector<4x16x32xf32>
    tpu.vector_store %arg9[%254, %c0_171, %c0_172], %251 {strides = array<i32>} : memref<16x16x32xf32, #tpu.memory_space<vmem>>, vector<4x16x32xf32>,
    %256 = arith.index_cast %197 : i32 to index
    %c0_173 = arith.constant 0 : index
    %c0_174 = arith.constant 0 : index
    %257 = vector.load %arg8[%256, %c0_173, %c0_174] : memref<16x16x32xf32, #tpu.memory_space<vmem>>, vector<4x16x32xf32>
    tpu.vector_store %arg8[%256, %c0_173, %c0_174], %253 {strides = array<i32>} : memref<16x16x32xf32, #tpu.memory_space<vmem>>, vector<4x16x32xf32>,
    %c4_i32_175 = arith.constant 4 : i32
    %c0_i32_176 = arith.constant 0 : i32
    %258 = arith.cmpi eq, %arg1, %c0_i32_176 : i32
    %259 = arith.extui %258 : i1 to i32
    %c0_i32_177 = arith.constant 0 : i32
    %260 = arith.cmpi ne, %259, %c0_i32_177 : i32
    scf.if %260 {
      %c0_178 = arith.constant 0 : index
      %c0_179 = arith.constant 0 : index
      %c0_180 = arith.constant 0 : index
      %261 = vector.load %arg8[%c0_178, %c0_179, %c0_180] : memref<16x16x32xf32, #tpu.memory_space<vmem>>, vector<16x16x32xf32>
      %c0_181 = arith.constant 0 : index
      %c0_182 = arith.constant 0 : index
      %c0_183 = arith.constant 0 : index
      %262 = vector.load %arg9[%c0_181, %c0_182, %c0_183] : memref<16x16x32xf32, #tpu.memory_space<vmem>>, vector<16x16x32xf32>
      %263 = tpu.concatenate %261, %262 in 2 : vector<16x16x32xf32>, vector<16x16x32xf32> -> vector<16x16x64xf32>
      %c0_184 = arith.constant 0 : index
      %c0_185 = arith.constant 0 : index
      %c0_186 = arith.constant 0 : index
      %c0_187 = arith.constant 0 : index
      %264 = vector.load %arg6[%c0_184, %c0_185, %c0_186, %c0_187] : memref<1x16x16x64xf32, #tpu.memory_space<vmem>>, vector<1x16x16x64xf32>
      %265 = vector.shape_cast %264 : vector<1x16x16x64xf32> to vector<16x16x64xf32>
      %266 = vector.shape_cast %263 : vector<16x16x64xf32> to vector<1x16x16x64xf32>
      tpu.vector_store %arg6[%c0_184, %c0_185, %c0_186, %c0_187], %266 {strides = array<i32>} : memref<1x16x16x64xf32, #tpu.memory_space<vmem>>, vector<1x16x16x64xf32>,
    } else {
    }
    return
  }
  func.func @transform_0(%arg0: i32, %arg1: i32) -> (i32, i32, i32, i32, i32) {
    %c0_i32 = arith.constant 0 : i32
    %c0_i32_0 = arith.constant 0 : i32
    %c0_i32_1 = arith.constant 0 : i32
    %c0_i32_2 = arith.constant 0 : i32
    return %arg0, %arg1, %c0_i32, %c0_i32_0, %c0_i32_1 : i32, i32, i32, i32, i32
  }
  func.func @transform_1(%arg0: i32, %arg1: i32) -> (i32, i32, i32, i32) {
    %c0_i32 = arith.constant 0 : i32
    %c0_i32_0 = arith.constant 0 : i32
    %c0_i32_1 = arith.constant 0 : i32
    %c0_i32_2 = arith.constant 0 : i32
    return %arg0, %c0_i32, %c0_i32_0, %c0_i32_1 : i32, i32, i32, i32
  }
  func.func @transform_2(%arg0: i32, %arg1: i32) -> (i32, i32) {
    %c0_i32 = arith.constant 0 : i32
    %c0_i32_0 = arith.constant 0 : i32
    %c0_i32_1 = arith.constant 0 : i32
    return %c0_i32, %c0_i32_0 : i32, i32
  }
  func.func @transform_3(%arg0: i32, %arg1: i32) -> (i32, i32) {
    %c0_i32 = arith.constant 0 : i32
    %c0_i32_0 = arith.constant 0 : i32
    %c0_i32_1 = arith.constant 0 : i32
    return %c0_i32, %c0_i32_0 : i32, i32
  }
  func.func @transform_4(%arg0: i32, %arg1: i32) -> (i32, i32, i32, i32) {
    %c0_i32 = arith.constant 0 : i32
    %c0_i32_0 = arith.constant 0 : i32
    %c0_i32_1 = arith.constant 0 : i32
    %c0_i32_2 = arith.constant 0 : i32
    return %arg0, %c0_i32, %c0_i32_0, %c0_i32_1 : i32, i32, i32, i32
  }
}

</mosaic_0001>

<llo_original>
// kernel: convlstm_seq_fast.1
$region0: #{convlstm_seq_fast.1}
  #allocation0 [shape = 'u32[]', space=smem, size = 0x4, offset = 0x4, fixed_abs, tag = 'smem constant byte address 0x4 - core index']
  #allocation1 [shape = 'u32[144,128]{1,0:T(1,128)}', space=vmem, size = 0x12000, scoped, tag = 'internal scratch']
  #allocation2 [shape = 'f32[18,18,64]{2,1,0:T(8,128)}', space=vmem, size = 0x36000, scoped, tag = 'scratch operand']
  #allocation3 [shape = 'f32[16,16,32]{2,1,0:T(8,128)}', space=vmem, size = 0x20000, scoped, tag = 'scratch operand']
  #allocation4 [shape = 'f32[16,16,32]{2,1,0:T(8,128)}', space=vmem, size = 0x20000, scoped, tag = 'scratch operand']
  %s0 = inlined_call_operand.vmem [shape: f32[2,1,16,16,4], index: 0, kind: input, shape index: {}]
  %s1 = inlined_call_operand.hbm [shape: f32[2,16,16,64], index: 1, kind: input, shape index: {}]
  %s2 = inlined_call_operand.vmem [shape: f32[576,128], index: 2, kind: input, shape index: {}]
  %s3 = inlined_call_operand.vmem [shape: f32[1,128], index: 3, kind: input, shape index: {}]
  %s4 = inlined_call_operand.hbm [shape: f32[2,16,16,64], index: 4, kind: output, shape index: {}]
  %s5 = sld [smem:[#allocation0]]
  $region61: #{convlstm_seq_fast.1} parent=0
    _
  %s7 = ssub.s32 1, %s5
  %s8 = scalar_select 0, %s7, %s5
  $region1: #{convlstm_seq_fast.1} parent=0
    #allocation5 [shape = 'u8[262144]{0}', space=vmem, size = 0x40000, scoped, tag = 'input window, operand 1']
    #allocation6 [shape = 's32[2]{0}', space=sflag, size = 0x8, scoped, tag = 'scoped memory for convlstm_seq_fast.1']
    #allocation7 [shape = 's32[2]{0}', space=sflag, size = 0x8, scoped, tag = 'scoped memory for convlstm_seq_fast.1']
    #allocation8 [shape = 'u8[262144]{0}', space=vmem, size = 0x40000, scoped, tag = 'output window, operand 0']
    %9 = vsyncpa [#allocation6], 0
    %s10 = scalar_lea.sflag [#allocation6], 1
    %11 = vsyncpa %s10, 0
    %12 = vsyncpa [#allocation7], 0
    %s13 = scalar_lea.sflag [#allocation7], 1
    %14 = vsyncpa %s13, 0
    loop: start=0, step=1, limit=4
    $region2: #{convlstm_seq_fast.1} parent=1 // loop_pre_header
      _
    $region3: #{convlstm_seq_fast.1} parent=1 // loop_header
      %s16 = sphi 0, %s20
      %p17 = scmp.ge.s32.totalorder %s16, 4
      %s23 = sphi 0, %s35
      %s24 = sphi 0, %s31
      %s25 = sphi 0, %s23
      %s26 = sphi 0, %s24
      %s27 = sphi 0, %s25
      %s28 = sphi 0, %s26
      %s40 = sphi 0, %s42
      %s43 = sphi 0, %s40
      %s44 = sphi 0, %s43
      %s60 = sphi 0, %s44
      %s66 = sphi 0, %s68
      %s69 = sphi 0, %s66
      %s70 = sphi 0, %s69
      %s86 = sphi 0, %s70
      %s90 = sphi 0, %s90
      %s92 = sphi 0, %s90
      %s93 = sphi 0, %s92
      %s107 = sphi 0, %s93
      %s111 = sphi 0, %s111
      %s113 = sphi 0, %s111
      %s114 = sphi 0, %s113
      %s128 = sphi 0, %s114
      %s134 = sphi 0, %s136
      %s137 = sphi 0, %s134
      %s138 = sphi 0, %s137
      %s154 = sphi 0, %s138
    $region4: #{convlstm_seq_fast.1} parent=1 // loop_header_branch
      %19 = sbr.rel (%p17) target = $region8
    $region5: #{convlstm_seq_fast.1} parent=1 // loop_body
      %s21 = ssub.s32 %s16, 1
      %s22 = ssub.s32 %s16, 2
      %s29 = sadd.s32 1, %s24
      %p30 = scmp.ge.s32.totalorder %s29, 1
      %s31 = scalar_select %p30, 0, %s29
      %s32 = sadd.s32 1, %s23
      %s33 = scalar_select %p30, %s32, %s23
      %p34 = scmp.ge.s32.totalorder %s33, 2
      %s35 = scalar_select %p34, 0, %s33
      %s36 = ssub.s32 %s23, %s35
      %s37 = ssub.s32 %s24, %s31
      %s38 = sor.u32 %s36, %s37
      %p39 = scmp.eq.s32.totalorder %s38, 0
      %s41 = sadd.s32 %s40, 1
      %s42 = scalar_select %p39, %s40, %s41
      %p45 = pneg %p39
      %p46 = scmp.eq.s32.totalorder %s16, 1
      %p47 = por %p45, %p46
      %p48 = scmp.ne.s32.totalorder %s40, %s43
      %p49 = scmp.eq.s32.totalorder %s16, 0
      %p50 = por %p48, %p49
      %p51 = scmp.ne.s32.totalorder %s40, %s43
      %p52 = scmp.eq.s32.totalorder %s21, 1
      %p53 = por %p51, %p52
      %p54 = scmp.ne.s32.totalorder %s43, %s44
      %p55 = scmp.eq.s32.totalorder %s21, 0
      %p56 = por %p54, %p55
      %p57 = scmp.ne.s32.totalorder %s43, %s44
      %p58 = scmp.eq.s32.totalorder %s22, 1
      %p59 = por %p57, %p58
      %p61 = scmp.ne.s32.totalorder %s44, %s60
      %p62 = scmp.eq.s32.totalorder %s22, 0
      %p63 = por %p61, %p62
      %s64 = ssub.s32 %s23, %s35
      %p65 = scmp.eq.s32.totalorder %s64, 0
      %s67 = sadd.s32 %s66, 1
      %s68 = scalar_select %p65, %s66, %s67
      %p71 = pneg %p65
      %p72 = scmp.eq.s32.totalorder %s16, 1
      %p73 = por %p71, %p72
      %p74 = scmp.ne.s32.totalorder %s66, %s69
      %p75 = scmp.eq.s32.totalorder %s16, 0
      %p76 = por %p74, %p75
      %p77 = scmp.ne.s32.totalorder %s66, %s69
      %p78 = scmp.eq.s32.totalorder %s21, 1
      %p79 = por %p77, %p78
      %p80 = scmp.ne.s32.totalorder %s69, %s70
      %p81 = scmp.eq.s32.totalorder %s21, 0
      %p82 = por %p80, %p81
      %p83 = scmp.ne.s32.totalorder %s69, %s70
      %p84 = scmp.eq.s32.totalorder %s22, 1
      %p85 = por %p83, %p84
      %p87 = scmp.ne.s32.totalorder %s70, %s86
      %p88 = scmp.eq.s32.totalorder %s22, 0
      %p89 = por %p87, %p88
      %s91 = sadd.s32 %s90, 1
      %p94 = scmp.eq.s32.totalorder %s16, 1
      %p95 = scmp.ne.s32.totalorder %s90, %s92
      %p96 = scmp.eq.s32.totalorder %s16, 0
      %p97 = por %p95, %p96
      %p98 = scmp.ne.s32.totalorder %s90, %s92
      %p99 = scmp.eq.s32.totalorder %s21, 1
      %p100 = por %p98, %p99
      %p101 = scmp.ne.s32.totalorder %s92, %s93
      %p102 = scmp.eq.s32.totalorder %s21, 0
      %p103 = por %p101, %p102
      %p104 = scmp.ne.s32.totalorder %s92, %s93
      %p105 = scmp.eq.s32.totalorder %s22, 1
      %p106 = por %p104, %p105
      %p108 = scmp.ne.s32.totalorder %s93, %s107
      %p109 = scmp.eq.s32.totalorder %s22, 0
      %p110 = por %p108, %p109
      %s112 = sadd.s32 %s111, 1
      %p115 = scmp.eq.s32.totalorder %s16, 1
      %p116 = scmp.ne.s32.totalorder %s111, %s113
      %p117 = scmp.eq.s32.totalorder %s16, 0
      %p118 = por %p116, %p117
      %p119 = scmp.ne.s32.totalorder %s111, %s113
      %p120 = scmp.eq.s32.totalorder %s21, 1
      %p121 = por %p119, %p120
      %p122 = scmp.ne.s32.totalorder %s113, %s114
      %p123 = scmp.eq.s32.totalorder %s21, 0
      %p124 = por %p122, %p123
      %p125 = scmp.ne.s32.totalorder %s113, %s114
      %p126 = scmp.eq.s32.totalorder %s22, 1
      %p127 = por %p125, %p126
      %p129 = scmp.ne.s32.totalorder %s114, %s128
      %p130 = scmp.eq.s32.totalorder %s22, 0
      %p131 = por %p129, %p130
      %s132 = ssub.s32 %s23, %s35
      %p133 = scmp.eq.s32.totalorder %s132, 0
      %s135 = sadd.s32 %s134, 1
      %s136 = scalar_select %p133, %s134, %s135
      %p139 = pneg %p133
      %p140 = scmp.eq.s32.totalorder %s16, 1
      %p141 = por %p139, %p140
      %p142 = scmp.ne.s32.totalorder %s134, %s137
      %p143 = scmp.eq.s32.totalorder %s16, 0
      %p144 = por %p142, %p143
      %p145 = scmp.ne.s32.totalorder %s134, %s137
      %p146 = scmp.eq.s32.totalorder %s21, 1
      %p147 = por %p145, %p146
      %p148 = scmp.ne.s32.totalorder %s137, %s138
      %p149 = scmp.eq.s32.totalorder %s21, 0
      %p150 = por %p148, %p149
      %p151 = scmp.ne.s32.totalorder %s137, %s138
      %p152 = scmp.eq.s32.totalorder %s22, 1
      %p153 = por %p151, %p152
      %p155 = scmp.ne.s32.totalorder %s138, %s154
      %p156 = scmp.eq.s32.totalorder %s22, 0
      %p157 = por %p155, %p156
      %p158 = scmp.le.s32.totalorder 1, %s16
      %p159 = scmp.lt.s32.totalorder %s16, 3
      %p160 = pnand %p158, %p159
      %p161 = pneg %p160
      // Predicated region
      $region9: #{convlstm_seq_fast.1} parent=5 // pred_check
        _
      $region10: #{convlstm_seq_fast.1} parent=5 // pred_check_branch
        %163 = sbr.rel (%p160) target = $region12
      $region11: #{convlstm_seq_fast.1} parent=5 // pred_region
        %s164 = ssub.s32 %s16, 1
        // Predicated region
        $region13: #{convlstm_seq_fast.1} parent=11 // pred_check
          %p165 = pneg %p103
        $region14: #{convlstm_seq_fast.1} parent=11 // pred_check_branch
          %167 = sbr.rel (%p165) target = $region16
        $region15: #{convlstm_seq_fast.1} parent=11 // pred_region
          _
        $region16: #{convlstm_seq_fast.1} parent=11 // pred_fallthru
          _
        // Predicated region
        $region17: #{convlstm_seq_fast.1} parent=11 // pred_check
          %p168 = pneg %p124
        $region18: #{convlstm_seq_fast.1} parent=11 // pred_check_branch
          %170 = sbr.rel (%p168) target = $region20
        $region19: #{convlstm_seq_fast.1} parent=11 // pred_region
          _
        $region20: #{convlstm_seq_fast.1} parent=11 // pred_fallthru
          _
      $region12: #{convlstm_seq_fast.1} parent=5 // pred_fallthru
        _
      %p171 = scmp.lt.s32.totalorder %s16, 2
      // Predicated region
      $region21: #{convlstm_seq_fast.1} parent=5 // pred_check
        %p172 = pneg %p171
      $region22: #{convlstm_seq_fast.1} parent=5 // pred_check_branch
        %174 = sbr.rel (%p172) target = $region24
      $region23: #{convlstm_seq_fast.1} parent=5 // pred_region
        // Predicated region
        $region25: #{convlstm_seq_fast.1} parent=23 // pred_check
          %p175 = pneg %p50
        $region26: #{convlstm_seq_fast.1} parent=23 // pred_check_branch
          %177 = sbr.rel (%p175) target = $region28
        $region27: #{convlstm_seq_fast.1} parent=23 // pred_region
          %p178 = scmp.lt.s32.totalorder %s23, 1
          %s179 = scalar_select %p178, %s23, 1
          %p180 = scmp.lt.s32.totalorder %s24, 0
          %s181 = scalar_select %p180, %s24, 0
          %s182 = smul.addr %s181, 32
          %s183 = smul.addr %s179, 32
          %s184 = sadd.s32 %s182, %s183
          %s185 = smul.addr %s184, 8
          %s186 = scalar_lea.vmem %s0, %s185
        $region28: #{convlstm_seq_fast.1} parent=23 // pred_fallthru
          _
        // Predicated region
        $region29: #{convlstm_seq_fast.1} parent=23 // pred_check
          %p187 = pneg %p76
        $region30: #{convlstm_seq_fast.1} parent=23 // pred_check_branch
          %189 = sbr.rel (%p187) target = $region32
        $region31: #{convlstm_seq_fast.1} parent=23 // pred_region
          %s190 = sand.u32 %s66, 1
          %s191 = scalar_lea.sflag [#allocation6], %s190
          %s192 = sand.u32 %s66, 1
          %s193 = smul.addr %s192, 256
          %s194 = scalar_lea.vmem [#allocation5], %s193
          %s196 = ssub.s32 4096, 4096
          %197 = vsyncadd %s191, %s196
          %s198 = smul.addr %s23, 32
          %s199 = smul.addr %s198, 128
          %s200 = scalar_lea.hbm %s1, %s199
          %s201 = sshll.u32 %s194, 4
          %s202 = int_to_ptr.vmem [resolvable:$true] %s201
          %207 = dma.hbm_to_vmem [thread:$0]  %s200, 4096, %s202, %s191, 128, 128, 8
        $region32: #{convlstm_seq_fast.1} parent=23 // pred_fallthru
          _
      $region24: #{convlstm_seq_fast.1} parent=5 // pred_fallthru
        _
      %p208 = scmp.le.s32.totalorder 1, %s16
      %p209 = scmp.lt.s32.totalorder %s16, 3
      %p210 = pnand %p208, %p209
      %p211 = pneg %p210
      // Predicated region
      $region33: #{convlstm_seq_fast.1} parent=5 // pred_check
        _
      $region34: #{convlstm_seq_fast.1} parent=5 // pred_check_branch
        %213 = sbr.rel (%p210) target = $region36
      $region35: #{convlstm_seq_fast.1} parent=5 // pred_region
        %s214 = ssub.s32 %s16, 1
        %s215 = sand.u32 %s69, 1
        %s216 = scalar_lea.sflag [#allocation6], %s215
        %s217 = sand.u32 %s69, 1
        %s218 = smul.addr %s217, 256
        %s219 = scalar_lea.vmem [#allocation5], %s218
        // Predicated region
        $region37: #{convlstm_seq_fast.1} parent=35 // pred_check
          %p220 = pneg %p82
        $region38: #{convlstm_seq_fast.1} parent=35 // pred_check_branch
          %222 = sbr.rel (%p220) target = $region40
        $region39: #{convlstm_seq_fast.1} parent=35 // pred_region
          %223 = dma.done %s216, 4096
        $region40: #{convlstm_seq_fast.1} parent=35 // pred_fallthru
          _
        %p224 = scmp.lt.s32.totalorder %s25, 1
        %s225 = scalar_select %p224, %s25, 1
        %p226 = scmp.lt.s32.totalorder %s26, 0
        %s227 = scalar_select %p226, %s26, 0
        %s228 = smul.addr %s227, 32
        %s229 = smul.addr %s225, 32
        %s230 = sadd.s32 %s228, %s229
        %s231 = smul.addr %s230, 8
        %s232 = scalar_lea.vmem %s0, %s231
        %p233 = pneg %p56
        %p234 = pneg %p53
        %s235 = sand.u32 %s69, 1
        %s236 = scalar_lea.sflag [#allocation6], %s235
        %s237 = sand.u32 %s69, 1
        %s238 = smul.addr %s237, 256
        %s239 = scalar_lea.vmem [#allocation5], %s238
        %p240 = pneg %p82
        %p241 = pneg %p79
        %p242 = pneg %p103
        %p243 = pneg %p100
        %p244 = pneg %p124
        %p245 = pneg %p121
        %p246 = pneg %p150
        %p247 = pneg %p147
        %s248 = sand.u32 %s137, 1
        %s249 = scalar_lea.sflag [#allocation7], %s248
        %s250 = sand.u32 %s137, 1
        %s251 = smul.addr %s250, 256
        %s252 = scalar_lea.vmem [#allocation8], %s251
        %p253 = scmp.lt.s32.totalorder %s25, 1
        %s254 = scalar_select %p253, %s25, 1
        %p255 = scmp.lt.s32.totalorder %s26, 0
        %s256 = scalar_select %p255, %s26, 0
        %s257 = smul.addr %s256, 32
        %s258 = smul.addr %s254, 32
        %s259 = sadd.s32 %s257, %s258
        %s260 = smul.addr %s259, 8
        %s261 = scalar_lea.vmem %s0, %s260
        %p262 = scmp.eq.s32.totalorder %s26, 0
        // Predicated region
        $region41: #{convlstm_seq_fast.1} parent=35 // pred_check
          %p263 = pneg %p262
        $region42: #{convlstm_seq_fast.1} parent=35 // pred_check_branch
          %265 = sbr.rel (%p263) target = $region44
        $region43: #{convlstm_seq_fast.1} parent=35 // pred_region
          %vm266 = vcmask 523264
          %267 = vst.msk [vmem:[#allocation2] sm:$0xff] %vm266, 0.0
          %268 = vst.msk [vmem:[#allocation2 + $0x8] sm:$0xff] %vm266, 0.0
          %vm269 = vcmask 517120
          %270 = vst.msk [vmem:[#allocation2 + $0x10] sm:$0x3] %vm269, 0.0
          %271 = vst.msk [vmem:[#allocation2 + $0x18] sm:$0xff] %vm266, 0.0
          %272 = vst.msk [vmem:[#allocation2 + $0x20] sm:$0xff] %vm266, 0.0
          %273 = vst.msk [vmem:[#allocation2 + $0x28] sm:$0x3] %vm269, 0.0
          %274 = vst.msk [vmem:[#allocation2 + $0x30] sm:$0xff] %vm266, 0.0
          %275 = vst.msk [vmem:[#allocation2 + $0x38] sm:$0xff] %vm266, 0.0
          %276 = vst.msk [vmem:[#allocation2 + $0x40] sm:$0x3] %vm269, 0.0
          %277 = vst.msk [vmem:[#allocation2 + $0x48] sm:$0xff] %vm266, 0.0
          %278 = vst.msk [vmem:[#allocation2 + $0x50] sm:$0xff] %vm266, 0.0
          %279 = vst.msk [vmem:[#allocation2 + $0x58] sm:$0x3] %vm269, 0.0
          %280 = vst.msk [vmem:[#allocation2 + $0x60] sm:$0xff] %vm266, 0.0
          %281 = vst.msk [vmem:[#allocation2 + $0x68] sm:$0xff] %vm266, 0.0
          %282 = vst.msk [vmem:[#allocation2 + $0x70] sm:$0x3] %vm269, 0.0
          %283 = vst.msk [vmem:[#allocation2 + $0x78] sm:$0xff] %vm266, 0.0
          %284 = vst.msk [vmem:[#allocation2 + $0x80] sm:$0xff] %vm266, 0.0
          %285 = vst.msk [vmem:[#allocation2 + $0x88] sm:$0x3] %vm269, 0.0
          %286 = vst.msk [vmem:[#allocation2 + $0x90] sm:$0xff] %vm266, 0.0
          %287 = vst.msk [vmem:[#allocation2 + $0x98] sm:$0xff] %vm266, 0.0
          %288 = vst.msk [vmem:[#allocation2 + $0xa0] sm:$0x3] %vm269, 0.0
          %289 = vst.msk [vmem:[#allocation2 + $0xa8] sm:$0xff] %vm266, 0.0
          %290 = vst.msk [vmem:[#allocation2 + $0xb0] sm:$0xff] %vm266, 0.0
          %291 = vst.msk [vmem:[#allocation2 + $0xb8] sm:$0x3] %vm269, 0.0
          %292 = vst.msk [vmem:[#allocation2 + $0xc0] sm:$0xff] %vm266, 0.0
          %293 = vst.msk [vmem:[#allocation2 + $0xc8] sm:$0xff] %vm266, 0.0
          %294 = vst.msk [vmem:[#allocation2 + $0xd0] sm:$0x3] %vm269, 0.0
          %295 = vst.msk [vmem:[#allocation2 + $0xd8] sm:$0xff] %vm266, 0.0
          %296 = vst.msk [vmem:[#allocation2 + $0xe0] sm:$0xff] %vm266, 0.0
          %297 = vst.msk [vmem:[#allocation2 + $0xe8] sm:$0x3] %vm269, 0.0
          %298 = vst.msk [vmem:[#allocation2 + $0xf0] sm:$0xff] %vm266, 0.0
          %299 = vst.msk [vmem:[#allocation2 + $0xf8] sm:$0xff] %vm266, 0.0
          %300 = vst.msk [vmem:[#allocation2 + $0x100] sm:$0x3] %vm269, 0.0
          %301 = vst.msk [vmem:[#allocation2 + $0x108] sm:$0xff] %vm266, 0.0
          %302 = vst.msk [vmem:[#allocation2 + $0x110] sm:$0xff] %vm266, 0.0
          %303 = vst.msk [vmem:[#allocation2 + $0x118] sm:$0x3] %vm269, 0.0
          %304 = vst.msk [vmem:[#allocation2 + $0x120] sm:$0xff] %vm266, 0.0
          %305 = vst.msk [vmem:[#allocation2 + $0x128] sm:$0xff] %vm266, 0.0
          %306 = vst.msk [vmem:[#allocation2 + $0x130] sm:$0x3] %vm269, 0.0
          %307 = vst.msk [vmem:[#allocation2 + $0x138] sm:$0xff] %vm266, 0.0
          %308 = vst.msk [vmem:[#allocation2 + $0x140] sm:$0xff] %vm266, 0.0
          %309 = vst.msk [vmem:[#allocation2 + $0x148] sm:$0x3] %vm269, 0.0
          %310 = vst.msk [vmem:[#allocation2 + $0x150] sm:$0xff] %vm266, 0.0
          %311 = vst.msk [vmem:[#allocation2 + $0x158] sm:$0xff] %vm266, 0.0
          %312 = vst.msk [vmem:[#allocation2 + $0x160] sm:$0x3] %vm269, 0.0
          %313 = vst.msk [vmem:[#allocation2 + $0x168] sm:$0xff] %vm266, 0.0
          %314 = vst.msk [vmem:[#allocation2 + $0x170] sm:$0xff] %vm266, 0.0
          %315 = vst.msk [vmem:[#allocation2 + $0x178] sm:$0x3] %vm269, 0.0
          %316 = vst.msk [vmem:[#allocation2 + $0x180] sm:$0xff] %vm266, 0.0
          %317 = vst.msk [vmem:[#allocation2 + $0x188] sm:$0xff] %vm266, 0.0
          %318 = vst.msk [vmem:[#allocation2 + $0x190] sm:$0x3] %vm269, 0.0
          %319 = vst.msk [vmem:[#allocation2 + $0x198] sm:$0xff] %vm266, 0.0
          %320 = vst.msk [vmem:[#allocation2 + $0x1a0] sm:$0xff] %vm266, 0.0
          %321 = vst.msk [vmem:[#allocation2 + $0x1a8] sm:$0x3] %vm269, 0.0
          %v322 = vld [vmem:[%s219] sm:$0xff]
          %v323 = vld [vmem:[%s219 + $0x8] sm:$0xff]
          %v324 = vld [vmem:[%s219 + $0x10] sm:$0xff]
          %v325 = vld [vmem:[%s219 + $0x18] sm:$0xff]
          %v326 = vld [vmem:[%s219 + $0x20] sm:$0xff]
          %v327 = vld [vmem:[%s219 + $0x28] sm:$0xff]
          %v328 = vld [vmem:[%s219 + $0x30] sm:$0xff]
          %v329 = vld [vmem:[%s219 + $0x38] sm:$0xff]
          %v330 = vld [vmem:[%s219 + $0x40] sm:$0xff]
          %v331 = vld [vmem:[%s219 + $0x48] sm:$0xff]
          %v332 = vld [vmem:[%s219 + $0x50] sm:$0xff]
          %v333 = vld [vmem:[%s219 + $0x58] sm:$0xff]
          %v334 = vld [vmem:[%s219 + $0x60] sm:$0xff]
          %v335 = vld [vmem:[%s219 + $0x68] sm:$0xff]
          %v336 = vld [vmem:[%s219 + $0x70] sm:$0xff]
          %v337 = vld [vmem:[%s219 + $0x78] sm:$0xff]
          %v338 = vld [vmem:[%s219 + $0x80] sm:$0xff]
          %v339 = vld [vmem:[%s219 + $0x88] sm:$0xff]
          %v340 = vld [vmem:[%s219 + $0x90] sm:$0xff]
          %v341 = vld [vmem:[%s219 + $0x98] sm:$0xff]
          %v342 = vld [vmem:[%s219 + $0xa0] sm:$0xff]
          %v343 = vld [vmem:[%s219 + $0xa8] sm:$0xff]
          %v344 = vld [vmem:[%s219 + $0xb0] sm:$0xff]
          %v345 = vld [vmem:[%s219 + $0xb8] sm:$0xff]
          %v346 = vld [vmem:[%s219 + $0xc0] sm:$0xff]
          %v347 = vld [vmem:[%s219 + $0xc8] sm:$0xff]
          %v348 = vld [vmem:[%s219 + $0xd0] sm:$0xff]
          %v349 = vld [vmem:[%s219 + $0xd8] sm:$0xff]
          %v350 = vld [vmem:[%s219 + $0xe0] sm:$0xff]
          %v351 = vld [vmem:[%s219 + $0xe8] sm:$0xff]
          %v352 = vld [vmem:[%s219 + $0xf0] sm:$0xff]
          %v353 = vld [vmem:[%s219 + $0xf8] sm:$0xff]
          %vm354 = vcmask 261120
          %355 = vst.msk [vmem:[#allocation3] sm:$0xff] %vm354, %v322
          %356 = vst.msk [vmem:[#allocation3 + $0x8] sm:$0xff] %vm354, %v323
          %357 = vst.msk [vmem:[#allocation3 + $0x10] sm:$0xff] %vm354, %v324
          %358 = vst.msk [vmem:[#allocation3 + $0x18] sm:$0xff] %vm354, %v325
          %359 = vst.msk [vmem:[#allocation3 + $0x20] sm:$0xff] %vm354, %v326
          %360 = vst.msk [vmem:[#allocation3 + $0x28] sm:$0xff] %vm354, %v327
          %361 = vst.msk [vmem:[#allocation3 + $0x30] sm:$0xff] %vm354, %v328
          %362 = vst.msk [vmem:[#allocation3 + $0x38] sm:$0xff] %vm354, %v329
          %363 = vst.msk [vmem:[#allocation3 + $0x40] sm:$0xff] %vm354, %v330
          %364 = vst.msk [vmem:[#allocation3 + $0x48] sm:$0xff] %vm354, %v331
          %365 = vst.msk [vmem:[#allocation3 + $0x50] sm:$0xff] %vm354, %v332
          %366 = vst.msk [vmem:[#allocation3 + $0x58] sm:$0xff] %vm354, %v333
          %367 = vst.msk [vmem:[#allocation3 + $0x60] sm:$0xff] %vm354, %v334
          %368 = vst.msk [vmem:[#allocation3 + $0x68] sm:$0xff] %vm354, %v335
          %369 = vst.msk [vmem:[#allocation3 + $0x70] sm:$0xff] %vm354, %v336
          %370 = vst.msk [vmem:[#allocation3 + $0x78] sm:$0xff] %vm354, %v337
          %371 = vst.msk [vmem:[#allocation3 + $0x80] sm:$0xff] %vm354, %v338
          %372 = vst.msk [vmem:[#allocation3 + $0x88] sm:$0xff] %vm354, %v339
          %373 = vst.msk [vmem:[#allocation3 + $0x90] sm:$0xff] %vm354, %v340
          %374 = vst.msk [vmem:[#allocation3 + $0x98] sm:$0xff] %vm354, %v341
          %375 = vst.msk [vmem:[#allocation3 + $0xa0] sm:$0xff] %vm354, %v342
          %376 = vst.msk [vmem:[#allocation3 + $0xa8] sm:$0xff] %vm354, %v343
          %377 = vst.msk [vmem:[#allocation3 + $0xb0] sm:$0xff] %vm354, %v344
          %378 = vst.msk [vmem:[#allocation3 + $0xb8] sm:$0xff] %vm354, %v345
          %379 = vst.msk [vmem:[#allocation3 + $0xc0] sm:$0xff] %vm354, %v346
          %380 = vst.msk [vmem:[#allocation3 + $0xc8] sm:$0xff] %vm354, %v347
          %381 = vst.msk [vmem:[#allocation3 + $0xd0] sm:$0xff] %vm354, %v348
          %382 = vst.msk [vmem:[#allocation3 + $0xd8] sm:$0xff] %vm354, %v349
          %383 = vst.msk [vmem:[#allocation3 + $0xe0] sm:$0xff] %vm354, %v350
          %384 = vst.msk [vmem:[#allocation3 + $0xe8] sm:$0xff] %vm354, %v351
          %385 = vst.msk [vmem:[#allocation3 + $0xf0] sm:$0xff] %vm354, %v352
          %386 = vst.msk [vmem:[#allocation3 + $0xf8] sm:$0xff] %vm354, %v353
          %419 = vrot.lane.b32.xlu0 %v322, 96
          %v420 = vpop.permute.xlu0 %419
          %421 = vrot.lane.b32.xlu0 %v323, 96
          %v422 = vpop.permute.xlu0 %421
          %423 = vrot.lane.b32.xlu0 %v324, 96
          %v424 = vpop.permute.xlu0 %423
          %425 = vrot.lane.b32.xlu0 %v325, 96
          %v426 = vpop.permute.xlu0 %425
          %427 = vrot.lane.b32.xlu0 %v326, 96
          %v428 = vpop.permute.xlu0 %427
          %429 = vrot.lane.b32.xlu0 %v327, 96
          %v430 = vpop.permute.xlu0 %429
          %431 = vrot.lane.b32.xlu0 %v328, 96
          %v432 = vpop.permute.xlu0 %431
          %433 = vrot.lane.b32.xlu0 %v329, 96
          %v434 = vpop.permute.xlu0 %433
          %435 = vrot.lane.b32.xlu0 %v330, 96
          %v436 = vpop.permute.xlu0 %435
          %437 = vrot.lane.b32.xlu0 %v331, 96
          %v438 = vpop.permute.xlu0 %437
          %439 = vrot.lane.b32.xlu0 %v332, 96
          %v440 = vpop.permute.xlu0 %439
          %441 = vrot.lane.b32.xlu0 %v333, 96
          %v442 = vpop.permute.xlu0 %441
          %443 = vrot.lane.b32.xlu0 %v334, 96
          %v444 = vpop.permute.xlu0 %443
          %445 = vrot.lane.b32.xlu0 %v335, 96
          %v446 = vpop.permute.xlu0 %445
          %447 = vrot.lane.b32.xlu0 %v336, 96
          %v448 = vpop.permute.xlu0 %447
          %449 = vrot.lane.b32.xlu0 %v337, 96
          %v450 = vpop.permute.xlu0 %449
          %451 = vrot.lane.b32.xlu0 %v338, 96
          %v452 = vpop.permute.xlu0 %451
          %453 = vrot.lane.b32.xlu0 %v339, 96
          %v454 = vpop.permute.xlu0 %453
          %455 = vrot.lane.b32.xlu0 %v340, 96
          %v456 = vpop.permute.xlu0 %455
          %457 = vrot.lane.b32.xlu0 %v341, 96
          %v458 = vpop.permute.xlu0 %457
          %459 = vrot.lane.b32.xlu0 %v342, 96
          %v460 = vpop.permute.xlu0 %459
          %461 = vrot.lane.b32.xlu0 %v343, 96
          %v462 = vpop.permute.xlu0 %461
          %463 = vrot.lane.b32.xlu0 %v344, 96
          %v464 = vpop.permute.xlu0 %463
          %465 = vrot.lane.b32.xlu0 %v345, 96
          %v466 = vpop.permute.xlu0 %465
          %467 = vrot.lane.b32.xlu0 %v346, 96
          %v468 = vpop.permute.xlu0 %467
          %469 = vrot.lane.b32.xlu0 %v347, 96
          %v470 = vpop.permute.xlu0 %469
          %471 = vrot.lane.b32.xlu0 %v348, 96
          %v472 = vpop.permute.xlu0 %471
          %473 = vrot.lane.b32.xlu0 %v349, 96
          %v474 = vpop.permute.xlu0 %473
          %475 = vrot.lane.b32.xlu0 %v350, 96
          %v476 = vpop.permute.xlu0 %475
          %477 = vrot.lane.b32.xlu0 %v351, 96
          %v478 = vpop.permute.xlu0 %477
          %479 = vrot.lane.b32.xlu0 %v352, 96
          %v480 = vpop.permute.xlu0 %479
          %481 = vrot.lane.b32.xlu0 %v353, 96
          %v482 = vpop.permute.xlu0 %481
          %515 = vst.msk [vmem:[#allocation4] sm:$0xff] %vm354, %v420
          %516 = vst.msk [vmem:[#allocation4 + $0x8] sm:$0xff] %vm354, %v422
          %517 = vst.msk [vmem:[#allocation4 + $0x10] sm:$0xff] %vm354, %v424
          %518 = vst.msk [vmem:[#allocation4 + $0x18] sm:$0xff] %vm354, %v426
          %519 = vst.msk [vmem:[#allocation4 + $0x20] sm:$0xff] %vm354, %v428
          %520 = vst.msk [vmem:[#allocation4 + $0x28] sm:$0xff] %vm354, %v430
          %521 = vst.msk [vmem:[#allocation4 + $0x30] sm:$0xff] %vm354, %v432
          %522 = vst.msk [vmem:[#allocation4 + $0x38] sm:$0xff] %vm354, %v434
          %523 = vst.msk [vmem:[#allocation4 + $0x40] sm:$0xff] %vm354, %v436
          %524 = vst.msk [vmem:[#allocation4 + $0x48] sm:$0xff] %vm354, %v438
          %525 = vst.msk [vmem:[#allocation4 + $0x50] sm:$0xff] %vm354, %v440
          %526 = vst.msk [vmem:[#allocation4 + $0x58] sm:$0xff] %vm354, %v442
          %527 = vst.msk [vmem:[#allocation4 + $0x60] sm:$0xff] %vm354, %v444
          %528 = vst.msk [vmem:[#allocation4 + $0x68] sm:$0xff] %vm354, %v446
          %529 = vst.msk [vmem:[#allocation4 + $0x70] sm:$0xff] %vm354, %v448
          %530 = vst.msk [vmem:[#allocation4 + $0x78] sm:$0xff] %vm354, %v450
          %531 = vst.msk [vmem:[#allocation4 + $0x80] sm:$0xff] %vm354, %v452
          %532 = vst.msk [vmem:[#allocation4 + $0x88] sm:$0xff] %vm354, %v454
          %533 = vst.msk [vmem:[#allocation4 + $0x90] sm:$0xff] %vm354, %v456
          %534 = vst.msk [vmem:[#allocation4 + $0x98] sm:$0xff] %vm354, %v458
          %535 = vst.msk [vmem:[#allocation4 + $0xa0] sm:$0xff] %vm354, %v460
          %536 = vst.msk [vmem:[#allocation4 + $0xa8] sm:$0xff] %vm354, %v462
          %537 = vst.msk [vmem:[#allocation4 + $0xb0] sm:$0xff] %vm354, %v464
          %538 = vst.msk [vmem:[#allocation4 + $0xb8] sm:$0xff] %vm354, %v466
          %539 = vst.msk [vmem:[#allocation4 + $0xc0] sm:$0xff] %vm354, %v468
          %540 = vst.msk [vmem:[#allocation4 + $0xc8] sm:$0xff] %vm354, %v470
          %541 = vst.msk [vmem:[#allocation4 + $0xd0] sm:$0xff] %vm354, %v472
          %542 = vst.msk [vmem:[#allocation4 + $0xd8] sm:$0xff] %vm354, %v474
          %543 = vst.msk [vmem:[#allocation4 + $0xe0] sm:$0xff] %vm354, %v476
          %544 = vst.msk [vmem:[#allocation4 + $0xe8] sm:$0xff] %vm354, %v478
          %545 = vst.msk [vmem:[#allocation4 + $0xf0] sm:$0xff] %vm354, %v480
          %546 = vst.msk [vmem:[#allocation4 + $0xf8] sm:$0xff] %vm354, %v482
        $region44: #{convlstm_seq_fast.1} parent=35 // pred_fallthru
          _
        %v547 = vld [vmem:[#allocation3] sm:$0xff]
        %v548 = vld [vmem:[#allocation3 + $0x8] sm:$0xff]
        %v549 = vld [vmem:[#allocation3 + $0x10] sm:$0xff]
        %v550 = vld [vmem:[#allocation3 + $0x18] sm:$0xff]
        %v551 = vld [vmem:[#allocation3 + $0x20] sm:$0xff]
        %v552 = vld [vmem:[#allocation3 + $0x28] sm:$0xff]
        %v553 = vld [vmem:[#allocation3 + $0x30] sm:$0xff]
        %v554 = vld [vmem:[#allocation3 + $0x38] sm:$0xff]
        %v555 = vld [vmem:[#allocation3 + $0x40] sm:$0xff]
        %v556 = vld [vmem:[#allocation3 + $0x48] sm:$0xff]
        %v557 = vld [vmem:[#allocation3 + $0x50] sm:$0xff]
        %v558 = vld [vmem:[#allocation3 + $0x58] sm:$0xff]
        %v559 = vld [vmem:[#allocation3 + $0x60] sm:$0xff]
        %v560 = vld [vmem:[#allocation3 + $0x68] sm:$0xff]
        %v561 = vld [vmem:[#allocation3 + $0x70] sm:$0xff]
        %v562 = vld [vmem:[#allocation3 + $0x78] sm:$0xff]
        %v563 = vld [vmem:[#allocation3 + $0x80] sm:$0xff]
        %v564 = vld [vmem:[#allocation3 + $0x88] sm:$0xff]
        %v565 = vld [vmem:[#allocation3 + $0x90] sm:$0xff]
        %v566 = vld [vmem:[#allocation3 + $0x98] sm:$0xff]
        %v567 = vld [vmem:[#allocation3 + $0xa0] sm:$0xff]
        %v568 = vld [vmem:[#allocation3 + $0xa8] sm:$0xff]
        %v569 = vld [vmem:[#allocation3 + $0xb0] sm:$0xff]
        %v570 = vld [vmem:[#allocation3 + $0xb8] sm:$0xff]
        %v571 = vld [vmem:[#allocation3 + $0xc0] sm:$0xff]
        %v572 = vld [vmem:[#allocation3 + $0xc8] sm:$0xff]
        %v573 = vld [vmem:[#allocation3 + $0xd0] sm:$0xff]
        %v574 = vld [vmem:[#allocation3 + $0xd8] sm:$0xff]
        %v575 = vld [vmem:[#allocation3 + $0xe0] sm:$0xff]
        %v576 = vld [vmem:[#allocation3 + $0xe8] sm:$0xff]
        %v577 = vld [vmem:[#allocation3 + $0xf0] sm:$0xff]
        %v578 = vld [vmem:[#allocation3 + $0xf8] sm:$0xff]
        %s579 = scalar_lea.vmem [#allocation2], 24
        %vm580 = vcmask 261120
        %581 = vst.msk [vmem:[%s579 + $0x1] sm:$0xff] %vm580, %v547
        %582 = vst.msk [vmem:[%s579 + $0x9] sm:$0xff] %vm580, %v548
        %583 = vst.msk [vmem:[%s579 + $0x19] sm:$0xff] %vm580, %v549
        %584 = vst.msk [vmem:[%s579 + $0x21] sm:$0xff] %vm580, %v550
        %585 = vst.msk [vmem:[%s579 + $0x31] sm:$0xff] %vm580, %v551
        %586 = vst.msk [vmem:[%s579 + $0x39] sm:$0xff] %vm580, %v552
        %587 = vst.msk [vmem:[%s579 + $0x49] sm:$0xff] %vm580, %v553
        %588 = vst.msk [vmem:[%s579 + $0x51] sm:$0xff] %vm580, %v554
        %589 = vst.msk [vmem:[%s579 + $0x61] sm:$0xff] %vm580, %v555
        %590 = vst.msk [vmem:[%s579 + $0x69] sm:$0xff] %vm580, %v556
        %591 = vst.msk [vmem:[%s579 + $0x79] sm:$0xff] %vm580, %v557
        %592 = vst.msk [vmem:[%s579 + $0x81] sm:$0xff] %vm580, %v558
        %593 = vst.msk [vmem:[%s579 + $0x91] sm:$0xff] %vm580, %v559
        %594 = vst.msk [vmem:[%s579 + $0x99] sm:$0xff] %vm580, %v560
        %595 = vst.msk [vmem:[%s579 + $0xa9] sm:$0xff] %vm580, %v561
        %596 = vst.msk [vmem:[%s579 + $0xb1] sm:$0xff] %vm580, %v562
        %597 = vst.msk [vmem:[%s579 + $0xc1] sm:$0xff] %vm580, %v563
        %598 = vst.msk [vmem:[%s579 + $0xc9] sm:$0xff] %vm580, %v564
        %599 = vst.msk [vmem:[%s579 + $0xd9] sm:$0xff] %vm580, %v565
        %600 = vst.msk [vmem:[%s579 + $0xe1] sm:$0xff] %vm580, %v566
        %601 = vst.msk [vmem:[%s579 + $0xf1] sm:$0xff] %vm580, %v567
        %602 = vst.msk [vmem:[%s579 + $0xf9] sm:$0xff] %vm580, %v568
        %603 = vst.msk [vmem:[%s579 + $0x109] sm:$0xff] %vm580, %v569
        %604 = vst.msk [vmem:[%s579 + $0x111] sm:$0xff] %vm580, %v570
        %605 = vst.msk [vmem:[%s579 + $0x121] sm:$0xff] %vm580, %v571
        %606 = vst.msk [vmem:[%s579 + $0x129] sm:$0xff] %vm580, %v572
        %607 = vst.msk [vmem:[%s579 + $0x139] sm:$0xff] %vm580, %v573
        %608 = vst.msk [vmem:[%s579 + $0x141] sm:$0xff] %vm580, %v574
        %609 = vst.msk [vmem:[%s579 + $0x151] sm:$0xff] %vm580, %v575
        %610 = vst.msk [vmem:[%s579 + $0x159] sm:$0xff] %vm580, %v576
        %611 = vst.msk [vmem:[%s579 + $0x169] sm:$0xff] %vm580, %v577
        %612 = vst.msk [vmem:[%s579 + $0x171] sm:$0xff] %vm580, %v578
        %v613 = vld [vmem:[%s261] sm:$0xff]
        %v614 = vld [vmem:[%s261 + $0x8] sm:$0xff]
        %v615 = vld [vmem:[%s261 + $0x10] sm:$0xff]
        %v616 = vld [vmem:[%s261 + $0x18] sm:$0xff]
        %v617 = vld [vmem:[%s261 + $0x20] sm:$0xff]
        %v618 = vld [vmem:[%s261 + $0x28] sm:$0xff]
        %v619 = vld [vmem:[%s261 + $0x30] sm:$0xff]
        %v620 = vld [vmem:[%s261 + $0x38] sm:$0xff]
        %v621 = vld [vmem:[%s261 + $0x40] sm:$0xff]
        %v622 = vld [vmem:[%s261 + $0x48] sm:$0xff]
        %v623 = vld [vmem:[%s261 + $0x50] sm:$0xff]
        %v624 = vld [vmem:[%s261 + $0x58] sm:$0xff]
        %v625 = vld [vmem:[%s261 + $0x60] sm:$0xff]
        %v626 = vld [vmem:[%s261 + $0x68] sm:$0xff]
        %v627 = vld [vmem:[%s261 + $0x70] sm:$0xff]
        %v628 = vld [vmem:[%s261 + $0x78] sm:$0xff]
        %v629 = vld [vmem:[%s261 + $0x80] sm:$0xff]
        %v630 = vld [vmem:[%s261 + $0x88] sm:$0xff]
        %v631 = vld [vmem:[%s261 + $0x90] sm:$0xff]
        %v632 = vld [vmem:[%s261 + $0x98] sm:$0xff]
        %v633 = vld [vmem:[%s261 + $0xa0] sm:$0xff]
        %v634 = vld [vmem:[%s261 + $0xa8] sm:$0xff]
        %v635 = vld [vmem:[%s261 + $0xb0] sm:$0xff]
        %v636 = vld [vmem:[%s261 + $0xb8] sm:$0xff]
        %v637 = vld [vmem:[%s261 + $0xc0] sm:$0xff]
        %v638 = vld [vmem:[%s261 + $0xc8] sm:$0xff]
        %v639 = vld [vmem:[%s261 + $0xd0] sm:$0xff]
        %v640 = vld [vmem:[%s261 + $0xd8] sm:$0xff]
        %v641 = vld [vmem:[%s261 + $0xe0] sm:$0xff]
        %v642 = vld [vmem:[%s261 + $0xe8] sm:$0xff]
        %v643 = vld [vmem:[%s261 + $0xf0] sm:$0xff]
        %v644 = vld [vmem:[%s261 + $0xf8] sm:$0xff]
        %677 = vrot.lane.b32.xlu0 %v613, 32
        %v678 = vpop.permute.xlu0 %677
        %679 = vrot.lane.b32.xlu0 %v614, 32
        %v680 = vpop.permute.xlu0 %679
        %681 = vrot.lane.b32.xlu0 %v615, 32
        %v682 = vpop.permute.xlu0 %681
        %683 = vrot.lane.b32.xlu0 %v616, 32
        %v684 = vpop.permute.xlu0 %683
        %685 = vrot.lane.b32.xlu0 %v617, 32
        %v686 = vpop.permute.xlu0 %685
        %687 = vrot.lane.b32.xlu0 %v618, 32
        %v688 = vpop.permute.xlu0 %687
        %689 = vrot.lane.b32.xlu0 %v619, 32
        %v690 = vpop.permute.xlu0 %689
        %691 = vrot.lane.b32.xlu0 %v620, 32
        %v692 = vpop.permute.xlu0 %691
        %693 = vrot.lane.b32.xlu0 %v621, 32
        %v694 = vpop.permute.xlu0 %693
        %695 = vrot.lane.b32.xlu0 %v622, 32
        %v696 = vpop.permute.xlu0 %695
        %697 = vrot.lane.b32.xlu0 %v623, 32
        %v698 = vpop.permute.xlu0 %697
        %699 = vrot.lane.b32.xlu0 %v624, 32
        %v700 = vpop.permute.xlu0 %699
        %701 = vrot.lane.b32.xlu0 %v625, 32
        %v702 = vpop.permute.xlu0 %701
        %703 = vrot.lane.b32.xlu0 %v626, 32
        %v704 = vpop.permute.xlu0 %703
        %705 = vrot.lane.b32.xlu0 %v627, 32
        %v706 = vpop.permute.xlu0 %705
        %707 = vrot.lane.b32.xlu0 %v628, 32
        %v708 = vpop.permute.xlu0 %707
        %709 = vrot.lane.b32.xlu0 %v629, 32
        %v710 = vpop.permute.xlu0 %709
        %711 = vrot.lane.b32.xlu0 %v630, 32
        %v712 = vpop.permute.xlu0 %711
        %713 = vrot.lane.b32.xlu0 %v631, 32
        %v714 = vpop.permute.xlu0 %713
        %715 = vrot.lane.b32.xlu0 %v632, 32
        %v716 = vpop.permute.xlu0 %715
        %717 = vrot.lane.b32.xlu0 %v633, 32
        %v718 = vpop.permute.xlu0 %717
        %719 = vrot.lane.b32.xlu0 %v634, 32
        %v720 = vpop.permute.xlu0 %719
        %721 = vrot.lane.b32.xlu0 %v635, 32
        %v722 = vpop.permute.xlu0 %721
        %723 = vrot.lane.b32.xlu0 %v636, 32
        %v724 = vpop.permute.xlu0 %723
        %725 = vrot.lane.b32.xlu0 %v637, 32
        %v726 = vpop.permute.xlu0 %725
        %727 = vrot.lane.b32.xlu0 %v638, 32
        %v728 = vpop.permute.xlu0 %727
        %729 = vrot.lane.b32.xlu0 %v639, 32
        %v730 = vpop.permute.xlu0 %729
        %731 = vrot.lane.b32.xlu0 %v640, 32
        %v732 = vpop.permute.xlu0 %731
        %733 = vrot.lane.b32.xlu0 %v641, 32
        %v734 = vpop.permute.xlu0 %733
        %735 = vrot.lane.b32.xlu0 %v642, 32
        %v736 = vpop.permute.xlu0 %735
        %737 = vrot.lane.b32.xlu0 %v643, 32
        %v738 = vpop.permute.xlu0 %737
        %739 = vrot.lane.b32.xlu0 %v644, 32
        %v740 = vpop.permute.xlu0 %739
        %vm773 = vcmask 294144
        %774 = vst.msk [vmem:[%s579 + $0x1] sm:$0xff] %vm773, %v678
        %775 = vst.msk [vmem:[%s579 + $0x9] sm:$0xff] %vm773, %v680
        %776 = vst.msk [vmem:[%s579 + $0x19] sm:$0xff] %vm773, %v682
        %777 = vst.msk [vmem:[%s579 + $0x21] sm:$0xff] %vm773, %v684
        %778 = vst.msk [vmem:[%s579 + $0x31] sm:$0xff] %vm773, %v686
        %779 = vst.msk [vmem:[%s579 + $0x39] sm:$0xff] %vm773, %v688
        %780 = vst.msk [vmem:[%s579 + $0x49] sm:$0xff] %vm773, %v690
        %781 = vst.msk [vmem:[%s579 + $0x51] sm:$0xff] %vm773, %v692
        %782 = vst.msk [vmem:[%s579 + $0x61] sm:$0xff] %vm773, %v694
        %783 = vst.msk [vmem:[%s579 + $0x69] sm:$0xff] %vm773, %v696
        %784 = vst.msk [vmem:[%s579 + $0x79] sm:$0xff] %vm773, %v698
        %785 = vst.msk [vmem:[%s579 + $0x81] sm:$0xff] %vm773, %v700
        %786 = vst.msk [vmem:[%s579 + $0x91] sm:$0xff] %vm773, %v702
        %787 = vst.msk [vmem:[%s579 + $0x99] sm:$0xff] %vm773, %v704
        %788 = vst.msk [vmem:[%s579 + $0xa9] sm:$0xff] %vm773, %v706
        %789 = vst.msk [vmem:[%s579 + $0xb1] sm:$0xff] %vm773, %v708
        %790 = vst.msk [vmem:[%s579 + $0xc1] sm:$0xff] %vm773, %v710
        %791 = vst.msk [vmem:[%s579 + $0xc9] sm:$0xff] %vm773, %v712
        %792 = vst.msk [vmem:[%s579 + $0xd9] sm:$0xff] %vm773, %v714
        %793 = vst.msk [vmem:[%s579 + $0xe1] sm:$0xff] %vm773, %v716
        %794 = vst.msk [vmem:[%s579 + $0xf1] sm:$0xff] %vm773, %v718
        %795 = vst.msk [vmem:[%s579 + $0xf9] sm:$0xff] %vm773, %v720
        %796 = vst.msk [vmem:[%s579 + $0x109] sm:$0xff] %vm773, %v722
        %797 = vst.msk [vmem:[%s579 + $0x111] sm:$0xff] %vm773, %v724
        %798 = vst.msk [vmem:[%s579 + $0x121] sm:$0xff] %vm773, %v726
        %799 = vst.msk [vmem:[%s579 + $0x129] sm:$0xff] %vm773, %v728
        %800 = vst.msk [vmem:[%s579 + $0x139] sm:$0xff] %vm773, %v730
        %801 = vst.msk [vmem:[%s579 + $0x141] sm:$0xff] %vm773, %v732
        %802 = vst.msk [vmem:[%s579 + $0x151] sm:$0xff] %vm773, %v734
        %803 = vst.msk [vmem:[%s579 + $0x159] sm:$0xff] %vm773, %v736
        %804 = vst.msk [vmem:[%s579 + $0x169] sm:$0xff] %vm773, %v738
        %805 = vst.msk [vmem:[%s579 + $0x171] sm:$0xff] %vm773, %v740
        %v806 = vld [vmem:[%s3] sm:$0x1]
        %s807 = smul.u32 0, 24
        %s808 = scalar_lea.vmem [#allocation2], %s807
        %v809 = vld [vmem:[%s808] sm:$0xff]
        %v810 = vld [vmem:[%s808 + $0x8] sm:$0xff]
        %v811 = vld [vmem:[%s808 + $0x18] sm:$0xff]
        %v812 = vld [vmem:[%s808 + $0x20] sm:$0xff]
        %v813 = vld [vmem:[%s808 + $0x30] sm:$0xff]
        %v814 = vld [vmem:[%s808 + $0x38] sm:$0xff]
        %v815 = vld [vmem:[%s808 + $0x48] sm:$0xff]
        %v816 = vld [vmem:[%s808 + $0x50] sm:$0xff]
        %v817 = vld [vmem:[%s808 + $0x1] sm:$0xff]
        %v818 = vld [vmem:[%s808 + $0x9] sm:$0xff]
        %v819 = vld [vmem:[%s808 + $0x19] sm:$0xff]
        %v820 = vld [vmem:[%s808 + $0x21] sm:$0xff]
        %v821 = vld [vmem:[%s808 + $0x31] sm:$0xff]
        %v822 = vld [vmem:[%s808 + $0x39] sm:$0xff]
        %v823 = vld [vmem:[%s808 + $0x49] sm:$0xff]
        %v824 = vld [vmem:[%s808 + $0x51] sm:$0xff]
        %v825 = vld [vmem:[%s808 + $0x2] sm:$0xff]
        %v826 = vld [vmem:[%s808 + $0xa] sm:$0xff]
        %v827 = vld [vmem:[%s808 + $0x1a] sm:$0xff]
        %v828 = vld [vmem:[%s808 + $0x22] sm:$0xff]
        %v829 = vld [vmem:[%s808 + $0x32] sm:$0xff]
        %v830 = vld [vmem:[%s808 + $0x3a] sm:$0xff]
        %v831 = vld [vmem:[%s808 + $0x4a] sm:$0xff]
        %v832 = vld [vmem:[%s808 + $0x52] sm:$0xff]
        %s833 = sadd.s32 0, 1
        %s834 = smul.u32 %s833, 24
        %s835 = scalar_lea.vmem [#allocation2], %s834
        %v836 = vld [vmem:[%s835] sm:$0xff]
        %v837 = vld [vmem:[%s835 + $0x8] sm:$0xff]
        %v838 = vld [vmem:[%s835 + $0x18] sm:$0xff]
        %v839 = vld [vmem:[%s835 + $0x20] sm:$0xff]
        %v840 = vld [vmem:[%s835 + $0x30] sm:$0xff]
        %v841 = vld [vmem:[%s835 + $0x38] sm:$0xff]
        %v842 = vld [vmem:[%s835 + $0x48] sm:$0xff]
        %v843 = vld [vmem:[%s835 + $0x50] sm:$0xff]
        %v844 = vld [vmem:[%s835 + $0x1] sm:$0xff]
        %v845 = vld [vmem:[%s835 + $0x9] sm:$0xff]
        %v846 = vld [vmem:[%s835 + $0x19] sm:$0xff]
        %v847 = vld [vmem:[%s835 + $0x21] sm:$0xff]
        %v848 = vld [vmem:[%s835 + $0x31] sm:$0xff]
        %v849 = vld [vmem:[%s835 + $0x39] sm:$0xff]
        %v850 = vld [vmem:[%s835 + $0x49] sm:$0xff]
        %v851 = vld [vmem:[%s835 + $0x51] sm:$0xff]
        %v852 = vld [vmem:[%s835 + $0x2] sm:$0xff]
        %v853 = vld [vmem:[%s835 + $0xa] sm:$0xff]
        %v854 = vld [vmem:[%s835 + $0x1a] sm:$0xff]
        %v855 = vld [vmem:[%s835 + $0x22] sm:$0xff]
        %v856 = vld [vmem:[%s835 + $0x32] sm:$0xff]
        %v857 = vld [vmem:[%s835 + $0x3a] sm:$0xff]
        %v858 = vld [vmem:[%s835 + $0x4a] sm:$0xff]
        %v859 = vld [vmem:[%s835 + $0x52] sm:$0xff]
        %s860 = sadd.s32 0, 2
        %s861 = smul.u32 %s860, 24
        %s862 = scalar_lea.vmem [#allocation2], %s861
        %v863 = vld [vmem:[%s862] sm:$0xff]
        %v864 = vld [vmem:[%s862 + $0x8] sm:$0xff]
        %v865 = vld [vmem:[%s862 + $0x18] sm:$0xff]
        %v866 = vld [vmem:[%s862 + $0x20] sm:$0xff]
        %v867 = vld [vmem:[%s862 + $0x30] sm:$0xff]
        %v868 = vld [vmem:[%s862 + $0x38] sm:$0xff]
        %v869 = vld [vmem:[%s862 + $0x48] sm:$0xff]
        %v870 = vld [vmem:[%s862 + $0x50] sm:$0xff]
        %v871 = vld [vmem:[%s862 + $0x1] sm:$0xff]
        %v872 = vld [vmem:[%s862 + $0x9] sm:$0xff]
        %v873 = vld [vmem:[%s862 + $0x19] sm:$0xff]
        %v874 = vld [vmem:[%s862 + $0x21] sm:$0xff]
        %v875 = vld [vmem:[%s862 + $0x31] sm:$0xff]
        %v876 = vld [vmem:[%s862 + $0x39] sm:$0xff]
        %v877 = vld [vmem:[%s862 + $0x49] sm:$0xff]
        %v878 = vld [vmem:[%s862 + $0x51] sm:$0xff]
        %v879 = vld [vmem:[%s862 + $0x2] sm:$0xff]
        %v880 = vld [vmem:[%s862 + $0xa] sm:$0xff]
        %v881 = vld [vmem:[%s862 + $0x1a] sm:$0xff]
        %v882 = vld [vmem:[%s862 + $0x22] sm:$0xff]
        %v883 = vld [vmem:[%s862 + $0x32] sm:$0xff]
        %v884 = vld [vmem:[%s862 + $0x3a] sm:$0xff]
        %v885 = vld [vmem:[%s862 + $0x4a] sm:$0xff]
        %v886 = vld [vmem:[%s862 + $0x52] sm:$0xff]
        %895 = vrot.lane.b32.xlu0 %v817, 64
        %v896 = vpop.permute.xlu0 %895
        %897 = vrot.lane.b32.xlu0 %v818, 64
        %v898 = vpop.permute.xlu0 %897
        %899 = vrot.lane.b32.xlu0 %v819, 64
        %v900 = vpop.permute.xlu0 %899
        %901 = vrot.lane.b32.xlu0 %v820, 64
        %v902 = vpop.permute.xlu0 %901
        %903 = vrot.lane.b32.xlu0 %v821, 64
        %v904 = vpop.permute.xlu0 %903
        %905 = vrot.lane.b32.xlu0 %v822, 64
        %v906 = vpop.permute.xlu0 %905
        %907 = vrot.lane.b32.xlu0 %v823, 64
        %v908 = vpop.permute.xlu0 %907
        %909 = vrot.lane.b32.xlu0 %v824, 64
        %v910 = vpop.permute.xlu0 %909
        %927 = vrot.lane.b32.xlu0 %v836, 64
        %v928 = vpop.permute.xlu0 %927
        %929 = vrot.lane.b32.xlu0 %v837, 64
        %v930 = vpop.permute.xlu0 %929
        %931 = vrot.lane.b32.xlu0 %v838, 64
        %v932 = vpop.permute.xlu0 %931
        %933 = vrot.lane.b32.xlu0 %v839, 64
        %v934 = vpop.permute.xlu0 %933
        %935 = vrot.lane.b32.xlu0 %v840, 64
        %v936 = vpop.permute.xlu0 %935
        %937 = vrot.lane.b32.xlu0 %v841, 64
        %v938 = vpop.permute.xlu0 %937
        %939 = vrot.lane.b32.xlu0 %v842, 64
        %v940 = vpop.permute.xlu0 %939
        %941 = vrot.lane.b32.xlu0 %v843, 64
        %v942 = vpop.permute.xlu0 %941
        %959 = vrot.lane.b32.xlu0 %v852, 64
        %v960 = vpop.permute.xlu0 %959
        %961 = vrot.lane.b32.xlu0 %v853, 64
        %v962 = vpop.permute.xlu0 %961
        %963 = vrot.lane.b32.xlu0 %v854, 64
        %v964 = vpop.permute.xlu0 %963
        %965 = vrot.lane.b32.xlu0 %v855, 64
        %v966 = vpop.permute.xlu0 %965
        %967 = vrot.lane.b32.xlu0 %v856, 64
        %v968 = vpop.permute.xlu0 %967
        %969 = vrot.lane.b32.xlu0 %v857, 64
        %v970 = vpop.permute.xlu0 %969
        %971 = vrot.lane.b32.xlu0 %v858, 64
        %v972 = vpop.permute.xlu0 %971
        %973 = vrot.lane.b32.xlu0 %v859, 64
        %v974 = vpop.permute.xlu0 %973
        %991 = vrot.lane.b32.xlu0 %v871, 64
        %v992 = vpop.permute.xlu0 %991
        %993 = vrot.lane.b32.xlu0 %v872, 64
        %v994 = vpop.permute.xlu0 %993
        %995 = vrot.lane.b32.xlu0 %v873, 64
        %v996 = vpop.permute.xlu0 %995
        %997 = vrot.lane.b32.xlu0 %v874, 64
        %v998 = vpop.permute.xlu0 %997
        %999 = vrot.lane.b32.xlu0 %v875, 64
        %v1000 = vpop.permute.xlu0 %999
        %1001 = vrot.lane.b32.xlu0 %v876, 64
        %v1002 = vpop.permute.xlu0 %1001
        %1003 = vrot.lane.b32.xlu0 %v877, 64
        %v1004 = vpop.permute.xlu0 %1003
        %1005 = vrot.lane.b32.xlu0 %v878, 64
        %v1006 = vpop.permute.xlu0 %1005
        %vm1015 = vcmask 523264
        %v1016 = vsel %vm1015, %v809, %v896
        %v1017 = vsel %vm1015, %v810, %v898
        %v1018 = vsel %vm1015, %v811, %v900
        %v1019 = vsel %vm1015, %v812, %v902
        %v1020 = vsel %vm1015, %v813, %v904
        %v1021 = vsel %vm1015, %v814, %v906
        %v1022 = vsel %vm1015, %v815, %v908
        %v1023 = vsel %vm1015, %v816, %v910
        %v1024 = vsel %vm1015, %v825, %v928
        %v1025 = vsel %vm1015, %v826, %v930
        %v1026 = vsel %vm1015, %v827, %v932
        %v1027 = vsel %vm1015, %v828, %v934
        %v1028 = vsel %vm1015, %v829, %v936
        %v1029 = vsel %vm1015, %v830, %v938
        %v1030 = vsel %vm1015, %v831, %v940
        %v1031 = vsel %vm1015, %v832, %v942
        %v1032 = vsel %vm1015, %v844, %v960
        %v1033 = vsel %vm1015, %v845, %v962
        %v1034 = vsel %vm1015, %v846, %v964
        %v1035 = vsel %vm1015, %v847, %v966
        %v1036 = vsel %vm1015, %v848, %v968
        %v1037 = vsel %vm1015, %v849, %v970
        %v1038 = vsel %vm1015, %v850, %v972
        %v1039 = vsel %vm1015, %v851, %v974
        %v1040 = vsel %vm1015, %v863, %v992
        %v1041 = vsel %vm1015, %v864, %v994
        %v1042 = vsel %vm1015, %v865, %v996
        %v1043 = vsel %vm1015, %v866, %v998
        %v1044 = vsel %vm1015, %v867, %v1000
        %v1045 = vsel %vm1015, %v868, %v1002
        %v1046 = vsel %vm1015, %v869, %v1004
        %v1047 = vsel %vm1015, %v870, %v1006
        %v1048 = vld [vmem:[%s2] sm:$0xff]
        %v1049 = vld [vmem:[%s2 + $0x8] sm:$0xff]
        %v1050 = vld [vmem:[%s2 + $0x10] sm:$0xff]
        %v1051 = vld [vmem:[%s2 + $0x18] sm:$0xff]
        %v1052 = vld [vmem:[%s2 + $0x20] sm:$0xff]
        %v1053 = vld [vmem:[%s2 + $0x28] sm:$0xff]
        %v1054 = vld [vmem:[%s2 + $0x30] sm:$0xff]
        %v1055 = vld [vmem:[%s2 + $0x38] sm:$0xff]
        %v1056 = vld [vmem:[%s2 + $0x40] sm:$0xff]
        %v1057 = vld [vmem:[%s2 + $0x48] sm:$0xff]
        %v1058 = vld [vmem:[%s2 + $0x50] sm:$0xff]
        %v1059 = vld [vmem:[%s2 + $0x58] sm:$0xff]
        %v1060 = vld [vmem:[%s2 + $0x60] sm:$0xff]
        %v1061 = vld [vmem:[%s2 + $0x68] sm:$0xff]
        %v1062 = vld [vmem:[%s2 + $0x70] sm:$0xff]
        %v1063 = vld [vmem:[%s2 + $0x78] sm:$0xff]
        %v1064 = vld [vmem:[%s2 + $0x80] sm:$0xff]
        %v1065 = vld [vmem:[%s2 + $0x88] sm:$0xff]
        %v1066 = vld [vmem:[%s2 + $0x90] sm:$0xff]
        %v1067 = vld [vmem:[%s2 + $0x98] sm:$0xff]
        %v1068 = vld [vmem:[%s2 + $0xa0] sm:$0xff]
        %v1069 = vld [vmem:[%s2 + $0xa8] sm:$0xff]
        %v1070 = vld [vmem:[%s2 + $0xb0] sm:$0xff]
        %v1071 = vld [vmem:[%s2 + $0xb8] sm:$0xff]
        %v1072 = vld [vmem:[%s2 + $0xc0] sm:$0xff]
        %v1073 = vld [vmem:[%s2 + $0xc8] sm:$0xff]
        %v1074 = vld [vmem:[%s2 + $0xd0] sm:$0xff]
        %v1075 = vld [vmem:[%s2 + $0xd8] sm:$0xff]
        %v1076 = vld [vmem:[%s2 + $0xe0] sm:$0xff]
        %v1077 = vld [vmem:[%s2 + $0xe8] sm:$0xff]
        %v1078 = vld [vmem:[%s2 + $0xf0] sm:$0xff]
        %v1079 = vld [vmem:[%s2 + $0xf8] sm:$0xff]
        %v1080 = vld [vmem:[%s2 + $0x100] sm:$0xff]
        %v1081 = vld [vmem:[%s2 + $0x108] sm:$0xff]
        %v1082 = vld [vmem:[%s2 + $0x110] sm:$0xff]
        %v1083 = vld [vmem:[%s2 + $0x118] sm:$0xff]
        %v1084 = vld [vmem:[%s2 + $0x120] sm:$0xff]
        %v1085 = vld [vmem:[%s2 + $0x128] sm:$0xff]
        %v1086 = vld [vmem:[%s2 + $0x130] sm:$0xff]
        %v1087 = vld [vmem:[%s2 + $0x138] sm:$0xff]
        %v1088 = vld [vmem:[%s2 + $0x140] sm:$0xff]
        %v1089 = vld [vmem:[%s2 + $0x148] sm:$0xff]
        %v1090 = vld [vmem:[%s2 + $0x150] sm:$0xff]
        %v1091 = vld [vmem:[%s2 + $0x158] sm:$0xff]
        %v1092 = vld [vmem:[%s2 + $0x160] sm:$0xff]
        %v1093 = vld [vmem:[%s2 + $0x168] sm:$0xff]
        %v1094 = vld [vmem:[%s2 + $0x170] sm:$0xff]
        %v1095 = vld [vmem:[%s2 + $0x178] sm:$0xff]
        %v1096 = vld [vmem:[%s2 + $0x180] sm:$0xff]
        %v1097 = vld [vmem:[%s2 + $0x188] sm:$0xff]
        %v1098 = vld [vmem:[%s2 + $0x190] sm:$0xff]
        %v1099 = vld [vmem:[%s2 + $0x198] sm:$0xff]
        %v1100 = vld [vmem:[%s2 + $0x1a0] sm:$0xff]
        %v1101 = vld [vmem:[%s2 + $0x1a8] sm:$0xff]
        %v1102 = vld [vmem:[%s2 + $0x1b0] sm:$0xff]
        %v1103 = vld [vmem:[%s2 + $0x1b8] sm:$0xff]
        %v1104 = vld [vmem:[%s2 + $0x1c0] sm:$0xff]
        %v1105 = vld [vmem:[%s2 + $0x1c8] sm:$0xff]
        %v1106 = vld [vmem:[%s2 + $0x1d0] sm:$0xff]
        %v1107 = vld [vmem:[%s2 + $0x1d8] sm:$0xff]
        %v1108 = vld [vmem:[%s2 + $0x1e0] sm:$0xff]
        %v1109 = vld [vmem:[%s2 + $0x1e8] sm:$0xff]
        %v1110 = vld [vmem:[%s2 + $0x1f0] sm:$0xff]
        %v1111 = vld [vmem:[%s2 + $0x1f8] sm:$0xff]
        %v1112 = vld [vmem:[%s2 + $0x200] sm:$0xff]
        %v1113 = vld [vmem:[%s2 + $0x208] sm:$0xff]
        %v1114 = vld [vmem:[%s2 + $0x210] sm:$0xff]
        %v1115 = vld [vmem:[%s2 + $0x218] sm:$0xff]
        %v1116 = vld [vmem:[%s2 + $0x220] sm:$0xff]
        %v1117 = vld [vmem:[%s2 + $0x228] sm:$0xff]
        %v1118 = vld [vmem:[%s2 + $0x230] sm:$0xff]
        %v1119 = vld [vmem:[%s2 + $0x238] sm:$0xff]
        %v1121 = vlaneseq
        %v1122 = vshrl.u32 %v1121, 7
        %v1123 = vsub.s32 0, %v1122
        %v1124 = vrot.slane %v806, %v1123
        %v1127 = vsel %vm1015, %v879, 0
        %v1130 = vsel %vm1015, %v880, 0
        %v1133 = vsel %vm1015, %v881, 0
        %v1136 = vsel %vm1015, %v882, 0
        %v1139 = vsel %vm1015, %v883, 0
        %v1142 = vsel %vm1015, %v884, 0
        %v1145 = vsel %vm1015, %v885, 0
        %v1148 = vsel %vm1015, %v886, 0
        %1150 = vmatprep.subr.mxu0 0.0
        %1151 = vmatpush1.msra.mxu0 %v1048
        %1152 = vmatprep.subr.mxu0 0.0
        %1153 = vmatpush1.msra.mxu0 %v1049
        %1154 = vmatprep.subr.mxu0 0.0
        %1155 = vmatpush1.msra.mxu0 %v1050
        %1156 = vmatprep.subr.mxu0 0.0
        %1157 = vmatpush1.msra.mxu0 %v1051
        %1158 = vmatprep.subr.mxu0 0.0
        %1159 = vmatpush1.msra.mxu0 %v1052
        %1160 = vmatprep.subr.mxu0 0.0
        %1161 = vmatpush1.msra.mxu0 %v1053
        %1162 = vmatprep.subr.mxu0 0.0
        %1163 = vmatpush1.msra.mxu0 %v1054
        %1164 = vmatprep.subr.mxu0 0.0
        %1165 = vmatpush1.msra.mxu0 %v1055
        %1166 = vmatprep.subr.mxu0 0.0
        %1167 = vmatpush1.msra.mxu0 %v1056
        %1168 = vmatprep.subr.mxu0 0.0
        %1169 = vmatpush1.msra.mxu0 %v1057
        %1170 = vmatprep.subr.mxu0 0.0
        %1171 = vmatpush1.msra.mxu0 %v1058
        %1172 = vmatprep.subr.mxu0 0.0
        %1173 = vmatpush1.msra.mxu0 %v1059
        %1174 = vmatprep.subr.mxu0 0.0
        %1175 = vmatpush1.msra.mxu0 %v1060
        %1176 = vmatprep.subr.mxu0 0.0
        %1177 = vmatpush1.msra.mxu0 %v1061
        %1178 = vmatprep.subr.mxu0 0.0
        %1179 = vmatpush1.msra.mxu0 %v1062
        %1180 = vmatprep.subr.mxu0 0.0
        %1181 = vmatpush1.msra.mxu0 %v1063
        %1182 = vmatprep.subr.mxu0 0.0
        %1183 = vmatpush1.msra.mxu0 %v1064
        %1184 = vmatprep.subr.mxu0 0.0
        %1185 = vmatpush1.msra.mxu0 %v1065
        %1186 = vmatprep.subr.mxu0 0.0
        %1187 = vmatpush1.msra.mxu0 %v1066
        %1188 = vmatprep.subr.mxu0 0.0
        %1189 = vmatpush1.msra.mxu0 %v1067
        %1190 = vmatprep.subr.mxu0 0.0
        %1191 = vmatpush1.msra.mxu0 %v1068
        %1192 = vmatprep.subr.mxu0 0.0
        %1193 = vmatpush1.msra.mxu0 %v1069
        %1194 = vmatprep.subr.mxu0 0.0
        %1195 = vmatpush1.msra.mxu0 %v1070
        %1196 = vmatprep.subr.mxu0 0.0
        %1197 = vmatpush1.msra.mxu0 %v1071
        %1198 = vmatprep.subr.mxu0 0.0
        %1199 = vmatpush1.msra.mxu0 %v1072
        %1200 = vmatprep.subr.mxu0 0.0
        %1201 = vmatpush1.msra.mxu0 %v1073
        %1202 = vmatprep.subr.mxu0 0.0
        %1203 = vmatpush1.msra.mxu0 %v1074
        %1204 = vmatprep.subr.mxu0 0.0
        %1205 = vmatpush1.msra.mxu0 %v1075
        %1206 = vmatprep.subr.mxu0 0.0
        %1207 = vmatpush1.msra.mxu0 %v1076
        %1208 = vmatprep.subr.mxu0 0.0
        %1209 = vmatpush1.msra.mxu0 %v1077
        %1210 = vmatprep.subr.mxu0 0.0
        %1211 = vmatpush1.msra.mxu0 %v1078
        %1212 = vmatprep.subr.mxu0 0.0
        %1213 = vmatpush1.msra.mxu0 %v1079
        %1214 = vmatprep.mubr.f32.mxu0 %v1024
        %1215 = vmatmul.mubr.f32.gmra.mrb[0].mxu0 %v1016
        %v1216 = vpop.f32.mrb[0].mxu0
        %v1217 = vadd.f32 %v1124, %v1216
        %v1218 = vpop.f32.mrb[0].mxu0
        %1219 = vmatprep.mubr.f32.mxu0 %v1025
        %1220 = vmatmul.mubr.f32.gmra.mrb[0].mxu0 %v1017
        %v1221 = vpop.f32.mrb[0].mxu0
        %v1222 = vadd.f32 %v1124, %v1221
        %v1223 = vpop.f32.mrb[0].mxu0
        %1224 = vmatprep.mubr.f32.mxu0 %v1026
        %1225 = vmatmul.mubr.f32.gmra.mrb[0].mxu0 %v1018
        %v1226 = vpop.f32.mrb[0].mxu0
        %v1227 = vadd.f32 %v1124, %v1226
        %v1228 = vpop.f32.mrb[0].mxu0
        %1229 = vmatprep.mubr.f32.mxu0 %v1027
        %1230 = vmatmul.mubr.f32.gmra.mrb[0].mxu0 %v1019
        %v1231 = vpop.f32.mrb[0].mxu0
        %v1232 = vadd.f32 %v1124, %v1231
        %v1233 = vpop.f32.mrb[0].mxu0
        %1234 = vmatprep.mubr.f32.mxu0 %v1028
        %1235 = vmatmul.mubr.f32.gmra.mrb[0].mxu0 %v1020
        %v1236 = vpop.f32.mrb[0].mxu0
        %v1237 = vadd.f32 %v1124, %v1236
        %v1238 = vpop.f32.mrb[0].mxu0
        %1239 = vmatprep.mubr.f32.mxu0 %v1029
        %1240 = vmatmul.mubr.f32.gmra.mrb[0].mxu0 %v1021
        %v1241 = vpop.f32.mrb[0].mxu0
        %v1242 = vadd.f32 %v1124, %v1241
        %v1243 = vpop.f32.mrb[0].mxu0
        %1244 = vmatprep.mubr.f32.mxu0 %v1030
        %1245 = vmatmul.mubr.f32.gmra.mrb[0].mxu0 %v1022
        %v1246 = vpop.f32.mrb[0].mxu0
        %v1247 = vadd.f32 %v1124, %v1246
        %v1248 = vpop.f32.mrb[0].mxu0
        %1249 = vmatprep.mubr.f32.mxu0 %v1031
        %1250 = vmatmul.mubr.f32.gmra.mrb[0].mxu0 %v1023
        %v1251 = vpop.f32.mrb[0].mxu0
        %v1252 = vadd.f32 %v1124, %v1251
        %v1253 = vpop.f32.mrb[0].mxu0
        %1254 = vdwg.mxu0
        %1255 = vmatprep.subr.mxu0 0.0
        %1256 = vmatpush1.msra.mxu0 %v1080
        %1257 = vmatprep.subr.mxu0 0.0
        %1258 = vmatpush1.msra.mxu0 %v1081
        %1259 = vmatprep.subr.mxu0 0.0
        %1260 = vmatpush1.msra.mxu0 %v1082
        %1261 = vmatprep.subr.mxu0 0.0
        %1262 = vmatpush1.msra.mxu0 %v1083
        %1263 = vmatprep.subr.mxu0 0.0
        %1264 = vmatpush1.msra.mxu0 %v1084
        %1265 = vmatprep.subr.mxu0 0.0
        %1266 = vmatpush1.msra.mxu0 %v1085
        %1267 = vmatprep.subr.mxu0 0.0
        %1268 = vmatpush1.msra.mxu0 %v1086
        %1269 = vmatprep.subr.mxu0 0.0
        %1270 = vmatpush1.msra.mxu0 %v1087
        %1271 = vmatprep.subr.mxu0 0.0
        %1272 = vmatpush1.msra.mxu0 %v1088
        %1273 = vmatprep.subr.mxu0 0.0
        %1274 = vmatpush1.msra.mxu0 %v1089
        %1275 = vmatprep.subr.mxu0 0.0
        %1276 = vmatpush1.msra.mxu0 %v1090
        %1277 = vmatprep.subr.mxu0 0.0
        %1278 = vmatpush1.msra.mxu0 %v1091
        %1279 = vmatprep.subr.mxu0 0.0
        %1280 = vmatpush1.msra.mxu0 %v1092
        %1281 = vmatprep.subr.mxu0 0.0
        %1282 = vmatpush1.msra.mxu0 %v1093
        %1283 = vmatprep.subr.mxu0 0.0
        %1284 = vmatpush1.msra.mxu0 %v1094
        %1285 = vmatprep.subr.mxu0 0.0
        %1286 = vmatpush1.msra.mxu0 %v1095
        %1287 = vmatprep.subr.mxu0 0.0
        %1288 = vmatpush1.msra.mxu0 %v1096
        %1289 = vmatprep.subr.mxu0 0.0
        %1290 = vmatpush1.msra.mxu0 %v1097
        %1291 = vmatprep.subr.mxu0 0.0
        %1292 = vmatpush1.msra.mxu0 %v1098
        %1293 = vmatprep.subr.mxu0 0.0
        %1294 = vmatpush1.msra.mxu0 %v1099
        %1295 = vmatprep.subr.mxu0 0.0
        %1296 = vmatpush1.msra.mxu0 %v1100
        %1297 = vmatprep.subr.mxu0 0.0
        %1298 = vmatpush1.msra.mxu0 %v1101
        %1299 = vmatprep.subr.mxu0 0.0
        %1300 = vmatpush1.msra.mxu0 %v1102
        %1301 = vmatprep.subr.mxu0 0.0
        %1302 = vmatpush1.msra.mxu0 %v1103
        %1303 = vmatprep.subr.mxu0 0.0
        %1304 = vmatpush1.msra.mxu0 %v1104
        %1305 = vmatprep.subr.mxu0 0.0
        %1306 = vmatpush1.msra.mxu0 %v1105
        %1307 = vmatprep.subr.mxu0 0.0
        %1308 = vmatpush1.msra.mxu0 %v1106
        %1309 = vmatprep.subr.mxu0 0.0
        %1310 = vmatpush1.msra.mxu0 %v1107
        %1311 = vmatprep.subr.mxu0 0.0
        %1312 = vmatpush1.msra.mxu0 %v1108
        %1313 = vmatprep.subr.mxu0 0.0
        %1314 = vmatpush1.msra.mxu0 %v1109
        %1315 = vmatprep.subr.mxu0 0.0
        %1316 = vmatpush1.msra.mxu0 %v1110
        %1317 = vmatprep.subr.mxu0 0.0
        %1318 = vmatpush1.msra.mxu0 %v1111
        %1319 = vmatprep.mubr.f32.mxu0 %v1040
        %1320 = vmatmul.mubr.f32.gmra.mrb[0].mxu0 %v1032
        %v1321 = vpop.f32.mrb[0].mxu0
        %v1322 = vadd.f32 %v1217, %v1321
        %v1323 = vpop.f32.mrb[0].mxu0
        %1324 = vmatprep.mubr.f32.mxu0 %v1041
        %1325 = vmatmul.mubr.f32.gmra.mrb[0].mxu0 %v1033
        %v1326 = vpop.f32.mrb[0].mxu0
        %v1327 = vadd.f32 %v1222, %v1326
        %v1328 = vpop.f32.mrb[0].mxu0
        %1329 = vmatprep.mubr.f32.mxu0 %v1042
        %1330 = vmatmul.mubr.f32.gmra.mrb[0].mxu0 %v1034
        %v1331 = vpop.f32.mrb[0].mxu0
        %v1332 = vadd.f32 %v1227, %v1331
        %v1333 = vpop.f32.mrb[0].mxu0
        %1334 = vmatprep.mubr.f32.mxu0 %v1043
        %1335 = vmatmul.mubr.f32.gmra.mrb[0].mxu0 %v1035
        %v1336 = vpop.f32.mrb[0].mxu0
        %v1337 = vadd.f32 %v1232, %v1336
        %v1338 = vpop.f32.mrb[0].mxu0
        %1339 = vmatprep.mubr.f32.mxu0 %v1044
        %1340 = vmatmul.mubr.f32.gmra.mrb[0].mxu0 %v1036
        %v1341 = vpop.f32.mrb[0].mxu0
        %v1342 = vadd.f32 %v1237, %v1341
        %v1343 = vpop.f32.mrb[0].mxu0
        %1344 = vmatprep.mubr.f32.mxu0 %v1045
        %1345 = vmatmul.mubr.f32.gmra.mrb[0].mxu0 %v1037
        %v1346 = vpop.f32.mrb[0].mxu0
        %v1347 = vadd.f32 %v1242, %v1346
        %v1348 = vpop.f32.mrb[0].mxu0
        %1349 = vmatprep.mubr.f32.mxu0 %v1046
        %1350 = vmatmul.mubr.f32.gmra.mrb[0].mxu0 %v1038
        %v1351 = vpop.f32.mrb[0].mxu0
        %v1352 = vadd.f32 %v1247, %v1351
        %v1353 = vpop.f32.mrb[0].mxu0
        %1354 = vmatprep.mubr.f32.mxu0 %v1047
        %1355 = vmatmul.mubr.f32.gmra.mrb[0].mxu0 %v1039
        %v1356 = vpop.f32.mrb[0].mxu0
        %v1357 = vadd.f32 %v1252, %v1356
        %v1358 = vpop.f32.mrb[0].mxu0
        %1359 = vdwg.mxu0
        %1360 = vmatprep.subr.mxu0 0.0
        %1361 = vmatpush1.msra.mxu0 %v1112
        %1362 = vmatprep.subr.mxu0 0.0
        %1363 = vmatpush1.msra.mxu0 %v1113
        %1364 = vmatprep.subr.mxu0 0.0
        %1365 = vmatpush1.msra.mxu0 %v1114
        %1366 = vmatprep.subr.mxu0 0.0
        %1367 = vmatpush1.msra.mxu0 %v1115
        %1368 = vmatprep.subr.mxu0 0.0
        %1369 = vmatpush1.msra.mxu0 %v1116
        %1370 = vmatprep.subr.mxu0 0.0
        %1371 = vmatpush1.msra.mxu0 %v1117
        %1372 = vmatprep.subr.mxu0 0.0
        %1373 = vmatpush1.msra.mxu0 %v1118
        %1374 = vmatprep.subr.mxu0 0.0
        %1375 = vmatpush1.msra.mxu0 %v1119
        %1376 = vmatprep.subr.mxu0 0.0
        %1377 = vmatpush1.msra.mxu0 0.0
        %1378 = vmatprep.subr.mxu0 0.0
        %1379 = vmatpush1.msra.mxu0 0.0
        %1380 = vmatprep.subr.mxu0 0.0
        %1381 = vmatpush1.msra.mxu0 0.0
        %1382 = vmatprep.subr.mxu0 0.0
        %1383 = vmatpush1.msra.mxu0 0.0
        %1384 = vmatprep.subr.mxu0 0.0
        %1385 = vmatpush1.msra.mxu0 0.0
        %1386 = vmatprep.subr.mxu0 0.0
        %1387 = vmatpush1.msra.mxu0 0.0
        %1388 = vmatprep.subr.mxu0 0.0
        %1389 = vmatpush1.msra.mxu0 0.0
        %1390 = vmatprep.subr.mxu0 0.0
        %1391 = vmatpush1.msra.mxu0 0.0
        %1392 = vmatprep.subr.mxu0 0.0
        %1393 = vmatpush1.msra.mxu0 0.0
        %1394 = vmatprep.subr.mxu0 0.0
        %1395 = vmatpush1.msra.mxu0 0.0
        %1396 = vmatprep.subr.mxu0 0.0
        %1397 = vmatpush1.msra.mxu0 0.0
        %1398 = vmatprep.subr.mxu0 0.0
        %1399 = vmatpush1.msra.mxu0 0.0
        %1400 = vmatprep.subr.mxu0 0.0
        %1401 = vmatpush1.msra.mxu0 0.0
        %1402 = vmatprep.subr.mxu0 0.0
        %1403 = vmatpush1.msra.mxu0 0.0
        %1404 = vmatprep.subr.mxu0 0.0
        %1405 = vmatpush1.msra.mxu0 0.0
        %1406 = vmatprep.subr.mxu0 0.0
        %1407 = vmatpush1.msra.mxu0 0.0
        %1408 = vmatprep.subr.mxu0 0.0
        %1409 = vmatpush1.msra.mxu0 0.0
        %1410 = vmatprep.subr.mxu0 0.0
        %1411 = vmatpush1.msra.mxu0 0.0
        %1412 = vmatprep.subr.mxu0 0.0
        %1413 = vmatpush1.msra.mxu0 0.0
        %1414 = vmatprep.subr.mxu0 0.0
        %1415 = vmatpush1.msra.mxu0 0.0
        %1416 = vmatprep.subr.mxu0 0.0
        %1417 = vmatpush1.msra.mxu0 0.0
        %1418 = vmatprep.subr.mxu0 0.0
        %1419 = vmatpush1.msra.mxu0 0.0
        %1420 = vmatprep.subr.mxu0 0.0
        %1421 = vmatpush1.msra.mxu0 0.0
        %1422 = vmatprep.subr.mxu0 0.0
        %1423 = vmatpush1.msra.mxu0 0.0
        %1424 = vmatprep.mubr.f32.mxu0 0.0
        %1425 = vmatmul.mubr.f32.gmra.mrb[0].mxu0 %v1127
        %v1426 = vpop.f32.mrb[0].mxu0
        %v1427 = vadd.f32 %v1322, %v1426
        %v1428 = vpop.f32.mrb[0].mxu0
        %1429 = vmatprep.mubr.f32.mxu0 0.0
        %1430 = vmatmul.mubr.f32.gmra.mrb[0].mxu0 %v1130
        %v1431 = vpop.f32.mrb[0].mxu0
        %v1432 = vadd.f32 %v1327, %v1431
        %v1433 = vpop.f32.mrb[0].mxu0
        %1434 = vmatprep.mubr.f32.mxu0 0.0
        %1435 = vmatmul.mubr.f32.gmra.mrb[0].mxu0 %v1133
        %v1436 = vpop.f32.mrb[0].mxu0
        %v1437 = vadd.f32 %v1332, %v1436
        %v1438 = vpop.f32.mrb[0].mxu0
        %1439 = vmatprep.mubr.f32.mxu0 0.0
        %1440 = vmatmul.mubr.f32.gmra.mrb[0].mxu0 %v1136
        %v1441 = vpop.f32.mrb[0].mxu0
        %v1442 = vadd.f32 %v1337, %v1441
        %v1443 = vpop.f32.mrb[0].mxu0
        %1444 = vmatprep.mubr.f32.mxu0 0.0
        %1445 = vmatmul.mubr.f32.gmra.mrb[0].mxu0 %v1139
        %v1446 = vpop.f32.mrb[0].mxu0
        %v1447 = vadd.f32 %v1342, %v1446
        %v1448 = vpop.f32.mrb[0].mxu0
        %1449 = vmatprep.mubr.f32.mxu0 0.0
        %1450 = vmatmul.mubr.f32.gmra.mrb[0].mxu0 %v1142
        %v1451 = vpop.f32.mrb[0].mxu0
        %v1452 = vadd.f32 %v1347, %v1451
        %v1453 = vpop.f32.mrb[0].mxu0
        %1454 = vmatprep.mubr.f32.mxu0 0.0
        %1455 = vmatmul.mubr.f32.gmra.mrb[0].mxu0 %v1145
        %v1456 = vpop.f32.mrb[0].mxu0
        %v1457 = vadd.f32 %v1352, %v1456
        %v1458 = vpop.f32.mrb[0].mxu0
        %1459 = vmatprep.mubr.f32.mxu0 0.0
        %1460 = vmatmul.mubr.f32.gmra.mrb[0].mxu0 %v1148
        %v1461 = vpop.f32.mrb[0].mxu0
        %v1462 = vadd.f32 %v1357, %v1461
        %v1463 = vpop.f32.mrb[0].mxu0
        %1464 = vdwg.mxu0
        %v1465 = vlaneseq
        %v1466 = vand.u32 %v1465, 127
        %vm1467 = vcmp.lt.s32.totalorder %v1466, 96
        %v1468 = vmul.f32 %v1427, 0.5
        %v1469 = vmul.f32 %v1432, 0.5
        %v1470 = vmul.f32 %v1437, 0.5
        %v1471 = vmul.f32 %v1442, 0.5
        %v1472 = vmul.f32 %v1447, 0.5
        %v1473 = vmul.f32 %v1452, 0.5
        %v1474 = vmul.f32 %v1457, 0.5
        %v1475 = vmul.f32 %v1462, 0.5
        %v1476 = vsel %vm1467, %v1468, %v1427
        %v1477 = vsel %vm1467, %v1469, %v1432
        %v1478 = vsel %vm1467, %v1470, %v1437
        %v1479 = vsel %vm1467, %v1471, %v1442
        %v1480 = vsel %vm1467, %v1472, %v1447
        %v1481 = vsel %vm1467, %v1473, %v1452
        %v1482 = vsel %vm1467, %v1474, %v1457
        %v1483 = vsel %vm1467, %v1475, %v1462
        %v1484 = vtanh.pop %v1476
        %v1485 = vtanh.pop %v1477
        %v1486 = vtanh.pop %v1478
        %v1487 = vtanh.pop %v1479
        %v1488 = vtanh.pop %v1480
        %v1489 = vtanh.pop %v1481
        %v1490 = vtanh.pop %v1482
        %v1491 = vtanh.pop %v1483
        %v1492 = vadd.f32 %v1484, 1.0
        %v1493 = vadd.f32 %v1485, 1.0
        %v1494 = vadd.f32 %v1486, 1.0
        %v1495 = vadd.f32 %v1487, 1.0
        %v1496 = vadd.f32 %v1488, 1.0
        %v1497 = vadd.f32 %v1489, 1.0
        %v1498 = vadd.f32 %v1490, 1.0
        %v1499 = vadd.f32 %v1491, 1.0
        %v1500 = vmul.f32 %v1492, 0.5
        %v1501 = vmul.f32 %v1493, 0.5
        %v1502 = vmul.f32 %v1494, 0.5
        %v1503 = vmul.f32 %v1495, 0.5
        %v1504 = vmul.f32 %v1496, 0.5
        %v1505 = vmul.f32 %v1497, 0.5
        %v1506 = vmul.f32 %v1498, 0.5
        %v1507 = vmul.f32 %v1499, 0.5
        %v1508 = vsel %vm1467, %v1500, %v1484
        %v1509 = vsel %vm1467, %v1501, %v1485
        %v1510 = vsel %vm1467, %v1502, %v1486
        %v1511 = vsel %vm1467, %v1503, %v1487
        %v1512 = vsel %vm1467, %v1504, %v1488
        %v1513 = vsel %vm1467, %v1505, %v1489
        %v1514 = vsel %vm1467, %v1506, %v1490
        %v1515 = vsel %vm1467, %v1507, %v1491
        %s1516 = smul.u32 0, 16
        %s1517 = scalar_lea.vmem [#allocation4], %s1516
        %v1518 = vld [vmem:[%s1517] sm:$0xff]
        %v1519 = vld [vmem:[%s1517 + $0x8] sm:$0xff]
        %v1520 = vld [vmem:[%s1517 + $0x10] sm:$0xff]
        %v1521 = vld [vmem:[%s1517 + $0x18] sm:$0xff]
        %v1522 = vld [vmem:[%s1517 + $0x20] sm:$0xff]
        %v1523 = vld [vmem:[%s1517 + $0x28] sm:$0xff]
        %v1524 = vld [vmem:[%s1517 + $0x30] sm:$0xff]
        %v1525 = vld [vmem:[%s1517 + $0x38] sm:$0xff]
        %1534 = vrot.lane.b32.xlu0 %v1518, 32
        %v1535 = vpop.permute.xlu0 %1534
        %1536 = vrot.lane.b32.xlu0 %v1519, 32
        %v1537 = vpop.permute.xlu0 %1536
        %1538 = vrot.lane.b32.xlu0 %v1520, 32
        %v1539 = vpop.permute.xlu0 %1538
        %1540 = vrot.lane.b32.xlu0 %v1521, 32
        %v1541 = vpop.permute.xlu0 %1540
        %1542 = vrot.lane.b32.xlu0 %v1522, 32
        %v1543 = vpop.permute.xlu0 %1542
        %1544 = vrot.lane.b32.xlu0 %v1523, 32
        %v1545 = vpop.permute.xlu0 %1544
        %1546 = vrot.lane.b32.xlu0 %v1524, 32
        %v1547 = vpop.permute.xlu0 %1546
        %1548 = vrot.lane.b32.xlu0 %v1525, 32
        %v1549 = vpop.permute.xlu0 %1548
        %v1558 = vmul.f32 %v1508, %v1535
        %v1559 = vmul.f32 %v1509, %v1537
        %v1560 = vmul.f32 %v1510, %v1539
        %v1561 = vmul.f32 %v1511, %v1541
        %v1562 = vmul.f32 %v1512, %v1543
        %v1563 = vmul.f32 %v1513, %v1545
        %v1564 = vmul.f32 %v1514, %v1547
        %v1565 = vmul.f32 %v1515, %v1549
        %1574 = vrot.lane.b32.xlu0 %v1508, 32
        %v1575 = vpop.permute.xlu0 %1574
        %1576 = vrot.lane.b32.xlu0 %v1509, 32
        %v1577 = vpop.permute.xlu0 %1576
        %1578 = vrot.lane.b32.xlu0 %v1510, 32
        %v1579 = vpop.permute.xlu0 %1578
        %1580 = vrot.lane.b32.xlu0 %v1511, 32
        %v1581 = vpop.permute.xlu0 %1580
        %1582 = vrot.lane.b32.xlu0 %v1512, 32
        %v1583 = vpop.permute.xlu0 %1582
        %1584 = vrot.lane.b32.xlu0 %v1513, 32
        %v1585 = vpop.permute.xlu0 %1584
        %1586 = vrot.lane.b32.xlu0 %v1514, 32
        %v1587 = vpop.permute.xlu0 %1586
        %1588 = vrot.lane.b32.xlu0 %v1515, 32
        %v1589 = vpop.permute.xlu0 %1588
        %v1598 = vmul.f32 %v1508, %v1575
        %v1599 = vmul.f32 %v1509, %v1577
        %v1600 = vmul.f32 %v1510, %v1579
        %v1601 = vmul.f32 %v1511, %v1581
        %v1602 = vmul.f32 %v1512, %v1583
        %v1603 = vmul.f32 %v1513, %v1585
        %v1604 = vmul.f32 %v1514, %v1587
        %v1605 = vmul.f32 %v1515, %v1589
        %1614 = vrot.lane.b32.xlu0 %v1598, 32
        %v1615 = vpop.permute.xlu0 %1614
        %1616 = vrot.lane.b32.xlu0 %v1599, 32
        %v1617 = vpop.permute.xlu0 %1616
        %1618 = vrot.lane.b32.xlu0 %v1600, 32
        %v1619 = vpop.permute.xlu0 %1618
        %1620 = vrot.lane.b32.xlu0 %v1601, 32
        %v1621 = vpop.permute.xlu0 %1620
        %1622 = vrot.lane.b32.xlu0 %v1602, 32
        %v1623 = vpop.permute.xlu0 %1622
        %1624 = vrot.lane.b32.xlu0 %v1603, 32
        %v1625 = vpop.permute.xlu0 %1624
        %1626 = vrot.lane.b32.xlu0 %v1604, 32
        %v1627 = vpop.permute.xlu0 %1626
        %1628 = vrot.lane.b32.xlu0 %v1605, 32
        %v1629 = vpop.permute.xlu0 %1628
        %v1638 = vadd.f32 %v1558, %v1615
        %v1639 = vadd.f32 %v1559, %v1617
        %v1640 = vadd.f32 %v1560, %v1619
        %v1641 = vadd.f32 %v1561, %v1621
        %v1642 = vadd.f32 %v1562, %v1623
        %v1643 = vadd.f32 %v1563, %v1625
        %v1644 = vadd.f32 %v1564, %v1627
        %v1645 = vadd.f32 %v1565, %v1629
        %v1646 = vtanh.pop %v1638
        %v1647 = vtanh.pop %v1639
        %v1648 = vtanh.pop %v1640
        %v1649 = vtanh.pop %v1641
        %v1650 = vtanh.pop %v1642
        %v1651 = vtanh.pop %v1643
        %v1652 = vtanh.pop %v1644
        %v1653 = vtanh.pop %v1645
        %1662 = vrot.lane.b32.xlu0 %v1646, 32
        %v1663 = vpop.permute.xlu0 %1662
        %1664 = vrot.lane.b32.xlu0 %v1647, 32
        %v1665 = vpop.permute.xlu0 %1664
        %1666 = vrot.lane.b32.xlu0 %v1648, 32
        %v1667 = vpop.permute.xlu0 %1666
        %1668 = vrot.lane.b32.xlu0 %v1649, 32
        %v1669 = vpop.permute.xlu0 %1668
        %1670 = vrot.lane.b32.xlu0 %v1650, 32
        %v1671 = vpop.permute.xlu0 %1670
        %1672 = vrot.lane.b32.xlu0 %v1651, 32
        %v1673 = vpop.permute.xlu0 %1672
        %1674 = vrot.lane.b32.xlu0 %v1652, 32
        %v1675 = vpop.permute.xlu0 %1674
        %1676 = vrot.lane.b32.xlu0 %v1653, 32
        %v1677 = vpop.permute.xlu0 %1676
        %v1686 = vmul.f32 %v1508, %v1663
        %v1687 = vmul.f32 %v1509, %v1665
        %v1688 = vmul.f32 %v1510, %v1667
        %v1689 = vmul.f32 %v1511, %v1669
        %v1690 = vmul.f32 %v1512, %v1671
        %v1691 = vmul.f32 %v1513, %v1673
        %v1692 = vmul.f32 %v1514, %v1675
        %v1693 = vmul.f32 %v1515, %v1677
        %1702 = vrot.lane.b32.xlu0 %v1638, 96
        %v1703 = vpop.permute.xlu0 %1702
        %1704 = vrot.lane.b32.xlu0 %v1639, 96
        %v1705 = vpop.permute.xlu0 %1704
        %1706 = vrot.lane.b32.xlu0 %v1640, 96
        %v1707 = vpop.permute.xlu0 %1706
        %1708 = vrot.lane.b32.xlu0 %v1641, 96
        %v1709 = vpop.permute.xlu0 %1708
        %1710 = vrot.lane.b32.xlu0 %v1642, 96
        %v1711 = vpop.permute.xlu0 %1710
        %1712 = vrot.lane.b32.xlu0 %v1643, 96
        %v1713 = vpop.permute.xlu0 %1712
        %1714 = vrot.lane.b32.xlu0 %v1644, 96
        %v1715 = vpop.permute.xlu0 %1714
        %1716 = vrot.lane.b32.xlu0 %v1645, 96
        %v1717 = vpop.permute.xlu0 %1716
        %1726 = vst.msk [vmem:[%s1517] sm:$0xff] %vm580, %v1703
        %1727 = vst.msk [vmem:[%s1517 + $0x8] sm:$0xff] %vm580, %v1705
        %1728 = vst.msk [vmem:[%s1517 + $0x10] sm:$0xff] %vm580, %v1707
        %1729 = vst.msk [vmem:[%s1517 + $0x18] sm:$0xff] %vm580, %v1709
        %1730 = vst.msk [vmem:[%s1517 + $0x20] sm:$0xff] %vm580, %v1711
        %1731 = vst.msk [vmem:[%s1517 + $0x28] sm:$0xff] %vm580, %v1713
        %1732 = vst.msk [vmem:[%s1517 + $0x30] sm:$0xff] %vm580, %v1715
        %1733 = vst.msk [vmem:[%s1517 + $0x38] sm:$0xff] %vm580, %v1717
        %1742 = vrot.lane.b32.xlu0 %v1686, 64
        %v1743 = vpop.permute.xlu0 %1742
        %1744 = vrot.lane.b32.xlu0 %v1687, 64
        %v1745 = vpop.permute.xlu0 %1744
        %1746 = vrot.lane.b32.xlu0 %v1688, 64
        %v1747 = vpop.permute.xlu0 %1746
        %1748 = vrot.lane.b32.xlu0 %v1689, 64
        %v1749 = vpop.permute.xlu0 %1748
        %1750 = vrot.lane.b32.xlu0 %v1690, 64
        %v1751 = vpop.permute.xlu0 %1750
        %1752 = vrot.lane.b32.xlu0 %v1691, 64
        %v1753 = vpop.permute.xlu0 %1752
        %1754 = vrot.lane.b32.xlu0 %v1692, 64
        %v1755 = vpop.permute.xlu0 %1754
        %1756 = vrot.lane.b32.xlu0 %v1693, 64
        %v1757 = vpop.permute.xlu0 %1756
        %s1766 = scalar_lea.vmem [#allocation3], %s1516
        %1767 = vst.msk [vmem:[%s1766] sm:$0xff] %vm580, %v1743
        %1768 = vst.msk [vmem:[%s1766 + $0x8] sm:$0xff] %vm580, %v1745
        %1769 = vst.msk [vmem:[%s1766 + $0x10] sm:$0xff] %vm580, %v1747
        %1770 = vst.msk [vmem:[%s1766 + $0x18] sm:$0xff] %vm580, %v1749
        %1771 = vst.msk [vmem:[%s1766 + $0x20] sm:$0xff] %vm580, %v1751
        %1772 = vst.msk [vmem:[%s1766 + $0x28] sm:$0xff] %vm580, %v1753
        %1773 = vst.msk [vmem:[%s1766 + $0x30] sm:$0xff] %vm580, %v1755
        %1774 = vst.msk [vmem:[%s1766 + $0x38] sm:$0xff] %vm580, %v1757
        %s1775 = smul.u32 4, 24
        %s1776 = scalar_lea.vmem [#allocation2], %s1775
        %v1777 = vld [vmem:[%s1776] sm:$0xff]
        %v1778 = vld [vmem:[%s1776 + $0x8] sm:$0xff]
        %v1779 = vld [vmem:[%s1776 + $0x18] sm:$0xff]
        %v1780 = vld [vmem:[%s1776 + $0x20] sm:$0xff]
        %v1781 = vld [vmem:[%s1776 + $0x30] sm:$0xff]
        %v1782 = vld [vmem:[%s1776 + $0x38] sm:$0xff]
        %v1783 = vld [vmem:[%s1776 + $0x48] sm:$0xff]
        %v1784 = vld [vmem:[%s1776 + $0x50] sm:$0xff]
        %v1785 = vld [vmem:[%s1776 + $0x1] sm:$0xff]
        %v1786 = vld [vmem:[%s1776 + $0x9] sm:$0xff]
        %v1787 = vld [vmem:[%s1776 + $0x19] sm:$0xff]
        %v1788 = vld [vmem:[%s1776 + $0x21] sm:$0xff]
        %v1789 = vld [vmem:[%s1776 + $0x31] sm:$0xff]
        %v1790 = vld [vmem:[%s1776 + $0x39] sm:$0xff]
        %v1791 = vld [vmem:[%s1776 + $0x49] sm:$0xff]
        %v1792 = vld [vmem:[%s1776 + $0x51] sm:$0xff]
        %v1793 = vld [vmem:[%s1776 + $0x2] sm:$0xff]
        %v1794 = vld [vmem:[%s1776 + $0xa] sm:$0xff]
        %v1795 = vld [vmem:[%s1776 + $0x1a] sm:$0xff]
        %v1796 = vld [vmem:[%s1776 + $0x22] sm:$0xff]
        %v1797 = vld [vmem:[%s1776 + $0x32] sm:$0xff]
        %v1798 = vld [vmem:[%s1776 + $0x3a] sm:$0xff]
        %v1799 = vld [vmem:[%s1776 + $0x4a] sm:$0xff]
        %v1800 = vld [vmem:[%s1776 + $0x52] sm:$0xff]
        %s1801 = sadd.s32 4, 1
        %s1802 = smul.u32 %s1801, 24
        %s1803 = scalar_lea.vmem [#allocation2], %s1802
        %v1804 = vld [vmem:[%s1803] sm:$0xff]
        %v1805 = vld [vmem:[%s1803 + $0x8] sm:$0xff]
        %v1806 = vld [vmem:[%s1803 + $0x18] sm:$0xff]
        %v1807 = vld [vmem:[%s1803 + $0x20] sm:$0xff]
        %v1808 = vld [vmem:[%s1803 + $0x30] sm:$0xff]
        %v1809 = vld [vmem:[%s1803 + $0x38] sm:$0xff]
        %v1810 = vld [vmem:[%s1803 + $0x48] sm:$0xff]
        %v1811 = vld [vmem:[%s1803 + $0x50] sm:$0xff]
        %v1812 = vld [vmem:[%s1803 + $0x1] sm:$0xff]
        %v1813 = vld [vmem:[%s1803 + $0x9] sm:$0xff]
        %v1814 = vld [vmem:[%s1803 + $0x19] sm:$0xff]
        %v1815 = vld [vmem:[%s1803 + $0x21] sm:$0xff]
        %v1816 = vld [vmem:[%s1803 + $0x31] sm:$0xff]
        %v1817 = vld [vmem:[%s1803 + $0x39] sm:$0xff]
        %v1818 = vld [vmem:[%s1803 + $0x49] sm:$0xff]
        %v1819 = vld [vmem:[%s1803 + $0x51] sm:$0xff]
        %v1820 = vld [vmem:[%s1803 + $0x2] sm:$0xff]
        %v1821 = vld [vmem:[%s1803 + $0xa] sm:$0xff]
        %v1822 = vld [vmem:[%s1803 + $0x1a] sm:$0xff]
        %v1823 = vld [vmem:[%s1803 + $0x22] sm:$0xff]
        %v1824 = vld [vmem:[%s1803 + $0x32] sm:$0xff]
        %v1825 = vld [vmem:[%s1803 + $0x3a] sm:$0xff]
        %v1826 = vld [vmem:[%s1803 + $0x4a] sm:$0xff]
        %v1827 = vld [vmem:[%s1803 + $0x52] sm:$0xff]
        %s1828 = sadd.s32 4, 2
        %s1829 = smul.u32 %s1828, 24
        %s1830 = scalar_lea.vmem [#allocation2], %s1829
        %v1831 = vld [vmem:[%s1830] sm:$0xff]
        %v1832 = vld [vmem:[%s1830 + $0x8] sm:$0xff]
        %v1833 = vld [vmem:[%s1830 + $0x18] sm:$0xff]
        %v1834 = vld [vmem:[%s1830 + $0x20] sm:$0xff]
        %v1835 = vld [vmem:[%s1830 + $0x30] sm:$0xff]
        %v1836 = vld [vmem:[%s1830 + $0x38] sm:$0xff]
        %v1837 = vld [vmem:[%s1830 + $0x48] sm:$0xff]
        %v1838 = vld [vmem:[%s1830 + $0x50] sm:$0xff]
        %v1839 = vld [vmem:[%s1830 + $0x1] sm:$0xff]
        %v1840 = vld [vmem:[%s1830 + $0x9] sm:$0xff]
        %v1841 = vld [vmem:[%s1830 + $0x19] sm:$0xff]
        %v1842 = vld [vmem:[%s1830 + $0x21] sm:$0xff]
        %v1843 = vld [vmem:[%s1830 + $0x31] sm:$0xff]
        %v1844 = vld [vmem:[%s1830 + $0x39] sm:$0xff]
        %v1845 = vld [vmem:[%s1830 + $0x49] sm:$0xff]
        %v1846 = vld [vmem:[%s1830 + $0x51] sm:$0xff]
        %v1847 = vld [vmem:[%s1830 + $0x2] sm:$0xff]
        %v1848 = vld [vmem:[%s1830 + $0xa] sm:$0xff]
        %v1849 = vld [vmem:[%s1830 + $0x1a] sm:$0xff]
        %v1850 = vld [vmem:[%s1830 + $0x22] sm:$0xff]
        %v1851 = vld [vmem:[%s1830 + $0x32] sm:$0xff]
        %v1852 = vld [vmem:[%s1830 + $0x3a] sm:$0xff]
        %v1853 = vld [vmem:[%s1830 + $0x4a] sm:$0xff]
        %v1854 = vld [vmem:[%s1830 + $0x52] sm:$0xff]
        %1863 = vrot.lane.b32.xlu0 %v1785, 64
        %v1864 = vpop.permute.xlu0 %1863
        %1865 = vrot.lane.b32.xlu0 %v1786, 64
        %v1866 = vpop.permute.xlu0 %1865
        %1867 = vrot.lane.b32.xlu0 %v1787, 64
        %v1868 = vpop.permute.xlu0 %1867
        %1869 = vrot.lane.b32.xlu0 %v1788, 64
        %v1870 = vpop.permute.xlu0 %1869
        %1871 = vrot.lane.b32.xlu0 %v1789, 64
        %v1872 = vpop.permute.xlu0 %1871
        %1873 = vrot.lane.b32.xlu0 %v1790, 64
        %v1874 = vpop.permute.xlu0 %1873
        %1875 = vrot.lane.b32.xlu0 %v1791, 64
        %v1876 = vpop.permute.xlu0 %1875
        %1877 = vrot.lane.b32.xlu0 %v1792, 64
        %v1878 = vpop.permute.xlu0 %1877
        %1895 = vrot.lane.b32.xlu0 %v1804, 64
        %v1896 = vpop.permute.xlu0 %1895
        %1897 = vrot.lane.b32.xlu0 %v1805, 64
        %v1898 = vpop.permute.xlu0 %1897
        %1899 = vrot.lane.b32.xlu0 %v1806, 64
        %v1900 = vpop.permute.xlu0 %1899
        %1901 = vrot.lane.b32.xlu0 %v1807, 64
        %v1902 = vpop.permute.xlu0 %1901
        %1903 = vrot.lane.b32.xlu0 %v1808, 64
        %v1904 = vpop.permute.xlu0 %1903
        %1905 = vrot.lane.b32.xlu0 %v1809, 64
        %v1906 = vpop.permute.xlu0 %1905
        %1907 = vrot.lane.b32.xlu0 %v1810, 64
        %v1908 = vpop.permute.xlu0 %1907
        %1909 = vrot.lane.b32.xlu0 %v1811, 64
        %v1910 = vpop.permute.xlu0 %1909
        %1927 = vrot.lane.b32.xlu0 %v1820, 64
        %v1928 = vpop.permute.xlu0 %1927
        %1929 = vrot.lane.b32.xlu0 %v1821, 64
        %v1930 = vpop.permute.xlu0 %1929
        %1931 = vrot.lane.b32.xlu0 %v1822, 64
        %v1932 = vpop.permute.xlu0 %1931
        %1933 = vrot.lane.b32.xlu0 %v1823, 64
        %v1934 = vpop.permute.xlu0 %1933
        %1935 = vrot.lane.b32.xlu0 %v1824, 64
        %v1936 = vpop.permute.xlu0 %1935
        %1937 = vrot.lane.b32.xlu0 %v1825, 64
        %v1938 = vpop.permute.xlu0 %1937
        %1939 = vrot.lane.b32.xlu0 %v1826, 64
        %v1940 = vpop.permute.xlu0 %1939
        %1941 = vrot.lane.b32.xlu0 %v1827, 64
        %v1942 = vpop.permute.xlu0 %1941
        %1959 = vrot.lane.b32.xlu0 %v1839, 64
        %v1960 = vpop.permute.xlu0 %1959
        %1961 = vrot.lane.b32.xlu0 %v1840, 64
        %v1962 = vpop.permute.xlu0 %1961
        %1963 = vrot.lane.b32.xlu0 %v1841, 64
        %v1964 = vpop.permute.xlu0 %1963
        %1965 = vrot.lane.b32.xlu0 %v1842, 64
        %v1966 = vpop.permute.xlu0 %1965
        %1967 = vrot.lane.b32.xlu0 %v1843, 64
        %v1968 = vpop.permute.xlu0 %1967
        %1969 = vrot.lane.b32.xlu0 %v1844, 64
        %v1970 = vpop.permute.xlu0 %1969
        %1971 = vrot.lane.b32.xlu0 %v1845, 64
        %v1972 = vpop.permute.xlu0 %1971
        %1973 = vrot.lane.b32.xlu0 %v1846, 64
        %v1974 = vpop.permute.xlu0 %1973
        %v1983 = vsel %vm1015, %v1777, %v1864
        %v1984 = vsel %vm1015, %v1778, %v1866
        %v1985 = vsel %vm1015, %v1779, %v1868
        %v1986 = vsel %vm1015, %v1780, %v1870
        %v1987 = vsel %vm1015, %v1781, %v1872
        %v1988 = vsel %vm1015, %v1782, %v1874
        %v1989 = vsel %vm1015, %v1783, %v1876
        %v1990 = vsel %vm1015, %v1784, %v1878
        %v1991 = vsel %vm1015, %v1793, %v1896
        %v1992 = vsel %vm1015, %v1794, %v1898
        %v1993 = vsel %vm1015, %v1795, %v1900
        %v1994 = vsel %vm1015, %v1796, %v1902
        %v1995 = vsel %vm1015, %v1797, %v1904
        %v1996 = vsel %vm1015, %v1798, %v1906
        %v1997 = vsel %vm1015, %v1799, %v1908
        %v1998 = vsel %vm1015, %v1800, %v1910
        %v1999 = vsel %vm1015, %v1812, %v1928
        %v2000 = vsel %vm1015, %v1813, %v1930
        %v2001 = vsel %vm1015, %v1814, %v1932
        %v2002 = vsel %vm1015, %v1815, %v1934
        %v2003 = vsel %vm1015, %v1816, %v1936
        %v2004 = vsel %vm1015, %v1817, %v1938
        %v2005 = vsel %vm1015, %v1818, %v1940
        %v2006 = vsel %vm1015, %v1819, %v1942
        %v2007 = vsel %vm1015, %v1831, %v1960
        %v2008 = vsel %vm1015, %v1832, %v1962
        %v2009 = vsel %vm1015, %v1833, %v1964
        %v2010 = vsel %vm1015, %v1834, %v1966
        %v2011 = vsel %vm1015, %v1835, %v1968
        %v2012 = vsel %vm1015, %v1836, %v1970
        %v2013 = vsel %vm1015, %v1837, %v1972
        %v2014 = vsel %vm1015, %v1838, %v1974
        %v2015 = vld [vmem:[%s2] sm:$0xff]
        %v2016 = vld [vmem:[%s2 + $0x8] sm:$0xff]
        %v2017 = vld [vmem:[%s2 + $0x10] sm:$0xff]
        %v2018 = vld [vmem:[%s2 + $0x18] sm:$0xff]
        %v2019 = vld [vmem:[%s2 + $0x20] sm:$0xff]
        %v2020 = vld [vmem:[%s2 + $0x28] sm:$0xff]
        %v2021 = vld [vmem:[%s2 + $0x30] sm:$0xff]
        %v2022 = vld [vmem:[%s2 + $0x38] sm:$0xff]
        %v2023 = vld [vmem:[%s2 + $0x40] sm:$0xff]
        %v2024 = vld [vmem:[%s2 + $0x48] sm:$0xff]
        %v2025 = vld [vmem:[%s2 + $0x50] sm:$0xff]
        %v2026 = vld [vmem:[%s2 + $0x58] sm:$0xff]
        %v2027 = vld [vmem:[%s2 + $0x60] sm:$0xff]
        %v2028 = vld [vmem:[%s2 + $0x68] sm:$0xff]
        %v2029 = vld [vmem:[%s2 + $0x70] sm:$0xff]
        %v2030 = vld [vmem:[%s2 + $0x78] sm:$0xff]
        %v2031 = vld [vmem:[%s2 + $0x80] sm:$0xff]
        %v2032 = vld [vmem:[%s2 + $0x88] sm:$0xff]
        %v2033 = vld [vmem:[%s2 + $0x90] sm:$0xff]
        %v2034 = vld [vmem:[%s2 + $0x98] sm:$0xff]
        %v2035 = vld [vmem:[%s2 + $0xa0] sm:$0xff]
        %v2036 = vld [vmem:[%s2 + $0xa8] sm:$0xff]
        %v2037 = vld [vmem:[%s2 + $0xb0] sm:$0xff]
        %v2038 = vld [vmem:[%s2 + $0xb8] sm:$0xff]
        %v2039 = vld [vmem:[%s2 + $0xc0] sm:$0xff]
        %v2040 = vld [vmem:[%s2 + $0xc8] sm:$0xff]
        %v2041 = vld [vmem:[%s2 + $0xd0] sm:$0xff]
        %v2042 = vld [vmem:[%s2 + $0xd8] sm:$0xff]
        %v2043 = vld [vmem:[%s2 + $0xe0] sm:$0xff]
        %v2044 = vld [vmem:[%s2 + $0xe8] sm:$0xff]
        %v2045 = vld [vmem:[%s2 + $0xf0] sm:$0xff]
        %v2046 = vld [vmem:[%s2 + $0xf8] sm:$0xff]
        %v2047 = vld [vmem:[%s2 + $0x100] sm:$0xff]
        %v2048 = vld [vmem:[%s2 + $0x108] sm:$0xff]
        %v2049 = vld [vmem:[%s2 + $0x110] sm:$0xff]
        %v2050 = vld [vmem:[%s2 + $0x118] sm:$0xff]
        %v2051 = vld [vmem:[%s2 + $0x120] sm:$0xff]
        %v2052 = vld [vmem:[%s2 + $0x128] sm:$0xff]
        %v2053 = vld [vmem:[%s2 + $0x130] sm:$0xff]
        %v2054 = vld [vmem:[%s2 + $0x138] sm:$0xff]
        %v2055 = vld [vmem:[%s2 + $0x140] sm:$0xff]
        %v2056 = vld [vmem:[%s2 + $0x148] sm:$0xff]
        %v2057 = vld [vmem:[%s2 + $0x150] sm:$0xff]
        %v2058 = vld [vmem:[%s2 + $0x158] sm:$0xff]
        %v2059 = vld [vmem:[%s2 + $0x160] sm:$0xff]
        %v2060 = vld [vmem:[%s2 + $0x168] sm:$0xff]
        %v2061 = vld [vmem:[%s2 + $0x170] sm:$0xff]
        %v2062 = vld [vmem:[%s2 + $0x178] sm:$0xff]
        %v2063 = vld [vmem:[%s2 + $0x180] sm:$0xff]
        %v2064 = vld [vmem:[%s2 + $0x188] sm:$0xff]
        %v2065 = vld [vmem:[%s2 + $0x190] sm:$0xff]
        %v2066 = vld [vmem:[%s2 + $0x198] sm:$0xff]
        %v2067 = vld [vmem:[%s2 + $0x1a0] sm:$0xff]
        %v2068 = vld [vmem:[%s2 + $0x1a8] sm:$0xff]
        %v2069 = vld [vmem:[%s2 + $0x1b0] sm:$0xff]
        %v2070 = vld [vmem:[%s2 + $0x1b8] sm:$0xff]
        %v2071 = vld [vmem:[%s2 + $0x1c0] sm:$0xff]
        %v2072 = vld [vmem:[%s2 + $0x1c8] sm:$0xff]
        %v2073 = vld [vmem:[%s2 + $0x1d0] sm:$0xff]
        %v2074 = vld [vmem:[%s2 + $0x1d8] sm:$0xff]
        %v2075 = vld [vmem:[%s2 + $0x1e0] sm:$0xff]
        %v2076 = vld [vmem:[%s2 + $0x1e8] sm:$0xff]
        %v2077 = vld [vmem:[%s2 + $0x1f0] sm:$0xff]
        %v2078 = vld [vmem:[%s2 + $0x1f8] sm:$0xff]
        %v2079 = vld [vmem:[%s2 + $0x200] sm:$0xff]
        %v2080 = vld [vmem:[%s2 + $0x208] sm:$0xff]
        %v2081 = vld [vmem:[%s2 + $0x210] sm:$0xff]
        %v2082 = vld [vmem:[%s2 + $0x218] sm:$0xff]
        %v2083 = vld [vmem:[%s2 + $0x220] sm:$0xff]
        %v2084 = vld [vmem:[%s2 + $0x228] sm:$0xff]
        %v2085 = vld [vmem:[%s2 + $0x230] sm:$0xff]
        %v2086 = vld [vmem:[%s2 + $0x238] sm:$0xff]
        %v2088 = vsel %vm1015, %v1847, 0
        %v2091 = vsel %vm1015, %v1848, 0
        %v2094 = vsel %vm1015, %v1849, 0
        %v2097 = vsel %vm1015, %v1850, 0
        %v2100 = vsel %vm1015, %v1851, 0
        %v2103 = vsel %vm1015, %v1852, 0
        %v2106 = vsel %vm1015, %v1853, 0
        %v2109 = vsel %vm1015, %v1854, 0
        %2111 = vmatprep.subr.mxu0 0.0
        %2112 = vmatpush1.msra.mxu0 %v2015
        %2113 = vmatprep.subr.mxu0 0.0
        %2114 = vmatpush1.msra.mxu0 %v2016
        %2115 = vmatprep.subr.mxu0 0.0
        %2116 = vmatpush1.msra.mxu0 %v2017
        %2117 = vmatprep.subr.mxu0 0.0
        %2118 = vmatpush1.msra.mxu0 %v2018
        %2119 = vmatprep.subr.mxu0 0.0
        %2120 = vmatpush1.msra.mxu0 %v2019
        %2121 = vmatprep.subr.mxu0 0.0
        %2122 = vmatpush1.msra.mxu0 %v2020
        %2123 = vmatprep.subr.mxu0 0.0
        %2124 = vmatpush1.msra.mxu0 %v2021
        %2125 = vmatprep.subr.mxu0 0.0
        %2126 = vmatpush1.msra.mxu0 %v2022
        %2127 = vmatprep.subr.mxu0 0.0
        %2128 = vmatpush1.msra.mxu0 %v2023
        %2129 = vmatprep.subr.mxu0 0.0
        %2130 = vmatpush1.msra.mxu0 %v2024
        %2131 = vmatprep.subr.mxu0 0.0
        %2132 = vmatpush1.msra.mxu0 %v2025
        %2133 = vmatprep.subr.mxu0 0.0
        %2134 = vmatpush1.msra.mxu0 %v2026
        %2135 = vmatprep.subr.mxu0 0.0
        %2136 = vmatpush1.msra.mxu0 %v2027
        %2137 = vmatprep.subr.mxu0 0.0
        %2138 = vmatpush1.msra.mxu0 %v2028
        %2139 = vmatprep.subr.mxu0 0.0
        %2140 = vmatpush1.msra.mxu0 %v2029
        %2141 = vmatprep.subr.mxu0 0.0
        %2142 = vmatpush1.msra.mxu0 %v2030
        %2143 = vmatprep.subr.mxu0 0.0
        %2144 = vmatpush1.msra.mxu0 %v2031
        %2145 = vmatprep.subr.mxu0 0.0
        %2146 = vmatpush1.msra.mxu0 %v2032
        %2147 = vmatprep.subr.mxu0 0.0
        %2148 = vmatpush1.msra.mxu0 %v2033
        %2149 = vmatprep.subr.mxu0 0.0
        %2150 = vmatpush1.msra.mxu0 %v2034
        %2151 = vmatprep.subr.mxu0 0.0
        %2152 = vmatpush1.msra.mxu0 %v2035
        %2153 = vmatprep.subr.mxu0 0.0
        %2154 = vmatpush1.msra.mxu0 %v2036
        %2155 = vmatprep.subr.mxu0 0.0
        %2156 = vmatpush1.msra.mxu0 %v2037
        %2157 = vmatprep.subr.mxu0 0.0
        %2158 = vmatpush1.msra.mxu0 %v2038
        %2159 = vmatprep.subr.mxu0 0.0
        %2160 = vmatpush1.msra.mxu0 %v2039
        %2161 = vmatprep.subr.mxu0 0.0
        %2162 = vmatpush1.msra.mxu0 %v2040
        %2163 = vmatprep.subr.mxu0 0.0
        %2164 = vmatpush1.msra.mxu0 %v2041
        %2165 = vmatprep.subr.mxu0 0.0
        %2166 = vmatpush1.msra.mxu0 %v2042
        %2167 = vmatprep.subr.mxu0 0.0
        %2168 = vmatpush1.msra.mxu0 %v2043
        %2169 = vmatprep.subr.mxu0 0.0
        %2170 = vmatpush1.msra.mxu0 %v2044
        %2171 = vmatprep.subr.mxu0 0.0
        %2172 = vmatpush1.msra.mxu0 %v2045
        %2173 = vmatprep.subr.mxu0 0.0
        %2174 = vmatpush1.msra.mxu0 %v2046
        %2175 = vmatprep.mubr.f32.mxu0 %v1991
        %2176 = vmatmul.mubr.f32.gmra.mrb[0].mxu0 %v1983
        %v2177 = vpop.f32.mrb[0].mxu0
        %v2178 = vadd.f32 %v1124, %v2177
        %v2179 = vpop.f32.mrb[0].mxu0
        %2180 = vmatprep.mubr.f32.mxu0 %v1992
        %2181 = vmatmul.mubr.f32.gmra.mrb[0].mxu0 %v1984
        %v2182 = vpop.f32.mrb[0].mxu0
        %v2183 = vadd.f32 %v1124, %v2182
        %v2184 = vpop.f32.mrb[0].mxu0
        %2185 = vmatprep.mubr.f32.mxu0 %v1993
        %2186 = vmatmul.mubr.f32.gmra.mrb[0].mxu0 %v1985
        %v2187 = vpop.f32.mrb[0].mxu0
        %v2188 = vadd.f32 %v1124, %v2187
        %v2189 = vpop.f32.mrb[0].mxu0
        %2190 = vmatprep.mubr.f32.mxu0 %v1994
        %2191 = vmatmul.mubr.f32.gmra.mrb[0].mxu0 %v1986
        %v2192 = vpop.f32.mrb[0].mxu0
        %v2193 = vadd.f32 %v1124, %v2192
        %v2194 = vpop.f32.mrb[0].mxu0
        %2195 = vmatprep.mubr.f32.mxu0 %v1995
        %2196 = vmatmul.mubr.f32.gmra.mrb[0].mxu0 %v1987
        %v2197 = vpop.f32.mrb[0].mxu0
        %v2198 = vadd.f32 %v1124, %v2197
        %v2199 = vpop.f32.mrb[0].mxu0
        %2200 = vmatprep.mubr.f32.mxu0 %v1996
        %2201 = vmatmul.mubr.f32.gmra.mrb[0].mxu0 %v1988
        %v2202 = vpop.f32.mrb[0].mxu0
        %v2203 = vadd.f32 %v1124, %v2202
        %v2204 = vpop.f32.mrb[0].mxu0
        %2205 = vmatprep.mubr.f32.mxu0 %v1997
        %2206 = vmatmul.mubr.f32.gmra.mrb[0].mxu0 %v1989
        %v2207 = vpop.f32.mrb[0].mxu0
        %v2208 = vadd.f32 %v1124, %v2207
        %v2209 = vpop.f32.mrb[0].mxu0
        %2210 = vmatprep.mubr.f32.mxu0 %v1998
        %2211 = vmatmul.mubr.f32.gmra.mrb[0].mxu0 %v1990
        %v2212 = vpop.f32.mrb[0].mxu0
        %v2213 = vadd.f32 %v1124, %v2212
        %v2214 = vpop.f32.mrb[0].mxu0
        %2215 = vdwg.mxu0
        %2216 = vmatprep.subr.mxu0 0.0
        %2217 = vmatpush1.msra.mxu0 %v2047
        %2218 = vmatprep.subr.mxu0 0.0
        %2219 = vmatpush1.msra.mxu0 %v2048
        %2220 = vmatprep.subr.mxu0 0.0
        %2221 = vmatpush1.msra.mxu0 %v2049
        %2222 = vmatprep.subr.mxu0 0.0
        %2223 = vmatpush1.msra.mxu0 %v2050
        %2224 = vmatprep.subr.mxu0 0.0
        %2225 = vmatpush1.msra.mxu0 %v2051
        %2226 = vmatprep.subr.mxu0 0.0
        %2227 = vmatpush1.msra.mxu0 %v2052
        %2228 = vmatprep.subr.mxu0 0.0
        %2229 = vmatpush1.msra.mxu0 %v2053
        %2230 = vmatprep.subr.mxu0 0.0
        %2231 = vmatpush1.msra.mxu0 %v2054
        %2232 = vmatprep.subr.mxu0 0.0
        %2233 = vmatpush1.msra.mxu0 %v2055
        %2234 = vmatprep.subr.mxu0 0.0
        %2235 = vmatpush1.msra.mxu0 %v2056
        %2236 = vmatprep.subr.mxu0 0.0
        %2237 = vmatpush1.msra.mxu0 %v2057
        %2238 = vmatprep.subr.mxu0 0.0
        %2239 = vmatpush1.msra.mxu0 %v2058
        %2240 = vmatprep.subr.mxu0 0.0
        %2241 = vmatpush1.msra.mxu0 %v2059
        %2242 = vmatprep.subr.mxu0 0.0
        %2243 = vmatpush1.msra.mxu0 %v2060
        %2244 = vmatprep.subr.mxu0 0.0
        %2245 = vmatpush1.msra.mxu0 %v2061
        %2246 = vmatprep.subr.mxu0 0.0
        %2247 = vmatpush1.msra.mxu0 %v2062
        %2248 = vmatprep.subr.mxu0 0.0
        %2249 = vmatpush1.msra.mxu0 %v2063
        %2250 = vmatprep.subr.mxu0 0.0
        %2251 = vmatpush1.msra.mxu0 %v2064
        %2252 = vmatprep.subr.mxu0 0.0
        %2253 = vmatpush1.msra.mxu0 %v2065
        %2254 = vmatprep.subr.mxu0 0.0
        %2255 = vmatpush1.msra.mxu0 %v2066
        %2256 = vmatprep.subr.mxu0 0.0
        %2257 = vmatpush1.msra.mxu0 %v2067
        %2258 = vmatprep.subr.mxu0 0.0
        %2259 = vmatpush1.msra.mxu0 %v2068
        %2260 = vmatprep.subr.mxu0 0.0
        %2261 = vmatpush1.msra.mxu0 %v2069
        %2262 = vmatprep.subr.mxu0 0.0
        %2263 = vmatpush1.msra.mxu0 %v2070
        %2264 = vmatprep.subr.mxu0 0.0
        %2265 = vmatpush1.msra.mxu0 %v2071
        %2266 = vmatprep.subr.mxu0 0.0
        %2267 = vmatpush1.msra.mxu0 %v2072
        %2268 = vmatprep.subr.mxu0 0.0
        %2269 = vmatpush1.msra.mxu0 %v2073
        %2270 = vmatprep.subr.mxu0 0.0
        %2271 = vmatpush1.msra.mxu0 %v2074
        %2272 = vmatprep.subr.mxu0 0.0
        %2273 = vmatpush1.msra.mxu0 %v2075
        %2274 = vmatprep.subr.mxu0 0.0
        %2275 = vmatpush1.msra.mxu0 %v2076
        %2276 = vmatprep.subr.mxu0 0.0
        %2277 = vmatpush1.msra.mxu0 %v2077
        %2278 = vmatprep.subr.mxu0 0.0
        %2279 = vmatpush1.msra.mxu0 %v2078
        %2280 = vmatprep.mubr.f32.mxu0 %v2007
        %2281 = vmatmul.mubr.f32.gmra.mrb[0].mxu0 %v1999
        %v2282 = vpop.f32.mrb[0].mxu0
        %v2283 = vadd.f32 %v2178, %v2282
        %v2284 = vpop.f32.mrb[0].mxu0
        %2285 = vmatprep.mubr.f32.mxu0 %v2008
        %2286 = vmatmul.mubr.f32.gmra.mrb[0].mxu0 %v2000
        %v2287 = vpop.f32.mrb[0].mxu0
        %v2288 = vadd.f32 %v2183, %v2287
        %v2289 = vpop.f32.mrb[0].mxu0
        %2290 = vmatprep.mubr.f32.mxu0 %v2009
        %2291 = vmatmul.mubr.f32.gmra.mrb[0].mxu0 %v2001
        %v2292 = vpop.f32.mrb[0].mxu0
        %v2293 = vadd.f32 %v2188, %v2292
        %v2294 = vpop.f32.mrb[0].mxu0
        %2295 = vmatprep.mubr.f32.mxu0 %v2010
        %2296 = vmatmul.mubr.f32.gmra.mrb[0].mxu0 %v2002
        %v2297 = vpop.f32.mrb[0].mxu0
        %v2298 = vadd.f32 %v2193, %v2297
        %v2299 = vpop.f32.mrb[0].mxu0
        %2300 = vmatprep.mubr.f32.mxu0 %v2011
        %2301 = vmatmul.mubr.f32.gmra.mrb[0].mxu0 %v2003
        %v2302 = vpop.f32.mrb[0].mxu0
        %v2303 = vadd.f32 %v2198, %v2302
        %v2304 = vpop.f32.mrb[0].mxu0
        %2305 = vmatprep.mubr.f32.mxu0 %v2012
        %2306 = vmatmul.mubr.f32.gmra.mrb[0].mxu0 %v2004
        %v2307 = vpop.f32.mrb[0].mxu0
        %v2308 = vadd.f32 %v2203, %v2307
        %v2309 = vpop.f32.mrb[0].mxu0
        %2310 = vmatprep.mubr.f32.mxu0 %v2013
        %2311 = vmatmul.mubr.f32.gmra.mrb[0].mxu0 %v2005
        %v2312 = vpop.f32.mrb[0].mxu0
        %v2313 = vadd.f32 %v2208, %v2312
        %v2314 = vpop.f32.mrb[0].mxu0
        %2315 = vmatprep.mubr.f32.mxu0 %v2014
        %2316 = vmatmul.mubr.f32.gmra.mrb[0].mxu0 %v2006
        %v2317 = vpop.f32.mrb[0].mxu0
        %v2318 = vadd.f32 %v2213, %v2317
        %v2319 = vpop.f32.mrb[0].mxu0
        %2320 = vdwg.mxu0
        %2321 = vmatprep.subr.mxu0 0.0
        %2322 = vmatpush1.msra.mxu0 %v2079
        %2323 = vmatprep.subr.mxu0 0.0
        %2324 = vmatpush1.msra.mxu0 %v2080
        %2325 = vmatprep.subr.mxu0 0.0
        %2326 = vmatpush1.msra.mxu0 %v2081
        %2327 = vmatprep.subr.mxu0 0.0
        %2328 = vmatpush1.msra.mxu0 %v2082
        %2329 = vmatprep.subr.mxu0 0.0
        %2330 = vmatpush1.msra.mxu0 %v2083
        %2331 = vmatprep.subr.mxu0 0.0
        %2332 = vmatpush1.msra.mxu0 %v2084
        %2333 = vmatprep.subr.mxu0 0.0
        %2334 = vmatpush1.msra.mxu0 %v2085
        %2335 = vmatprep.subr.mxu0 0.0
        %2336 = vmatpush1.msra.mxu0 %v2086
        %2337 = vmatprep.subr.mxu0 0.0
        %2338 = vmatpush1.msra.mxu0 0.0
        %2339 = vmatprep.subr.mxu0 0.0
        %2340 = vmatpush1.msra.mxu0 0.0
        %2341 = vmatprep.subr.mxu0 0.0
        %2342 = vmatpush1.msra.mxu0 0.0
        %2343 = vmatprep.subr.mxu0 0.0
        %2344 = vmatpush1.msra.mxu0 0.0
        %2345 = vmatprep.subr.mxu0 0.0
        %2346 = vmatpush1.msra.mxu0 0.0
        %2347 = vmatprep.subr.mxu0 0.0
        %2348 = vmatpush1.msra.mxu0 0.0
        %2349 = vmatprep.subr.mxu0 0.0
        %2350 = vmatpush1.msra.mxu0 0.0
        %2351 = vmatprep.subr.mxu0 0.0
        %2352 = vmatpush1.msra.mxu0 0.0
        %2353 = vmatprep.subr.mxu0 0.0
        %2354 = vmatpush1.msra.mxu0 0.0
        %2355 = vmatprep.subr.mxu0 0.0
        %2356 = vmatpush1.msra.mxu0 0.0
        %2357 = vmatprep.subr.mxu0 0.0
        %2358 = vmatpush1.msra.mxu0 0.0
        %2359 = vmatprep.subr.mxu0 0.0
        %2360 = vmatpush1.msra.mxu0 0.0
        %2361 = vmatprep.subr.mxu0 0.0
        %2362 = vmatpush1.msra.mxu0 0.0
        %2363 = vmatprep.subr.mxu0 0.0
        %2364 = vmatpush1.msra.mxu0 0.0
        %2365 = vmatprep.subr.mxu0 0.0
        %2366 = vmatpush1.msra.mxu0 0.0
        %2367 = vmatprep.subr.mxu0 0.0
        %2368 = vmatpush1.msra.mxu0 0.0
        %2369 = vmatprep.subr.mxu0 0.0
        %2370 = vmatpush1.msra.mxu0 0.0
        %2371 = vmatprep.subr.mxu0 0.0
        %2372 = vmatpush1.msra.mxu0 0.0
        %2373 = vmatprep.subr.mxu0 0.0
        %2374 = vmatpush1.msra.mxu0 0.0
        %2375 = vmatprep.subr.mxu0 0.0
        %2376 = vmatpush1.msra.mxu0 0.0
        %2377 = vmatprep.subr.mxu0 0.0
        %2378 = vmatpush1.msra.mxu0 0.0
        %2379 = vmatprep.subr.mxu0 0.0
        %2380 = vmatpush1.msra.mxu0 0.0
        %2381 = vmatprep.subr.mxu0 0.0
        %2382 = vmatpush1.msra.mxu0 0.0
        %2383 = vmatprep.subr.mxu0 0.0
        %2384 = vmatpush1.msra.mxu0 0.0
        %2385 = vmatprep.mubr.f32.mxu0 0.0
        %2386 = vmatmul.mubr.f32.gmra.mrb[0].mxu0 %v2088
        %v2387 = vpop.f32.mrb[0].mxu0
        %v2388 = vadd.f32 %v2283, %v2387
        %v2389 = vpop.f32.mrb[0].mxu0
        %2390 = vmatprep.mubr.f32.mxu0 0.0
        %2391 = vmatmul.mubr.f32.gmra.mrb[0].mxu0 %v2091
        %v2392 = vpop.f32.mrb[0].mxu0
        %v2393 = vadd.f32 %v2288, %v2392
        %v2394 = vpop.f32.mrb[0].mxu0
        %2395 = vmatprep.mubr.f32.mxu0 0.0
        %2396 = vmatmul.mubr.f32.gmra.mrb[0].mxu0 %v2094
        %v2397 = vpop.f32.mrb[0].mxu0
        %v2398 = vadd.f32 %v2293, %v2397
        %v2399 = vpop.f32.mrb[0].mxu0
        %2400 = vmatprep.mubr.f32.mxu0 0.0
        %2401 = vmatmul.mubr.f32.gmra.mrb[0].mxu0 %v2097
        %v2402 = vpop.f32.mrb[0].mxu0
        %v2403 = vadd.f32 %v2298, %v2402
        %v2404 = vpop.f32.mrb[0].mxu0
        %2405 = vmatprep.mubr.f32.mxu0 0.0
        %2406 = vmatmul.mubr.f32.gmra.mrb[0].mxu0 %v2100
        %v2407 = vpop.f32.mrb[0].mxu0
        %v2408 = vadd.f32 %v2303, %v2407
        %v2409 = vpop.f32.mrb[0].mxu0
        %2410 = vmatprep.mubr.f32.mxu0 0.0
        %2411 = vmatmul.mubr.f32.gmra.mrb[0].mxu0 %v2103
        %v2412 = vpop.f32.mrb[0].mxu0
        %v2413 = vadd.f32 %v2308, %v2412
        %v2414 = vpop.f32.mrb[0].mxu0
        %2415 = vmatprep.mubr.f32.mxu0 0.0
        %2416 = vmatmul.mubr.f32.gmra.mrb[0].mxu0 %v2106
        %v2417 = vpop.f32.mrb[0].mxu0
        %v2418 = vadd.f32 %v2313, %v2417
        %v2419 = vpop.f32.mrb[0].mxu0
        %2420 = vmatprep.mubr.f32.mxu0 0.0
        %2421 = vmatmul.mubr.f32.gmra.mrb[0].mxu0 %v2109
        %v2422 = vpop.f32.mrb[0].mxu0
        %v2423 = vadd.f32 %v2318, %v2422
        %v2424 = vpop.f32.mrb[0].mxu0
        %2425 = vdwg.mxu0
        %v2426 = vmul.f32 %v2388, 0.5
        %v2427 = vmul.f32 %v2393, 0.5
        %v2428 = vmul.f32 %v2398, 0.5
        %v2429 = vmul.f32 %v2403, 0.5
        %v2430 = vmul.f32 %v2408, 0.5
        %v2431 = vmul.f32 %v2413, 0.5
        %v2432 = vmul.f32 %v2418, 0.5
        %v2433 = vmul.f32 %v2423, 0.5
        %v2434 = vsel %vm1467, %v2426, %v2388
        %v2435 = vsel %vm1467, %v2427, %v2393
        %v2436 = vsel %vm1467, %v2428, %v2398
        %v2437 = vsel %vm1467, %v2429, %v2403
        %v2438 = vsel %vm1467, %v2430, %v2408
        %v2439 = vsel %vm1467, %v2431, %v2413
        %v2440 = vsel %vm1467, %v2432, %v2418
        %v2441 = vsel %vm1467, %v2433, %v2423
        %v2442 = vtanh.pop %v2434
        %v2443 = vtanh.pop %v2435
        %v2444 = vtanh.pop %v2436
        %v2445 = vtanh.pop %v2437
        %v2446 = vtanh.pop %v2438
        %v2447 = vtanh.pop %v2439
        %v2448 = vtanh.pop %v2440
        %v2449 = vtanh.pop %v2441
        %v2450 = vadd.f32 %v2442, 1.0
        %v2451 = vadd.f32 %v2443, 1.0
        %v2452 = vadd.f32 %v2444, 1.0
        %v2453 = vadd.f32 %v2445, 1.0
        %v2454 = vadd.f32 %v2446, 1.0
        %v2455 = vadd.f32 %v2447, 1.0
        %v2456 = vadd.f32 %v2448, 1.0
        %v2457 = vadd.f32 %v2449, 1.0
        %v2458 = vmul.f32 %v2450, 0.5
        %v2459 = vmul.f32 %v2451, 0.5
        %v2460 = vmul.f32 %v2452, 0.5
        %v2461 = vmul.f32 %v2453, 0.5
        %v2462 = vmul.f32 %v2454, 0.5
        %v2463 = vmul.f32 %v2455, 0.5
        %v2464 = vmul.f32 %v2456, 0.5
        %v2465 = vmul.f32 %v2457, 0.5
        %v2466 = vsel %vm1467, %v2458, %v2442
        %v2467 = vsel %vm1467, %v2459, %v2443
        %v2468 = vsel %vm1467, %v2460, %v2444
        %v2469 = vsel %vm1467, %v2461, %v2445
        %v2470 = vsel %vm1467, %v2462, %v2446
        %v2471 = vsel %vm1467, %v2463, %v2447
        %v2472 = vsel %vm1467, %v2464, %v2448
        %v2473 = vsel %vm1467, %v2465, %v2449
        %s2474 = smul.u32 4, 16
        %s2475 = scalar_lea.vmem [#allocation4], %s2474
        %v2476 = vld [vmem:[%s2475] sm:$0xff]
        %v2477 = vld [vmem:[%s2475 + $0x8] sm:$0xff]
        %v2478 = vld [vmem:[%s2475 + $0x10] sm:$0xff]
        %v2479 = vld [vmem:[%s2475 + $0x18] sm:$0xff]
        %v2480 = vld [vmem:[%s2475 + $0x20] sm:$0xff]
        %v2481 = vld [vmem:[%s2475 + $0x28] sm:$0xff]
        %v2482 = vld [vmem:[%s2475 + $0x30] sm:$0xff]
        %v2483 = vld [vmem:[%s2475 + $0x38] sm:$0xff]
        %2492 = vrot.lane.b32.xlu0 %v2476, 32
        %v2493 = vpop.permute.xlu0 %2492
        %2494 = vrot.lane.b32.xlu0 %v2477, 32
        %v2495 = vpop.permute.xlu0 %2494
        %2496 = vrot.lane.b32.xlu0 %v2478, 32
        %v2497 = vpop.permute.xlu0 %2496
        %2498 = vrot.lane.b32.xlu0 %v2479, 32
        %v2499 = vpop.permute.xlu0 %2498
        %2500 = vrot.lane.b32.xlu0 %v2480, 32
        %v2501 = vpop.permute.xlu0 %2500
        %2502 = vrot.lane.b32.xlu0 %v2481, 32
        %v2503 = vpop.permute.xlu0 %2502
        %2504 = vrot.lane.b32.xlu0 %v2482, 32
        %v2505 = vpop.permute.xlu0 %2504
        %2506 = vrot.lane.b32.xlu0 %v2483, 32
        %v2507 = vpop.permute.xlu0 %2506
        %v2516 = vmul.f32 %v2466, %v2493
        %v2517 = vmul.f32 %v2467, %v2495
        %v2518 = vmul.f32 %v2468, %v2497
        %v2519 = vmul.f32 %v2469, %v2499
        %v2520 = vmul.f32 %v2470, %v2501
        %v2521 = vmul.f32 %v2471, %v2503
        %v2522 = vmul.f32 %v2472, %v2505
        %v2523 = vmul.f32 %v2473, %v2507
        %2532 = vrot.lane.b32.xlu0 %v2466, 32
        %v2533 = vpop.permute.xlu0 %2532
        %2534 = vrot.lane.b32.xlu0 %v2467, 32
        %v2535 = vpop.permute.xlu0 %2534
        %2536 = vrot.lane.b32.xlu0 %v2468, 32
        %v2537 = vpop.permute.xlu0 %2536
        %2538 = vrot.lane.b32.xlu0 %v2469, 32
        %v2539 = vpop.permute.xlu0 %2538
        %2540 = vrot.lane.b32.xlu0 %v2470, 32
        %v2541 = vpop.permute.xlu0 %2540
        %2542 = vrot.lane.b32.xlu0 %v2471, 32
        %v2543 = vpop.permute.xlu0 %2542
        %2544 = vrot.lane.b32.xlu0 %v2472, 32
        %v2545 = vpop.permute.xlu0 %2544
        %2546 = vrot.lane.b32.xlu0 %v2473, 32
        %v2547 = vpop.permute.xlu0 %2546
        %v2556 = vmul.f32 %v2466, %v2533
        %v2557 = vmul.f32 %v2467, %v2535
        %v2558 = vmul.f32 %v2468, %v2537
        %v2559 = vmul.f32 %v2469, %v2539
        %v2560 = vmul.f32 %v2470, %v2541
        %v2561 = vmul.f32 %v2471, %v2543
        %v2562 = vmul.f32 %v2472, %v2545
        %v2563 = vmul.f32 %v2473, %v2547
        %2572 = vrot.lane.b32.xlu0 %v2556, 32
        %v2573 = vpop.permute.xlu0 %2572
        %2574 = vrot.lane.b32.xlu0 %v2557, 32
        %v2575 = vpop.permute.xlu0 %2574
        %2576 = vrot.lane.b32.xlu0 %v2558, 32
        %v2577 = vpop.permute.xlu0 %2576
        %2578 = vrot.lane.b32.xlu0 %v2559, 32
        %v2579 = vpop.permute.xlu0 %2578
        %2580 = vrot.lane.b32.xlu0 %v2560, 32
        %v2581 = vpop.permute.xlu0 %2580
        %2582 = vrot.lane.b32.xlu0 %v2561, 32
        %v2583 = vpop.permute.xlu0 %2582
        %2584 = vrot.lane.b32.xlu0 %v2562, 32
        %v2585 = vpop.permute.xlu0 %2584
        %2586 = vrot.lane.b32.xlu0 %v2563, 32
        %v2587 = vpop.permute.xlu0 %2586
        %v2596 = vadd.f32 %v2516, %v2573
        %v2597 = vadd.f32 %v2517, %v2575
        %v2598 = vadd.f32 %v2518, %v2577
        %v2599 = vadd.f32 %v2519, %v2579
        %v2600 = vadd.f32 %v2520, %v2581
        %v2601 = vadd.f32 %v2521, %v2583
        %v2602 = vadd.f32 %v2522, %v2585
        %v2603 = vadd.f32 %v2523, %v2587
        %v2604 = vtanh.pop %v2596
        %v2605 = vtanh.pop %v2597
        %v2606 = vtanh.pop %v2598
        %v2607 = vtanh.pop %v2599
        %v2608 = vtanh.pop %v2600
        %v2609 = vtanh.pop %v2601
        %v2610 = vtanh.pop %v2602
        %v2611 = vtanh.pop %v2603
        %2620 = vrot.lane.b32.xlu0 %v2604, 32
        %v2621 = vpop.permute.xlu0 %2620
        %2622 = vrot.lane.b32.xlu0 %v2605, 32
        %v2623 = vpop.permute.xlu0 %2622
        %2624 = vrot.lane.b32.xlu0 %v2606, 32
        %v2625 = vpop.permute.xlu0 %2624
        %2626 = vrot.lane.b32.xlu0 %v2607, 32
        %v2627 = vpop.permute.xlu0 %2626
        %2628 = vrot.lane.b32.xlu0 %v2608, 32
        %v2629 = vpop.permute.xlu0 %2628
        %2630 = vrot.lane.b32.xlu0 %v2609, 32
        %v2631 = vpop.permute.xlu0 %2630
        %2632 = vrot.lane.b32.xlu0 %v2610, 32
        %v2633 = vpop.permute.xlu0 %2632
        %2634 = vrot.lane.b32.xlu0 %v2611, 32
        %v2635 = vpop.permute.xlu0 %2634
        %v2644 = vmul.f32 %v2466, %v2621
        %v2645 = vmul.f32 %v2467, %v2623
        %v2646 = vmul.f32 %v2468, %v2625
        %v2647 = vmul.f32 %v2469, %v2627
        %v2648 = vmul.f32 %v2470, %v2629
        %v2649 = vmul.f32 %v2471, %v2631
        %v2650 = vmul.f32 %v2472, %v2633
        %v2651 = vmul.f32 %v2473, %v2635
        %2660 = vrot.lane.b32.xlu0 %v2596, 96
        %v2661 = vpop.permute.xlu0 %2660
        %2662 = vrot.lane.b32.xlu0 %v2597, 96
        %v2663 = vpop.permute.xlu0 %2662
        %2664 = vrot.lane.b32.xlu0 %v2598, 96
        %v2665 = vpop.permute.xlu0 %2664
        %2666 = vrot.lane.b32.xlu0 %v2599, 96
        %v2667 = vpop.permute.xlu0 %2666
        %2668 = vrot.lane.b32.xlu0 %v2600, 96
        %v2669 = vpop.permute.xlu0 %2668
        %2670 = vrot.lane.b32.xlu0 %v2601, 96
        %v2671 = vpop.permute.xlu0 %2670
        %2672 = vrot.lane.b32.xlu0 %v2602, 96
        %v2673 = vpop.permute.xlu0 %2672
        %2674 = vrot.lane.b32.xlu0 %v2603, 96
        %v2675 = vpop.permute.xlu0 %2674
        %2684 = vst.msk [vmem:[%s2475] sm:$0xff] %vm580, %v2661
        %2685 = vst.msk [vmem:[%s2475 + $0x8] sm:$0xff] %vm580, %v2663
        %2686 = vst.msk [vmem:[%s2475 + $0x10] sm:$0xff] %vm580, %v2665
        %2687 = vst.msk [vmem:[%s2475 + $0x18] sm:$0xff] %vm580, %v2667
        %2688 = vst.msk [vmem:[%s2475 + $0x20] sm:$0xff] %vm580, %v2669
        %2689 = vst.msk [vmem:[%s2475 + $0x28] sm:$0xff] %vm580, %v2671
        %2690 = vst.msk [vmem:[%s2475 + $0x30] sm:$0xff] %vm580, %v2673
        %2691 = vst.msk [vmem:[%s2475 + $0x38] sm:$0xff] %vm580, %v2675
        %2700 = vrot.lane.b32.xlu0 %v2644, 64
        %v2701 = vpop.permute.xlu0 %2700
        %2702 = vrot.lane.b32.xlu0 %v2645, 64
        %v2703 = vpop.permute.xlu0 %2702
        %2704 = vrot.lane.b32.xlu0 %v2646, 64
        %v2705 = vpop.permute.xlu0 %2704
        %2706 = vrot.lane.b32.xlu0 %v2647, 64
        %v2707 = vpop.permute.xlu0 %2706
        %2708 = vrot.lane.b32.xlu0 %v2648, 64
        %v2709 = vpop.permute.xlu0 %2708
        %2710 = vrot.lane.b32.xlu0 %v2649, 64
        %v2711 = vpop.permute.xlu0 %2710
        %2712 = vrot.lane.b32.xlu0 %v2650, 64
        %v2713 = vpop.permute.xlu0 %2712
        %2714 = vrot.lane.b32.xlu0 %v2651, 64
        %v2715 = vpop.permute.xlu0 %2714
        %s2724 = scalar_lea.vmem [#allocation3], %s2474
        %2725 = vst.msk [vmem:[%s2724] sm:$0xff] %vm580, %v2701
        %2726 = vst.msk [vmem:[%s2724 + $0x8] sm:$0xff] %vm580, %v2703
        %2727 = vst.msk [vmem:[%s2724 + $0x10] sm:$0xff] %vm580, %v2705
        %2728 = vst.msk [vmem:[%s2724 + $0x18] sm:$0xff] %vm580, %v2707
        %2729 = vst.msk [vmem:[%s2724 + $0x20] sm:$0xff] %vm580, %v2709
        %2730 = vst.msk [vmem:[%s2724 + $0x28] sm:$0xff] %vm580, %v2711
        %2731 = vst.msk [vmem:[%s2724 + $0x30] sm:$0xff] %vm580, %v2713
        %2732 = vst.msk [vmem:[%s2724 + $0x38] sm:$0xff] %vm580, %v2715
        %s2733 = smul.u32 8, 24
        %s2734 = scalar_lea.vmem [#allocation2], %s2733
        %v2735 = vld [vmem:[%s2734] sm:$0xff]
        %v2736 = vld [vmem:[%s2734 + $0x8] sm:$0xff]
        %v2737 = vld [vmem:[%s2734 + $0x18] sm:$0xff]
        %v2738 = vld [vmem:[%s2734 + $0x20] sm:$0xff]
        %v2739 = vld [vmem:[%s2734 + $0x30] sm:$0xff]
        %v2740 = vld [vmem:[%s2734 + $0x38] sm:$0xff]
        %v2741 = vld [vmem:[%s2734 + $0x48] sm:$0xff]
        %v2742 = vld [vmem:[%s2734 + $0x50] sm:$0xff]
        %v2743 = vld [vmem:[%s2734 + $0x1] sm:$0xff]
        %v2744 = vld [vmem:[%s2734 + $0x9] sm:$0xff]
        %v2745 = vld [vmem:[%s2734 + $0x19] sm:$0xff]
        %v2746 = vld [vmem:[%s2734 + $0x21] sm:$0xff]
        %v2747 = vld [vmem:[%s2734 + $0x31] sm:$0xff]
        %v2748 = vld [vmem:[%s2734 + $0x39] sm:$0xff]
        %v2749 = vld [vmem:[%s2734 + $0x49] sm:$0xff]
        %v2750 = vld [vmem:[%s2734 + $0x51] sm:$0xff]
        %v2751 = vld [vmem:[%s2734 + $0x2] sm:$0xff]
        %v2752 = vld [vmem:[%s2734 + $0xa] sm:$0xff]
        %v2753 = vld [vmem:[%s2734 + $0x1a] sm:$0xff]
        %v2754 = vld [vmem:[%s2734 + $0x22] sm:$0xff]
        %v2755 = vld [vmem:[%s2734 + $0x32] sm:$0xff]
        %v2756 = vld [vmem:[%s2734 + $0x3a] sm:$0xff]
        %v2757 = vld [vmem:[%s2734 + $0x4a] sm:$0xff]
        %v2758 = vld [vmem:[%s2734 + $0x52] sm:$0xff]
        %s2759 = sadd.s32 8, 1
        %s2760 = smul.u32 %s2759, 24
        %s2761 = scalar_lea.vmem [#allocation2], %s2760
        %v2762 = vld [vmem:[%s2761] sm:$0xff]
        %v2763 = vld [vmem:[%s2761 + $0x8] sm:$0xff]
        %v2764 = vld [vmem:[%s2761 + $0x18] sm:$0xff]
        %v2765 = vld [vmem:[%s2761 + $0x20] sm:$0xff]
        %v2766 = vld [vmem:[%s2761 + $0x30] sm:$0xff]
        %v2767 = vld [vmem:[%s2761 + $0x38] sm:$0xff]
        %v2768 = vld [vmem:[%s2761 + $0x48] sm:$0xff]
        %v2769 = vld [vmem:[%s2761 + $0x50] sm:$0xff]
        %v2770 = vld [vmem:[%s2761 + $0x1] sm:$0xff]
        %v2771 = vld [vmem:[%s2761 + $0x9] sm:$0xff]
        %v2772 = vld [vmem:[%s2761 + $0x19] sm:$0xff]
        %v2773 = vld [vmem:[%s2761 + $0x21] sm:$0xff]
        %v2774 = vld [vmem:[%s2761 + $0x31] sm:$0xff]
        %v2775 = vld [vmem:[%s2761 + $0x39] sm:$0xff]
        %v2776 = vld [vmem:[%s2761 + $0x49] sm:$0xff]
        %v2777 = vld [vmem:[%s2761 + $0x51] sm:$0xff]
        %v2778 = vld [vmem:[%s2761 + $0x2] sm:$0xff]
        %v2779 = vld [vmem:[%s2761 + $0xa] sm:$0xff]
        %v2780 = vld [vmem:[%s2761 + $0x1a] sm:$0xff]
        %v2781 = vld [vmem:[%s2761 + $0x22] sm:$0xff]
        %v2782 = vld [vmem:[%s2761 + $0x32] sm:$0xff]
        %v2783 = vld [vmem:[%s2761 + $0x3a] sm:$0xff]
        %v2784 = vld [vmem:[%s2761 + $0x4a] sm:$0xff]
        %v2785 = vld [vmem:[%s2761 + $0x52] sm:$0xff]
        %s2786 = sadd.s32 8, 2
        %s2787 = smul.u32 %s2786, 24
        %s2788 = scalar_lea.vmem [#allocation2], %s2787
        %v2789 = vld [vmem:[%s2788] sm:$0xff]
        %v2790 = vld [vmem:[%s2788 + $0x8] sm:$0xff]
        %v2791 = vld [vmem:[%s2788 + $0x18] sm:$0xff]
        %v2792 = vld [vmem:[%s2788 + $0x20] sm:$0xff]
        %v2793 = vld [vmem:[%s2788 + $0x30] sm:$0xff]
        %v2794 = vld [vmem:[%s2788 + $0x38] sm:$0xff]
        %v2795 = vld [vmem:[%s2788 + $0x48] sm:$0xff]
        %v2796 = vld [vmem:[%s2788 + $0x50] sm:$0xff]
        %v2797 = vld [vmem:[%s2788 + $0x1] sm:$0xff]
        %v2798 = vld [vmem:[%s2788 + $0x9] sm:$0xff]
        %v2799 = vld [vmem:[%s2788 + $0x19] sm:$0xff]
        %v2800 = vld [vmem:[%s2788 + $0x21] sm:$0xff]
        %v2801 = vld [vmem:[%s2788 + $0x31] sm:$0xff]
        %v2802 = vld [vmem:[%s2788 + $0x39] sm:$0xff]
        %v2803 = vld [vmem:[%s2788 + $0x49] sm:$0xff]
        %v2804 = vld [vmem:[%s2788 + $0x51] sm:$0xff]
        %v2805 = vld [vmem:[%s2788 + $0x2] sm:$0xff]
        %v2806 = vld [vmem:[%s2788 + $0xa] sm:$0xff]
        %v2807 = vld [vmem:[%s2788 + $0x1a] sm:$0xff]
        %v2808 = vld [vmem:[%s2788 + $0x22] sm:$0xff]
        %v2809 = vld [vmem:[%s2788 + $0x32] sm:$0xff]
        %v2810 = vld [vmem:[%s2788 + $0x3a] sm:$0xff]
        %v2811 = vld [vmem:[%s2788 + $0x4a] sm:$0xff]
        %v2812 = vld [vmem:[%s2788 + $0x52] sm:$0xff]
        %2821 = vrot.lane.b32.xlu0 %v2743, 64
        %v2822 = vpop.permute.xlu0 %2821
        %2823 = vrot.lane.b32.xlu0 %v2744, 64
        %v2824 = vpop.permute.xlu0 %2823
        %2825 = vrot.lane.b32.xlu0 %v2745, 64
        %v2826 = vpop.permute.xlu0 %2825
        %2827 = vrot.lane.b32.xlu0 %v2746, 64
        %v2828 = vpop.permute.xlu0 %2827
        %2829 = vrot.lane.b32.xlu0 %v2747, 64
        %v2830 = vpop.permute.xlu0 %2829
        %2831 = vrot.lane.b32.xlu0 %v2748, 64
        %v2832 = vpop.permute.xlu0 %2831
        %2833 = vrot.lane.b32.xlu0 %v2749, 64
        %v2834 = vpop.permute.xlu0 %2833
        %2835 = vrot.lane.b32.xlu0 %v2750, 64
        %v2836 = vpop.permute.xlu0 %2835
        %2853 = vrot.lane.b32.xlu0 %v2762, 64
        %v2854 = vpop.permute.xlu0 %2853
        %2855 = vrot.lane.b32.xlu0 %v2763, 64
        %v2856 = vpop.permute.xlu0 %2855
        %2857 = vrot.lane.b32.xlu0 %v2764, 64
        %v2858 = vpop.permute.xlu0 %2857
        %2859 = vrot.lane.b32.xlu0 %v2765, 64
        %v2860 = vpop.permute.xlu0 %2859
        %2861 = vrot.lane.b32.xlu0 %v2766, 64
        %v2862 = vpop.permute.xlu0 %2861
        %2863 = vrot.lane.b32.xlu0 %v2767, 64
        %v2864 = vpop.permute.xlu0 %2863
        %2865 = vrot.lane.b32.xlu0 %v2768, 64
        %v2866 = vpop.permute.xlu0 %2865
        %2867 = vrot.lane.b32.xlu0 %v2769, 64
        %v2868 = vpop.permute.xlu0 %2867
        %2885 = vrot.lane.b32.xlu0 %v2778, 64
        %v2886 = vpop.permute.xlu0 %2885
        %2887 = vrot.lane.b32.xlu0 %v2779, 64
        %v2888 = vpop.permute.xlu0 %2887
        %2889 = vrot.lane.b32.xlu0 %v2780, 64
        %v2890 = vpop.permute.xlu0 %2889
        %2891 = vrot.lane.b32.xlu0 %v2781, 64
        %v2892 = vpop.permute.xlu0 %2891
        %2893 = vrot.lane.b32.xlu0 %v2782, 64
        %v2894 = vpop.permute.xlu0 %2893
        %2895 = vrot.lane.b32.xlu0 %v2783, 64
        %v2896 = vpop.permute.xlu0 %2895
        %2897 = vrot.lane.b32.xlu0 %v2784, 64
        %v2898 = vpop.permute.xlu0 %2897
        %2899 = vrot.lane.b32.xlu0 %v2785, 64
        %v2900 = vpop.permute.xlu0 %2899
        %2917 = vrot.lane.b32.xlu0 %v2797, 64
        %v2918 = vpop.permute.xlu0 %2917
        %2919 = vrot.lane.b32.xlu0 %v2798, 64
        %v2920 = vpop.permute.xlu0 %2919
        %2921 = vrot.lane.b32.xlu0 %v2799, 64
        %v2922 = vpop.permute.xlu0 %2921
        %2923 = vrot.lane.b32.xlu0 %v2800, 64
        %v2924 = vpop.permute.xlu0 %2923
        %2925 = vrot.lane.b32.xlu0 %v2801, 64
        %v2926 = vpop.permute.xlu0 %2925
        %2927 = vrot.lane.b32.xlu0 %v2802, 64
        %v2928 = vpop.permute.xlu0 %2927
        %2929 = vrot.lane.b32.xlu0 %v2803, 64
        %v2930 = vpop.permute.xlu0 %2929
        %2931 = vrot.lane.b32.xlu0 %v2804, 64
        %v2932 = vpop.permute.xlu0 %2931
        %v2941 = vsel %vm1015, %v2735, %v2822
        %v2942 = vsel %vm1015, %v2736, %v2824
        %v2943 = vsel %vm1015, %v2737, %v2826
        %v2944 = vsel %vm1015, %v2738, %v2828
        %v2945 = vsel %vm1015, %v2739, %v2830
        %v2946 = vsel %vm1015, %v2740, %v2832
        %v2947 = vsel %vm1015, %v2741, %v2834
        %v2948 = vsel %vm1015, %v2742, %v2836
        %v2949 = vsel %vm1015, %v2751, %v2854
        %v2950 = vsel %vm1015, %v2752, %v2856
        %v2951 = vsel %vm1015, %v2753, %v2858
        %v2952 = vsel %vm1015, %v2754, %v2860
        %v2953 = vsel %vm1015, %v2755, %v2862
        %v2954 = vsel %vm1015, %v2756, %v2864
        %v2955 = vsel %vm1015, %v2757, %v2866
        %v2956 = vsel %vm1015, %v2758, %v2868
        %v2957 = vsel %vm1015, %v2770, %v2886
        %v2958 = vsel %vm1015, %v2771, %v2888
        %v2959 = vsel %vm1015, %v2772, %v2890
        %v2960 = vsel %vm1015, %v2773, %v2892
        %v2961 = vsel %vm1015, %v2774, %v2894
        %v2962 = vsel %vm1015, %v2775, %v2896
        %v2963 = vsel %vm1015, %v2776, %v2898
        %v2964 = vsel %vm1015, %v2777, %v2900
        %v2965 = vsel %vm1015, %v2789, %v2918
        %v2966 = vsel %vm1015, %v2790, %v2920
        %v2967 = vsel %vm1015, %v2791, %v2922
        %v2968 = vsel %vm1015, %v2792, %v2924
        %v2969 = vsel %vm1015, %v2793, %v2926
        %v2970 = vsel %vm1015, %v2794, %v2928
        %v2971 = vsel %vm1015, %v2795, %v2930
        %v2972 = vsel %vm1015, %v2796, %v2932
        %v2973 = vld [vmem:[%s2] sm:$0xff]
        %v2974 = vld [vmem:[%s2 + $0x8] sm:$0xff]
        %v2975 = vld [vmem:[%s2 + $0x10] sm:$0xff]
        %v2976 = vld [vmem:[%s2 + $0x18] sm:$0xff]
        %v2977 = vld [vmem:[%s2 + $0x20] sm:$0xff]
        %v2978 = vld [vmem:[%s2 + $0x28] sm:$0xff]
        %v2979 = vld [vmem:[%s2 + $0x30] sm:$0xff]
        %v2980 = vld [vmem:[%s2 + $0x38] sm:$0xff]
        %v2981 = vld [vmem:[%s2 + $0x40] sm:$0xff]
        %v2982 = vld [vmem:[%s2 + $0x48] sm:$0xff]
        %v2983 = vld [vmem:[%s2 + $0x50] sm:$0xff]
        %v2984 = vld [vmem:[%s2 + $0x58] sm:$0xff]
        %v2985 = vld [vmem:[%s2 + $0x60] sm:$0xff]
        %v2986 = vld [vmem:[%s2 + $0x68] sm:$0xff]
        %v2987 = vld [vmem:[%s2 + $0x70] sm:$0xff]
        %v2988 = vld [vmem:[%s2 + $0x78] sm:$0xff]
        %v2989 = vld [vmem:[%s2 + $0x80] sm:$0xff]
        %v2990 = vld [vmem:[%s2 + $0x88] sm:$0xff]
        %v2991 = vld [vmem:[%s2 + $0x90] sm:$0xff]
        %v2992 = vld [vmem:[%s2 + $0x98] sm:$0xff]
        %v2993 = vld [vmem:[%s2 + $0xa0] sm:$0xff]
        %v2994 = vld [vmem:[%s2 + $0xa8] sm:$0xff]
        %v2995 = vld [vmem:[%s2 + $0xb0] sm:$0xff]
        %v2996 = vld [vmem:[%s2 + $0xb8] sm:$0xff]
        %v2997 = vld [vmem:[%s2 + $0xc0] sm:$0xff]
        %v2998 = vld [vmem:[%s2 + $0xc8] sm:$0xff]
        %v2999 = vld [vmem:[%s2 + $0xd0] sm:$0xff]
        %v3000 = vld [vmem:[%s2 + $0xd8] sm:$0xff]
        %v3001 = vld [vmem:[%s2 + $0xe0] sm:$0xff]
        %v3002 = vld [vmem:[%s2 + $0xe8] sm:$0xff]
        %v3003 = vld [vmem:[%s2 + $0xf0] sm:$0xff]
        %v3004 = vld [vmem:[%s2 + $0xf8] sm:$0xff]
        %v3005 = vld [vmem:[%s2 + $0x100] sm:$0xff]
        %v3006 = vld [vmem:[%s2 + $0x108] sm:$0xff]
        %v3007 = vld [vmem:[%s2 + $0x110] sm:$0xff]
        %v3008 = vld [vmem:[%s2 + $0x118] sm:$0xff]
        %v3009 = vld [vmem:[%s2 + $0x120] sm:$0xff]
        %v3010 = vld [vmem:[%s2 + $0x128] sm:$0xff]
        %v3011 = vld [vmem:[%s2 + $0x130] sm:$0xff]
        %v3012 = vld [vmem:[%s2 + $0x138] sm:$0xff]
        %v3013 = vld [vmem:[%s2 + $0x140] sm:$0xff]
        %v3014 = vld [vmem:[%s2 + $0x148] sm:$0xff]
        %v3015 = vld [vmem:[%s2 + $0x150] sm:$0xff]
        %v3016 = vld [vmem:[%s2 + $0x158] sm:$0xff]
        %v3017 = vld [vmem:[%s2 + $0x160] sm:$0xff]
        %v3018 = vld [vmem:[%s2 + $0x168] sm:$0xff]
        %v3019 = vld [vmem:[%s2 + $0x170] sm:$0xff]
        %v3020 = vld [vmem:[%s2 + $0x178] sm:$0xff]
        %v3021 = vld [vmem:[%s2 + $0x180] sm:$0xff]
        %v3022 = vld [vmem:[%s2 + $0x188] sm:$0xff]
        %v3023 = vld [vmem:[%s2 + $0x190] sm:$0xff]
        %v3024 = vld [vmem:[%s2 + $0x198] sm:$0xff]
        %v3025 = vld [vmem:[%s2 + $0x1a0] sm:$0xff]
        %v3026 = vld [vmem:[%s2 + $0x1a8] sm:$0xff]
        %v3027 = vld [vmem:[%s2 + $0x1b0] sm:$0xff]
        %v3028 = vld [vmem:[%s2 + $0x1b8] sm:$0xff]
        %v3029 = vld [vmem:[%s2 + $0x1c0] sm:$0xff]
        %v3030 = vld [vmem:[%s2 + $0x1c8] sm:$0xff]
        %v3031 = vld [vmem:[%s2 + $0x1d0] sm:$0xff]
        %v3032 = vld [vmem:[%s2 + $0x1d8] sm:$0xff]
        %v3033 = vld [vmem:[%s2 + $0x1e0] sm:$0xff]
        %v3034 = vld [vmem:[%s2 + $0x1e8] sm:$0xff]
        %v3035 = vld [vmem:[%s2 + $0x1f0] sm:$0xff]
        %v3036 = vld [vmem:[%s2 + $0x1f8] sm:$0xff]
        %v3037 = vld [vmem:[%s2 + $0x200] sm:$0xff]
        %v3038 = vld [vmem:[%s2 + $0x208] sm:$0xff]
        %v3039 = vld [vmem:[%s2 + $0x210] sm:$0xff]
        %v3040 = vld [vmem:[%s2 + $0x218] sm:$0xff]
        %v3041 = vld [vmem:[%s2 + $0x220] sm:$0xff]
        %v3042 = vld [vmem:[%s2 + $0x228] sm:$0xff]
        %v3043 = vld [vmem:[%s2 + $0x230] sm:$0xff]
        %v3044 = vld [vmem:[%s2 + $0x238] sm:$0xff]
        %v3046 = vsel %vm1015, %v2805, 0
        %v3049 = vsel %vm1015, %v2806, 0
        %v3052 = vsel %vm1015, %v2807, 0
        %v3055 = vsel %vm1015, %v2808, 0
        %v3058 = vsel %vm1015, %v2809, 0
        %v3061 = vsel %vm1015, %v2810, 0
        %v3064 = vsel %vm1015, %v2811, 0
        %v3067 = vsel %vm1015, %v2812, 0
        %3069 = vmatprep.subr.mxu0 0.0
        %3070 = vmatpush1.msra.mxu0 %v2973
        %3071 = vmatprep.subr.mxu0 0.0
        %3072 = vmatpush1.msra.mxu0 %v2974
        %3073 = vmatprep.subr.mxu0 0.0
        %3074 = vmatpush1.msra.mxu0 %v2975
        %3075 = vmatprep.subr.mxu0 0.0
        %3076 = vmatpush1.msra.mxu0 %v2976
        %3077 = vmatprep.subr.mxu0 0.0
        %3078 = vmatpush1.msra.mxu0 %v2977
        %3079 = vmatprep.subr.mxu0 0.0
        %3080 = vmatpush1.msra.mxu0 %v2978
        %3081 = vmatprep.subr.mxu0 0.0
        %3082 = vmatpush1.msra.mxu0 %v2979
        %3083 = vmatprep.subr.mxu0 0.0
        %3084 = vmatpush1.msra.mxu0 %v2980
        %3085 = vmatprep.subr.mxu0 0.0
        %3086 = vmatpush1.msra.mxu0 %v2981
        %3087 = vmatprep.subr.mxu0 0.0
        %3088 = vmatpush1.msra.mxu0 %v2982
        %3089 = vmatprep.subr.mxu0 0.0
        %3090 = vmatpush1.msra.mxu0 %v2983
        %3091 = vmatprep.subr.mxu0 0.0
        %3092 = vmatpush1.msra.mxu0 %v2984
        %3093 = vmatprep.subr.mxu0 0.0
        %3094 = vmatpush1.msra.mxu0 %v2985
        %3095 = vmatprep.subr.mxu0 0.0
        %3096 = vmatpush1.msra.mxu0 %v2986
        %3097 = vmatprep.subr.mxu0 0.0
        %3098 = vmatpush1.msra.mxu0 %v2987
        %3099 = vmatprep.subr.mxu0 0.0
        %3100 = vmatpush1.msra.mxu0 %v2988
        %3101 = vmatprep.subr.mxu0 0.0
        %3102 = vmatpush1.msra.mxu0 %v2989
        %3103 = vmatprep.subr.mxu0 0.0
        %3104 = vmatpush1.msra.mxu0 %v2990
        %3105 = vmatprep.subr.mxu0 0.0
        %3106 = vmatpush1.msra.mxu0 %v2991
        %3107 = vmatprep.subr.mxu0 0.0
        %3108 = vmatpush1.msra.mxu0 %v2992
        %3109 = vmatprep.subr.mxu0 0.0
        %3110 = vmatpush1.msra.mxu0 %v2993
        %3111 = vmatprep.subr.mxu0 0.0
        %3112 = vmatpush1.msra.mxu0 %v2994
        %3113 = vmatprep.subr.mxu0 0.0
        %3114 = vmatpush1.msra.mxu0 %v2995
        %3115 = vmatprep.subr.mxu0 0.0
        %3116 = vmatpush1.msra.mxu0 %v2996
        %3117 = vmatprep.subr.mxu0 0.0
        %3118 = vmatpush1.msra.mxu0 %v2997
        %3119 = vmatprep.subr.mxu0 0.0
        %3120 = vmatpush1.msra.mxu0 %v2998
        %3121 = vmatprep.subr.mxu0 0.0
        %3122 = vmatpush1.msra.mxu0 %v2999
        %3123 = vmatprep.subr.mxu0 0.0
        %3124 = vmatpush1.msra.mxu0 %v3000
        %3125 = vmatprep.subr.mxu0 0.0
        %3126 = vmatpush1.msra.mxu0 %v3001
        %3127 = vmatprep.subr.mxu0 0.0
        %3128 = vmatpush1.msra.mxu0 %v3002
        %3129 = vmatprep.subr.mxu0 0.0
        %3130 = vmatpush1.msra.mxu0 %v3003
        %3131 = vmatprep.subr.mxu0 0.0
        %3132 = vmatpush1.msra.mxu0 %v3004
        %3133 = vmatprep.mubr.f32.mxu0 %v2949
        %3134 = vmatmul.mubr.f32.gmra.mrb[0].mxu0 %v2941
        %v3135 = vpop.f32.mrb[0].mxu0
        %v3136 = vadd.f32 %v1124, %v3135
        %v3137 = vpop.f32.mrb[0].mxu0
        %3138 = vmatprep.mubr.f32.mxu0 %v2950
        %3139 = vmatmul.mubr.f32.gmra.mrb[0].mxu0 %v2942
        %v3140 = vpop.f32.mrb[0].mxu0
        %v3141 = vadd.f32 %v1124, %v3140
        %v3142 = vpop.f32.mrb[0].mxu0
        %3143 = vmatprep.mubr.f32.mxu0 %v2951
        %3144 = vmatmul.mubr.f32.gmra.mrb[0].mxu0 %v2943
        %v3145 = vpop.f32.mrb[0].mxu0
        %v3146 = vadd.f32 %v1124, %v3145
        %v3147 = vpop.f32.mrb[0].mxu0
        %3148 = vmatprep.mubr.f32.mxu0 %v2952
        %3149 = vmatmul.mubr.f32.gmra.mrb[0].mxu0 %v2944
        %v3150 = vpop.f32.mrb[0].mxu0
        %v3151 = vadd.f32 %v1124, %v3150
        %v3152 = vpop.f32.mrb[0].mxu0
        %3153 = vmatprep.mubr.f32.mxu0 %v2953
        %3154 = vmatmul.mubr.f32.gmra.mrb[0].mxu0 %v2945
        %v3155 = vpop.f32.mrb[0].mxu0
        %v3156 = vadd.f32 %v1124, %v3155
        %v3157 = vpop.f32.mrb[0].mxu0
        %3158 = vmatprep.mubr.f32.mxu0 %v2954
        %3159 = vmatmul.mubr.f32.gmra.mrb[0].mxu0 %v2946
        %v3160 = vpop.f32.mrb[0].mxu0
        %v3161 = vadd.f32 %v1124, %v3160
        %v3162 = vpop.f32.mrb[0].mxu0
        %3163 = vmatprep.mubr.f32.mxu0 %v2955
        %3164 = vmatmul.mubr.f32.gmra.mrb[0].mxu0 %v2947
        %v3165 = vpop.f32.mrb[0].mxu0
        %v3166 = vadd.f32 %v1124, %v3165
        %v3167 = vpop.f32.mrb[0].mxu0
        %3168 = vmatprep.mubr.f32.mxu0 %v2956
        %3169 = vmatmul.mubr.f32.gmra.mrb[0].mxu0 %v2948
        %v3170 = vpop.f32.mrb[0].mxu0
        %v3171 = vadd.f32 %v1124, %v3170
        %v3172 = vpop.f32.mrb[0].mxu0
        %3173 = vdwg.mxu0
        %3174 = vmatprep.subr.mxu0 0.0
        %3175 = vmatpush1.msra.mxu0 %v3005
        %3176 = vmatprep.subr.mxu0 0.0
        %3177 = vmatpush1.msra.mxu0 %v3006
        %3178 = vmatprep.subr.mxu0 0.0
        %3179 = vmatpush1.msra.mxu0 %v3007
        %3180 = vmatprep.subr.mxu0 0.0
        %3181 = vmatpush1.msra.mxu0 %v3008
        %3182 = vmatprep.subr.mxu0 0.0
        %3183 = vmatpush1.msra.mxu0 %v3009
        %3184 = vmatprep.subr.mxu0 0.0
        %3185 = vmatpush1.msra.mxu0 %v3010
        %3186 = vmatprep.subr.mxu0 0.0
        %3187 = vmatpush1.msra.mxu0 %v3011
        %3188 = vmatprep.subr.mxu0 0.0
        %3189 = vmatpush1.msra.mxu0 %v3012
        %3190 = vmatprep.subr.mxu0 0.0
        %3191 = vmatpush1.msra.mxu0 %v3013
        %3192 = vmatprep.subr.mxu0 0.0
        %3193 = vmatpush1.msra.mxu0 %v3014
        %3194 = vmatprep.subr.mxu0 0.0
        %3195 = vmatpush1.msra.mxu0 %v3015
        %3196 = vmatprep.subr.mxu0 0.0
        %3197 = vmatpush1.msra.mxu0 %v3016
        %3198 = vmatprep.subr.mxu0 0.0
        %3199 = vmatpush1.msra.mxu0 %v3017
        %3200 = vmatprep.subr.mxu0 0.0
        %3201 = vmatpush1.msra.mxu0 %v3018
        %3202 = vmatprep.subr.mxu0 0.0
        %3203 = vmatpush1.msra.mxu0 %v3019
        %3204 = vmatprep.subr.mxu0 0.0
        %3205 = vmatpush1.msra.mxu0 %v3020
        %3206 = vmatprep.subr.mxu0 0.0
        %3207 = vmatpush1.msra.mxu0 %v3021
        %3208 = vmatprep.subr.mxu0 0.0
        %3209 = vmatpush1.msra.mxu0 %v3022
        %3210 = vmatprep.subr.mxu0 0.0
        %3211 = vmatpush1.msra.mxu0 %v3023
        %3212 = vmatprep.subr.mxu0 0.0
        %3213 = vmatpush1.msra.mxu0 %v3024
        %3214 = vmatprep.subr.mxu0 0.0
        %3215 = vmatpush1.msra.mxu0 %v3025
        %3216 = vmatprep.subr.mxu0 0.0
        %3217 = vmatpush1.msra.mxu0 %v3026
        %3218 = vmatprep.subr.mxu0 0.0
        %3219 = vmatpush1.msra.mxu0 %v3027
        %3220 = vmatprep.subr.mxu0 0.0
        %3221 = vmatpush1.msra.mxu0 %v3028
        %3222 = vmatprep.subr.mxu0 0.0
        %3223 = vmatpush1.msra.mxu0 %v3029
        %3224 = vmatprep.subr.mxu0 0.0
        %3225 = vmatpush1.msra.mxu0 %v3030
        %3226 = vmatprep.subr.mxu0 0.0
        %3227 = vmatpush1.msra.mxu0 %v3031
        %3228 = vmatprep.subr.mxu0 0.0
        %3229 = vmatpush1.msra.mxu0 %v3032
        %3230 = vmatprep.subr.mxu0 0.0
        %3231 = vmatpush1.msra.mxu0 %v3033
        %3232 = vmatprep.subr.mxu0 0.0
        %3233 = vmatpush1.msra.mxu0 %v3034
        %3234 = vmatprep.subr.mxu0 0.0
        %3235 = vmatpush1.msra.mxu0 %v3035
        %3236 = vmatprep.subr.mxu0 0.0
        %3237 = vmatpush1.msra.mxu0 %v3036
        %3238 = vmatprep.mubr.f32.mxu0 %v2965
        %3239 = vmatmul.mubr.f32.gmra.mrb[0].mxu0 %v2957
        %v3240 = vpop.f32.mrb[0].mxu0
        %v3241 = vadd.f32 %v3136, %v3240
        %v3242 = vpop.f32.mrb[0].mxu0
        %3243 = vmatprep.mubr.f32.mxu0 %v2966
        %3244 = vmatmul.mubr.f32.gmra.mrb[0].mxu0 %v2958
        %v3245 = vpop.f32.mrb[0].mxu0
        %v3246 = vadd.f32 %v3141, %v3245
        %v3247 = vpop.f32.mrb[0].mxu0
        %3248 = vmatprep.mubr.f32.mxu0 %v2967
        %3249 = vmatmul.mubr.f32.gmra.mrb[0].mxu0 %v2959
        %v3250 = vpop.f32.mrb[0].mxu0
        %v3251 = vadd.f32 %v3146, %v3250
        %v3252 = vpop.f32.mrb[0].mxu0
        %3253 = vmatprep.mubr.f32.mxu0 %v2968
        %3254 = vmatmul.mubr.f32.gmra.mrb[0].mxu0 %v2960
        %v3255 = vpop.f32.mrb[0].mxu0
        %v3256 = vadd.f32 %v3151, %v3255
        %v3257 = vpop.f32.mrb[0].mxu0
        %3258 = vmatprep.mubr.f32.mxu0 %v2969
        %3259 = vmatmul.mubr.f32.gmra.mrb[0].mxu0 %v2961
        %v3260 = vpop.f32.mrb[0].mxu0
        %v3261 = vadd.f32 %v3156, %v3260
        %v3262 = vpop.f32.mrb[0].mxu0
        %3263 = vmatprep.mubr.f32.mxu0 %v2970
        %3264 = vmatmul.mubr.f32.gmra.mrb[0].mxu0 %v2962
        %v3265 = vpop.f32.mrb[0].mxu0
        %v3266 = vadd.f32 %v3161, %v3265
        %v3267 = vpop.f32.mrb[0].mxu0
        %3268 = vmatprep.mubr.f32.mxu0 %v2971
        %3269 = vmatmul.mubr.f32.gmra.mrb[0].mxu0 %v2963
        %v3270 = vpop.f32.mrb[0].mxu0
        %v3271 = vadd.f32 %v3166, %v3270
        %v3272 = vpop.f32.mrb[0].mxu0
        %3273 = vmatprep.mubr.f32.mxu0 %v2972
        %3274 = vmatmul.mubr.f32.gmra.mrb[0].mxu0 %v2964
        %v3275 = vpop.f32.mrb[0].mxu0
        %v3276 = vadd.f32 %v3171, %v3275
        %v3277 = vpop.f32.mrb[0].mxu0
        %3278 = vdwg.mxu0
        %3279 = vmatprep.subr.mxu0 0.0
        %3280 = vmatpush1.msra.mxu0 %v3037
        %3281 = vmatprep.subr.mxu0 0.0
        %3282 = vmatpush1.msra.mxu0 %v3038
        %3283 = vmatprep.subr.mxu0 0.0
        %3284 = vmatpush1.msra.mxu0 %v3039
        %3285 = vmatprep.subr.mxu0 0.0
        %3286 = vmatpush1.msra.mxu0 %v3040
        %3287 = vmatprep.subr.mxu0 0.0
        %3288 = vmatpush1.msra.mxu0 %v3041
        %3289 = vmatprep.subr.mxu0 0.0
        %3290 = vmatpush1.msra.mxu0 %v3042
        %3291 = vmatprep.subr.mxu0 0.0
        %3292 = vmatpush1.msra.mxu0 %v3043
        %3293 = vmatprep.subr.mxu0 0.0
        %3294 = vmatpush1.msra.mxu0 %v3044
        %3295 = vmatprep.subr.mxu0 0.0
        %3296 = vmatpush1.msra.mxu0 0.0
        %3297 = vmatprep.subr.mxu0 0.0
        %3298 = vmatpush1.msra.mxu0 0.0
        %3299 = vmatprep.subr.mxu0 0.0
        %3300 = vmatpush1.msra.mxu0 0.0
        %3301 = vmatprep.subr.mxu0 0.0
        %3302 = vmatpush1.msra.mxu0 0.0
        %3303 = vmatprep.subr.mxu0 0.0
        %3304 = vmatpush1.msra.mxu0 0.0
        %3305 = vmatprep.subr.mxu0 0.0
        %3306 = vmatpush1.msra.mxu0 0.0
        %3307 = vmatprep.subr.mxu0 0.0
        %3308 = vmatpush1.msra.mxu0 0.0
        %3309 = vmatprep.subr.mxu0 0.0
        %3310 = vmatpush1.msra.mxu0 0.0
        %3311 = vmatprep.subr.mxu0 0.0
        %3312 = vmatpush1.msra.mxu0 0.0
        %3313 = vmatprep.subr.mxu0 0.0
        %3314 = vmatpush1.msra.mxu0 0.0
        %3315 = vmatprep.subr.mxu0 0.0
        %3316 = vmatpush1.msra.mxu0 0.0
        %3317 = vmatprep.subr.mxu0 0.0
        %3318 = vmatpush1.msra.mxu0 0.0
        %3319 = vmatprep.subr.mxu0 0.0
        %3320 = vmatpush1.msra.mxu0 0.0
        %3321 = vmatprep.subr.mxu0 0.0
        %3322 = vmatpush1.msra.mxu0 0.0
        %3323 = vmatprep.subr.mxu0 0.0
        %3324 = vmatpush1.msra.mxu0 0.0
        %3325 = vmatprep.subr.mxu0 0.0
        %3326 = vmatpush1.msra.mxu0 0.0
        %3327 = vmatprep.subr.mxu0 0.0
        %3328 = vmatpush1.msra.mxu0 0.0
        %3329 = vmatprep.subr.mxu0 0.0
        %3330 = vmatpush1.msra.mxu0 0.0
        %3331 = vmatprep.subr.mxu0 0.0
        %3332 = vmatpush1.msra.mxu0 0.0
        %3333 = vmatprep.subr.mxu0 0.0
        %3334 = vmatpush1.msra.mxu0 0.0
        %3335 = vmatprep.subr.mxu0 0.0
        %3336 = vmatpush1.msra.mxu0 0.0
        %3337 = vmatprep.subr.mxu0 0.0
        %3338 = vmatpush1.msra.mxu0 0.0
        %3339 = vmatprep.subr.mxu0 0.0
        %3340 = vmatpush1.msra.mxu0 0.0
        %3341 = vmatprep.subr.mxu0 0.0
        %3342 = vmatpush1.msra.mxu0 0.0
        %3343 = vmatprep.mubr.f32.mxu0 0.0
        %3344 = vmatmul.mubr.f32.gmra.mrb[0].mxu0 %v3046
        %v3345 = vpop.f32.mrb[0].mxu0
        %v3346 = vadd.f32 %v3241, %v3345
        %v3347 = vpop.f32.mrb[0].mxu0
        %3348 = vmatprep.mubr.f32.mxu0 0.0
        %3349 = vmatmul.mubr.f32.gmra.mrb[0].mxu0 %v3049
        %v3350 = vpop.f32.mrb[0].mxu0
        %v3351 = vadd.f32 %v3246, %v3350
        %v3352 = vpop.f32.mrb[0].mxu0
        %3353 = vmatprep.mubr.f32.mxu0 0.0
        %3354 = vmatmul.mubr.f32.gmra.mrb[0].mxu0 %v3052
        %v3355 = vpop.f32.mrb[0].mxu0
        %v3356 = vadd.f32 %v3251, %v3355
        %v3357 = vpop.f32.mrb[0].mxu0
        %3358 = vmatprep.mubr.f32.mxu0 0.0
        %3359 = vmatmul.mubr.f32.gmra.mrb[0].mxu0 %v3055
        %v3360 = vpop.f32.mrb[0].mxu0
        %v3361 = vadd.f32 %v3256, %v3360
        %v3362 = vpop.f32.mrb[0].mxu0
        %3363 = vmatprep.mubr.f32.mxu0 0.0
        %3364 = vmatmul.mubr.f32.gmra.mrb[0].mxu0 %v3058
        %v3365 = vpop.f32.mrb[0].mxu0
        %v3366 = vadd.f32 %v3261, %v3365
        %v3367 = vpop.f32.mrb[0].mxu0
        %3368 = vmatprep.mubr.f32.mxu0 0.0
        %3369 = vmatmul.mubr.f32.gmra.mrb[0].mxu0 %v3061
        %v3370 = vpop.f32.mrb[0].mxu0
        %v3371 = vadd.f32 %v3266, %v3370
        %v3372 = vpop.f32.mrb[0].mxu0
        %3373 = vmatprep.mubr.f32.mxu0 0.0
        %3374 = vmatmul.mubr.f32.gmra.mrb[0].mxu0 %v3064
        %v3375 = vpop.f32.mrb[0].mxu0
        %v3376 = vadd.f32 %v3271, %v3375
        %v3377 = vpop.f32.mrb[0].mxu0
        %3378 = vmatprep.mubr.f32.mxu0 0.0
        %3379 = vmatmul.mubr.f32.gmra.mrb[0].mxu0 %v3067
        %v3380 = vpop.f32.mrb[0].mxu0
        %v3381 = vadd.f32 %v3276, %v3380
        %v3382 = vpop.f32.mrb[0].mxu0
        %3383 = vdwg.mxu0
        %v3384 = vmul.f32 %v3346, 0.5
        %v3385 = vmul.f32 %v3351, 0.5
        %v3386 = vmul.f32 %v3356, 0.5
        %v3387 = vmul.f32 %v3361, 0.5
        %v3388 = vmul.f32 %v3366, 0.5
        %v3389 = vmul.f32 %v3371, 0.5
        %v3390 = vmul.f32 %v3376, 0.5
        %v3391 = vmul.f32 %v3381, 0.5
        %v3392 = vsel %vm1467, %v3384, %v3346
        %v3393 = vsel %vm1467, %v3385, %v3351
        %v3394 = vsel %vm1467, %v3386, %v3356
        %v3395 = vsel %vm1467, %v3387, %v3361
        %v3396 = vsel %vm1467, %v3388, %v3366
        %v3397 = vsel %vm1467, %v3389, %v3371
        %v3398 = vsel %vm1467, %v3390, %v3376
        %v3399 = vsel %vm1467, %v3391, %v3381
        %v3400 = vtanh.pop %v3392
        %v3401 = vtanh.pop %v3393
        %v3402 = vtanh.pop %v3394
        %v3403 = vtanh.pop %v3395
        %v3404 = vtanh.pop %v3396
        %v3405 = vtanh.pop %v3397
        %v3406 = vtanh.pop %v3398
        %v3407 = vtanh.pop %v3399
        %v3408 = vadd.f32 %v3400, 1.0
        %v3409 = vadd.f32 %v3401, 1.0
        %v3410 = vadd.f32 %v3402, 1.0
        %v3411 = vadd.f32 %v3403, 1.0
        %v3412 = vadd.f32 %v3404, 1.0
        %v3413 = vadd.f32 %v3405, 1.0
        %v3414 = vadd.f32 %v3406, 1.0
        %v3415 = vadd.f32 %v3407, 1.0
        %v3416 = vmul.f32 %v3408, 0.5
        %v3417 = vmul.f32 %v3409, 0.5
        %v3418 = vmul.f32 %v3410, 0.5
        %v3419 = vmul.f32 %v3411, 0.5
        %v3420 = vmul.f32 %v3412, 0.5
        %v3421 = vmul.f32 %v3413, 0.5
        %v3422 = vmul.f32 %v3414, 0.5
        %v3423 = vmul.f32 %v3415, 0.5
        %v3424 = vsel %vm1467, %v3416, %v3400
        %v3425 = vsel %vm1467, %v3417, %v3401
        %v3426 = vsel %vm1467, %v3418, %v3402
        %v3427 = vsel %vm1467, %v3419, %v3403
        %v3428 = vsel %vm1467, %v3420, %v3404
        %v3429 = vsel %vm1467, %v3421, %v3405
        %v3430 = vsel %vm1467, %v3422, %v3406
        %v3431 = vsel %vm1467, %v3423, %v3407
        %s3432 = smul.u32 8, 16
        %s3433 = scalar_lea.vmem [#allocation4], %s3432
        %v3434 = vld [vmem:[%s3433] sm:$0xff]
        %v3435 = vld [vmem:[%s3433 + $0x8] sm:$0xff]
        %v3436 = vld [vmem:[%s3433 + $0x10] sm:$0xff]
        %v3437 = vld [vmem:[%s3433 + $0x18] sm:$0xff]
        %v3438 = vld [vmem:[%s3433 + $0x20] sm:$0xff]
        %v3439 = vld [vmem:[%s3433 + $0x28] sm:$0xff]
        %v3440 = vld [vmem:[%s3433 + $0x30] sm:$0xff]
        %v3441 = vld [vmem:[%s3433 + $0x38] sm:$0xff]
        %3450 = vrot.lane.b32.xlu0 %v3434, 32
        %v3451 = vpop.permute.xlu0 %3450
        %3452 = vrot.lane.b32.xlu0 %v3435, 32
        %v3453 = vpop.permute.xlu0 %3452
        %3454 = vrot.lane.b32.xlu0 %v3436, 32
        %v3455 = vpop.permute.xlu0 %3454
        %3456 = vrot.lane.b32.xlu0 %v3437, 32
        %v3457 = vpop.permute.xlu0 %3456
        %3458 = vrot.lane.b32.xlu0 %v3438, 32
        %v3459 = vpop.permute.xlu0 %3458
        %3460 = vrot.lane.b32.xlu0 %v3439, 32
        %v3461 = vpop.permute.xlu0 %3460
        %3462 = vrot.lane.b32.xlu0 %v3440, 32
        %v3463 = vpop.permute.xlu0 %3462
        %3464 = vrot.lane.b32.xlu0 %v3441, 32
        %v3465 = vpop.permute.xlu0 %3464
        %v3474 = vmul.f32 %v3424, %v3451
        %v3475 = vmul.f32 %v3425, %v3453
        %v3476 = vmul.f32 %v3426, %v3455
        %v3477 = vmul.f32 %v3427, %v3457
        %v3478 = vmul.f32 %v3428, %v3459
        %v3479 = vmul.f32 %v3429, %v3461
        %v3480 = vmul.f32 %v3430, %v3463
        %v3481 = vmul.f32 %v3431, %v3465
        %3490 = vrot.lane.b32.xlu0 %v3424, 32
        %v3491 = vpop.permute.xlu0 %3490
        %3492 = vrot.lane.b32.xlu0 %v3425, 32
        %v3493 = vpop.permute.xlu0 %3492
        %3494 = vrot.lane.b32.xlu0 %v3426, 32
        %v3495 = vpop.permute.xlu0 %3494
        %3496 = vrot.lane.b32.xlu0 %v3427, 32
        %v3497 = vpop.permute.xlu0 %3496
        %3498 = vrot.lane.b32.xlu0 %v3428, 32
        %v3499 = vpop.permute.xlu0 %3498
        %3500 = vrot.lane.b32.xlu0 %v3429, 32
        %v3501 = vpop.permute.xlu0 %3500
        %3502 = vrot.lane.b32.xlu0 %v3430, 32
        %v3503 = vpop.permute.xlu0 %3502
        %3504 = vrot.lane.b32.xlu0 %v3431, 32
        %v3505 = vpop.permute.xlu0 %3504
        %v3514 = vmul.f32 %v3424, %v3491
        %v3515 = vmul.f32 %v3425, %v3493
        %v3516 = vmul.f32 %v3426, %v3495
        %v3517 = vmul.f32 %v3427, %v3497
        %v3518 = vmul.f32 %v3428, %v3499
        %v3519 = vmul.f32 %v3429, %v3501
        %v3520 = vmul.f32 %v3430, %v3503
        %v3521 = vmul.f32 %v3431, %v3505
        %3530 = vrot.lane.b32.xlu0 %v3514, 32
        %v3531 = vpop.permute.xlu0 %3530
        %3532 = vrot.lane.b32.xlu0 %v3515, 32
        %v3533 = vpop.permute.xlu0 %3532
        %3534 = vrot.lane.b32.xlu0 %v3516, 32
        %v3535 = vpop.permute.xlu0 %3534
        %3536 = vrot.lane.b32.xlu0 %v3517, 32
        %v3537 = vpop.permute.xlu0 %3536
        %3538 = vrot.lane.b32.xlu0 %v3518, 32
        %v3539 = vpop.permute.xlu0 %3538
        %3540 = vrot.lane.b32.xlu0 %v3519, 32
        %v3541 = vpop.permute.xlu0 %3540
        %3542 = vrot.lane.b32.xlu0 %v3520, 32
        %v3543 = vpop.permute.xlu0 %3542
        %3544 = vrot.lane.b32.xlu0 %v3521, 32
        %v3545 = vpop.permute.xlu0 %3544
        %v3554 = vadd.f32 %v3474, %v3531
        %v3555 = vadd.f32 %v3475, %v3533
        %v3556 = vadd.f32 %v3476, %v3535
        %v3557 = vadd.f32 %v3477, %v3537
        %v3558 = vadd.f32 %v3478, %v3539
        %v3559 = vadd.f32 %v3479, %v3541
        %v3560 = vadd.f32 %v3480, %v3543
        %v3561 = vadd.f32 %v3481, %v3545
        %v3562 = vtanh.pop %v3554
        %v3563 = vtanh.pop %v3555
        %v3564 = vtanh.pop %v3556
        %v3565 = vtanh.pop %v3557
        %v3566 = vtanh.pop %v3558
        %v3567 = vtanh.pop %v3559
        %v3568 = vtanh.pop %v3560
        %v3569 = vtanh.pop %v3561
        %3578 = vrot.lane.b32.xlu0 %v3562, 32
        %v3579 = vpop.permute.xlu0 %3578
        %3580 = vrot.lane.b32.xlu0 %v3563, 32
        %v3581 = vpop.permute.xlu0 %3580
        %3582 = vrot.lane.b32.xlu0 %v3564, 32
        %v3583 = vpop.permute.xlu0 %3582
        %3584 = vrot.lane.b32.xlu0 %v3565, 32
        %v3585 = vpop.permute.xlu0 %3584
        %3586 = vrot.lane.b32.xlu0 %v3566, 32
        %v3587 = vpop.permute.xlu0 %3586
        %3588 = vrot.lane.b32.xlu0 %v3567, 32
        %v3589 = vpop.permute.xlu0 %3588
        %3590 = vrot.lane.b32.xlu0 %v3568, 32
        %v3591 = vpop.permute.xlu0 %3590
        %3592 = vrot.lane.b32.xlu0 %v3569, 32
        %v3593 = vpop.permute.xlu0 %3592
        %v3602 = vmul.f32 %v3424, %v3579
        %v3603 = vmul.f32 %v3425, %v3581
        %v3604 = vmul.f32 %v3426, %v3583
        %v3605 = vmul.f32 %v3427, %v3585
        %v3606 = vmul.f32 %v3428, %v3587
        %v3607 = vmul.f32 %v3429, %v3589
        %v3608 = vmul.f32 %v3430, %v3591
        %v3609 = vmul.f32 %v3431, %v3593
        %3618 = vrot.lane.b32.xlu0 %v3554, 96
        %v3619 = vpop.permute.xlu0 %3618
        %3620 = vrot.lane.b32.xlu0 %v3555, 96
        %v3621 = vpop.permute.xlu0 %3620
        %3622 = vrot.lane.b32.xlu0 %v3556, 96
        %v3623 = vpop.permute.xlu0 %3622
        %3624 = vrot.lane.b32.xlu0 %v3557, 96
        %v3625 = vpop.permute.xlu0 %3624
        %3626 = vrot.lane.b32.xlu0 %v3558, 96
        %v3627 = vpop.permute.xlu0 %3626
        %3628 = vrot.lane.b32.xlu0 %v3559, 96
        %v3629 = vpop.permute.xlu0 %3628
        %3630 = vrot.lane.b32.xlu0 %v3560, 96
        %v3631 = vpop.permute.xlu0 %3630
        %3632 = vrot.lane.b32.xlu0 %v3561, 96
        %v3633 = vpop.permute.xlu0 %3632
        %3642 = vst.msk [vmem:[%s3433] sm:$0xff] %vm580, %v3619
        %3643 = vst.msk [vmem:[%s3433 + $0x8] sm:$0xff] %vm580, %v3621
        %3644 = vst.msk [vmem:[%s3433 + $0x10] sm:$0xff] %vm580, %v3623
        %3645 = vst.msk [vmem:[%s3433 + $0x18] sm:$0xff] %vm580, %v3625
        %3646 = vst.msk [vmem:[%s3433 + $0x20] sm:$0xff] %vm580, %v3627
        %3647 = vst.msk [vmem:[%s3433 + $0x28] sm:$0xff] %vm580, %v3629
        %3648 = vst.msk [vmem:[%s3433 + $0x30] sm:$0xff] %vm580, %v3631
        %3649 = vst.msk [vmem:[%s3433 + $0x38] sm:$0xff] %vm580, %v3633
        %3658 = vrot.lane.b32.xlu0 %v3602, 64
        %v3659 = vpop.permute.xlu0 %3658
        %3660 = vrot.lane.b32.xlu0 %v3603, 64
        %v3661 = vpop.permute.xlu0 %3660
        %3662 = vrot.lane.b32.xlu0 %v3604, 64
        %v3663 = vpop.permute.xlu0 %3662
        %3664 = vrot.lane.b32.xlu0 %v3605, 64
        %v3665 = vpop.permute.xlu0 %3664
        %3666 = vrot.lane.b32.xlu0 %v3606, 64
        %v3667 = vpop.permute.xlu0 %3666
        %3668 = vrot.lane.b32.xlu0 %v3607, 64
        %v3669 = vpop.permute.xlu0 %3668
        %3670 = vrot.lane.b32.xlu0 %v3608, 64
        %v3671 = vpop.permute.xlu0 %3670
        %3672 = vrot.lane.b32.xlu0 %v3609, 64
        %v3673 = vpop.permute.xlu0 %3672
        %s3682 = scalar_lea.vmem [#allocation3], %s3432
        %3683 = vst.msk [vmem:[%s3682] sm:$0xff] %vm580, %v3659
        %3684 = vst.msk [vmem:[%s3682 + $0x8] sm:$0xff] %vm580, %v3661
        %3685 = vst.msk [vmem:[%s3682 + $0x10] sm:$0xff] %vm580, %v3663
        %3686 = vst.msk [vmem:[%s3682 + $0x18] sm:$0xff] %vm580, %v3665
        %3687 = vst.msk [vmem:[%s3682 + $0x20] sm:$0xff] %vm580, %v3667
        %3688 = vst.msk [vmem:[%s3682 + $0x28] sm:$0xff] %vm580, %v3669
        %3689 = vst.msk [vmem:[%s3682 + $0x30] sm:$0xff] %vm580, %v3671
        %3690 = vst.msk [vmem:[%s3682 + $0x38] sm:$0xff] %vm580, %v3673
        %s3691 = smul.u32 12, 24
        %s3692 = scalar_lea.vmem [#allocation2], %s3691
        %v3693 = vld [vmem:[%s3692] sm:$0xff]
        %v3694 = vld [vmem:[%s3692 + $0x8] sm:$0xff]
        %v3695 = vld [vmem:[%s3692 + $0x18] sm:$0xff]
        %v3696 = vld [vmem:[%s3692 + $0x20] sm:$0xff]
        %v3697 = vld [vmem:[%s3692 + $0x30] sm:$0xff]
        %v3698 = vld [vmem:[%s3692 + $0x38] sm:$0xff]
        %v3699 = vld [vmem:[%s3692 + $0x48] sm:$0xff]
        %v3700 = vld [vmem:[%s3692 + $0x50] sm:$0xff]
        %v3701 = vld [vmem:[%s3692 + $0x1] sm:$0xff]
        %v3702 = vld [vmem:[%s3692 + $0x9] sm:$0xff]
        %v3703 = vld [vmem:[%s3692 + $0x19] sm:$0xff]
        %v3704 = vld [vmem:[%s3692 + $0x21] sm:$0xff]
        %v3705 = vld [vmem:[%s3692 + $0x31] sm:$0xff]
        %v3706 = vld [vmem:[%s3692 + $0x39] sm:$0xff]
        %v3707 = vld [vmem:[%s3692 + $0x49] sm:$0xff]
        %v3708 = vld [vmem:[%s3692 + $0x51] sm:$0xff]
        %v3709 = vld [vmem:[%s3692 + $0x2] sm:$0xff]
        %v3710 = vld [vmem:[%s3692 + $0xa] sm:$0xff]
        %v3711 = vld [vmem:[%s3692 + $0x1a] sm:$0xff]
        %v3712 = vld [vmem:[%s3692 + $0x22] sm:$0xff]
        %v3713 = vld [vmem:[%s3692 + $0x32] sm:$0xff]
        %v3714 = vld [vmem:[%s3692 + $0x3a] sm:$0xff]
        %v3715 = vld [vmem:[%s3692 + $0x4a] sm:$0xff]
        %v3716 = vld [vmem:[%s3692 + $0x52] sm:$0xff]
        %s3717 = sadd.s32 12, 1
        %s3718 = smul.u32 %s3717, 24
        %s3719 = scalar_lea.vmem [#allocation2], %s3718
        %v3720 = vld [vmem:[%s3719] sm:$0xff]
        %v3721 = vld [vmem:[%s3719 + $0x8] sm:$0xff]
        %v3722 = vld [vmem:[%s3719 + $0x18] sm:$0xff]
        %v3723 = vld [vmem:[%s3719 + $0x20] sm:$0xff]
        %v3724 = vld [vmem:[%s3719 + $0x30] sm:$0xff]
        %v3725 = vld [vmem:[%s3719 + $0x38] sm:$0xff]
        %v3726 = vld [vmem:[%s3719 + $0x48] sm:$0xff]
        %v3727 = vld [vmem:[%s3719 + $0x50] sm:$0xff]
        %v3728 = vld [vmem:[%s3719 + $0x1] sm:$0xff]
        %v3729 = vld [vmem:[%s3719 + $0x9] sm:$0xff]
        %v3730 = vld [vmem:[%s3719 + $0x19] sm:$0xff]
        %v3731 = vld [vmem:[%s3719 + $0x21] sm:$0xff]
        %v3732 = vld [vmem:[%s3719 + $0x31] sm:$0xff]
        %v3733 = vld [vmem:[%s3719 + $0x39] sm:$0xff]
        %v3734 = vld [vmem:[%s3719 + $0x49] sm:$0xff]
        %v3735 = vld [vmem:[%s3719 + $0x51] sm:$0xff]
        %v3736 = vld [vmem:[%s3719 + $0x2] sm:$0xff]
        %v3737 = vld [vmem:[%s3719 + $0xa] sm:$0xff]
        %v3738 = vld [vmem:[%s3719 + $0x1a] sm:$0xff]
        %v3739 = vld [vmem:[%s3719 + $0x22] sm:$0xff]
        %v3740 = vld [vmem:[%s3719 + $0x32] sm:$0xff]
        %v3741 = vld [vmem:[%s3719 + $0x3a] sm:$0xff]
        %v3742 = vld [vmem:[%s3719 + $0x4a] sm:$0xff]
        %v3743 = vld [vmem:[%s3719 + $0x52] sm:$0xff]
        %s3744 = sadd.s32 12, 2
        %s3745 = smul.u32 %s3744, 24
        %s3746 = scalar_lea.vmem [#allocation2], %s3745
        %v3747 = vld [vmem:[%s3746] sm:$0xff]
        %v3748 = vld [vmem:[%s3746 + $0x8] sm:$0xff]
        %v3749 = vld [vmem:[%s3746 + $0x18] sm:$0xff]
        %v3750 = vld [vmem:[%s3746 + $0x20] sm:$0xff]
        %v3751 = vld [vmem:[%s3746 + $0x30] sm:$0xff]
        %v3752 = vld [vmem:[%s3746 + $0x38] sm:$0xff]
        %v3753 = vld [vmem:[%s3746 + $0x48] sm:$0xff]
        %v3754 = vld [vmem:[%s3746 + $0x50] sm:$0xff]
        %v3755 = vld [vmem:[%s3746 + $0x1] sm:$0xff]
        %v3756 = vld [vmem:[%s3746 + $0x9] sm:$0xff]
        %v3757 = vld [vmem:[%s3746 + $0x19] sm:$0xff]
        %v3758 = vld [vmem:[%s3746 + $0x21] sm:$0xff]
        %v3759 = vld [vmem:[%s3746 + $0x31] sm:$0xff]
        %v3760 = vld [vmem:[%s3746 + $0x39] sm:$0xff]
        %v3761 = vld [vmem:[%s3746 + $0x49] sm:$0xff]
        %v3762 = vld [vmem:[%s3746 + $0x51] sm:$0xff]
        %v3763 = vld [vmem:[%s3746 + $0x2] sm:$0xff]
        %v3764 = vld [vmem:[%s3746 + $0xa] sm:$0xff]
        %v3765 = vld [vmem:[%s3746 + $0x1a] sm:$0xff]
        %v3766 = vld [vmem:[%s3746 + $0x22] sm:$0xff]
        %v3767 = vld [vmem:[%s3746 + $0x32] sm:$0xff]
        %v3768 = vld [vmem:[%s3746 + $0x3a] sm:$0xff]
        %v3769 = vld [vmem:[%s3746 + $0x4a] sm:$0xff]
        %v3770 = vld [vmem:[%s3746 + $0x52] sm:$0xff]
        %3779 = vrot.lane.b32.xlu0 %v3701, 64
        %v3780 = vpop.permute.xlu0 %3779
        %3781 = vrot.lane.b32.xlu0 %v3702, 64
        %v3782 = vpop.permute.xlu0 %3781
        %3783 = vrot.lane.b32.xlu0 %v3703, 64
        %v3784 = vpop.permute.xlu0 %3783
        %3785 = vrot.lane.b32.xlu0 %v3704, 64
        %v3786 = vpop.permute.xlu0 %3785
        %3787 = vrot.lane.b32.xlu0 %v3705, 64
        %v3788 = vpop.permute.xlu0 %3787
        %3789 = vrot.lane.b32.xlu0 %v3706, 64
        %v3790 = vpop.permute.xlu0 %3789
        %3791 = vrot.lane.b32.xlu0 %v3707, 64
        %v3792 = vpop.permute.xlu0 %3791
        %3793 = vrot.lane.b32.xlu0 %v3708, 64
        %v3794 = vpop.permute.xlu0 %3793
        %3811 = vrot.lane.b32.xlu0 %v3720, 64
        %v3812 = vpop.permute.xlu0 %3811
        %3813 = vrot.lane.b32.xlu0 %v3721, 64
        %v3814 = vpop.permute.xlu0 %3813
        %3815 = vrot.lane.b32.xlu0 %v3722, 64
        %v3816 = vpop.permute.xlu0 %3815
        %3817 = vrot.lane.b32.xlu0 %v3723, 64
        %v3818 = vpop.permute.xlu0 %3817
        %3819 = vrot.lane.b32.xlu0 %v3724, 64
        %v3820 = vpop.permute.xlu0 %3819
        %3821 = vrot.lane.b32.xlu0 %v3725, 64
        %v3822 = vpop.permute.xlu0 %3821
        %3823 = vrot.lane.b32.xlu0 %v3726, 64
        %v3824 = vpop.permute.xlu0 %3823
        %3825 = vrot.lane.b32.xlu0 %v3727, 64
        %v3826 = vpop.permute.xlu0 %3825
        %3843 = vrot.lane.b32.xlu0 %v3736, 64
        %v3844 = vpop.permute.xlu0 %3843
        %3845 = vrot.lane.b32.xlu0 %v3737, 64
        %v3846 = vpop.permute.xlu0 %3845
        %3847 = vrot.lane.b32.xlu0 %v3738, 64
        %v3848 = vpop.permute.xlu0 %3847
        %3849 = vrot.lane.b32.xlu0 %v3739, 64
        %v3850 = vpop.permute.xlu0 %3849
        %3851 = vrot.lane.b32.xlu0 %v3740, 64
        %v3852 = vpop.permute.xlu0 %3851
        %3853 = vrot.lane.b32.xlu0 %v3741, 64
        %v3854 = vpop.permute.xlu0 %3853
        %3855 = vrot.lane.b32.xlu0 %v3742, 64
        %v3856 = vpop.permute.xlu0 %3855
        %3857 = vrot.lane.b32.xlu0 %v3743, 64
        %v3858 = vpop.permute.xlu0 %3857
        %3875 = vrot.lane.b32.xlu0 %v3755, 64
        %v3876 = vpop.permute.xlu0 %3875
        %3877 = vrot.lane.b32.xlu0 %v3756, 64
        %v3878 = vpop.permute.xlu0 %3877
        %3879 = vrot.lane.b32.xlu0 %v3757, 64
        %v3880 = vpop.permute.xlu0 %3879
        %3881 = vrot.lane.b32.xlu0 %v3758, 64
        %v3882 = vpop.permute.xlu0 %3881
        %3883 = vrot.lane.b32.xlu0 %v3759, 64
        %v3884 = vpop.permute.xlu0 %3883
        %3885 = vrot.lane.b32.xlu0 %v3760, 64
        %v3886 = vpop.permute.xlu0 %3885
        %3887 = vrot.lane.b32.xlu0 %v3761, 64
        %v3888 = vpop.permute.xlu0 %3887
        %3889 = vrot.lane.b32.xlu0 %v3762, 64
        %v3890 = vpop.permute.xlu0 %3889
        %v3899 = vsel %vm1015, %v3693, %v3780
        %v3900 = vsel %vm1015, %v3694, %v3782
        %v3901 = vsel %vm1015, %v3695, %v3784
        %v3902 = vsel %vm1015, %v3696, %v3786
        %v3903 = vsel %vm1015, %v3697, %v3788
        %v3904 = vsel %vm1015, %v3698, %v3790
        %v3905 = vsel %vm1015, %v3699, %v3792
        %v3906 = vsel %vm1015, %v3700, %v3794
        %v3907 = vsel %vm1015, %v3709, %v3812
        %v3908 = vsel %vm1015, %v3710, %v3814
        %v3909 = vsel %vm1015, %v3711, %v3816
        %v3910 = vsel %vm1015, %v3712, %v3818
        %v3911 = vsel %vm1015, %v3713, %v3820
        %v3912 = vsel %vm1015, %v3714, %v3822
        %v3913 = vsel %vm1015, %v3715, %v3824
        %v3914 = vsel %vm1015, %v3716, %v3826
        %v3915 = vsel %vm1015, %v3728, %v3844
        %v3916 = vsel %vm1015, %v3729, %v3846
        %v3917 = vsel %vm1015, %v3730, %v3848
        %v3918 = vsel %vm1015, %v3731, %v3850
        %v3919 = vsel %vm1015, %v3732, %v3852
        %v3920 = vsel %vm1015, %v3733, %v3854
        %v3921 = vsel %vm1015, %v3734, %v3856
        %v3922 = vsel %vm1015, %v3735, %v3858
        %v3923 = vsel %vm1015, %v3747, %v3876
        %v3924 = vsel %vm1015, %v3748, %v3878
        %v3925 = vsel %vm1015, %v3749, %v3880
        %v3926 = vsel %vm1015, %v3750, %v3882
        %v3927 = vsel %vm1015, %v3751, %v3884
        %v3928 = vsel %vm1015, %v3752, %v3886
        %v3929 = vsel %vm1015, %v3753, %v3888
        %v3930 = vsel %vm1015, %v3754, %v3890
        %v3931 = vld [vmem:[%s2] sm:$0xff]
        %v3932 = vld [vmem:[%s2 + $0x8] sm:$0xff]
        %v3933 = vld [vmem:[%s2 + $0x10] sm:$0xff]
        %v3934 = vld [vmem:[%s2 + $0x18] sm:$0xff]
        %v3935 = vld [vmem:[%s2 + $0x20] sm:$0xff]
        %v3936 = vld [vmem:[%s2 + $0x28] sm:$0xff]
        %v3937 = vld [vmem:[%s2 + $0x30] sm:$0xff]
        %v3938 = vld [vmem:[%s2 + $0x38] sm:$0xff]
        %v3939 = vld [vmem:[%s2 + $0x40] sm:$0xff]
        %v3940 = vld [vmem:[%s2 + $0x48] sm:$0xff]
        %v3941 = vld [vmem:[%s2 + $0x50] sm:$0xff]
        %v3942 = vld [vmem:[%s2 + $0x58] sm:$0xff]
        %v3943 = vld [vmem:[%s2 + $0x60] sm:$0xff]
        %v3944 = vld [vmem:[%s2 + $0x68] sm:$0xff]
        %v3945 = vld [vmem:[%s2 + $0x70] sm:$0xff]
        %v3946 = vld [vmem:[%s2 + $0x78] sm:$0xff]
        %v3947 = vld [vmem:[%s2 + $0x80] sm:$0xff]
        %v3948 = vld [vmem:[%s2 + $0x88] sm:$0xff]
        %v3949 = vld [vmem:[%s2 + $0x90] sm:$0xff]
        %v3950 = vld [vmem:[%s2 + $0x98] sm:$0xff]
        %v3951 = vld [vmem:[%s2 + $0xa0] sm:$0xff]
        %v3952 = vld [vmem:[%s2 + $0xa8] sm:$0xff]
        %v3953 = vld [vmem:[%s2 + $0xb0] sm:$0xff]
        %v3954 = vld [vmem:[%s2 + $0xb8] sm:$0xff]
        %v3955 = vld [vmem:[%s2 + $0xc0] sm:$0xff]
        %v3956 = vld [vmem:[%s2 + $0xc8] sm:$0xff]
        %v3957 = vld [vmem:[%s2 + $0xd0] sm:$0xff]
        %v3958 = vld [vmem:[%s2 + $0xd8] sm:$0xff]
        %v3959 = vld [vmem:[%s2 + $0xe0] sm:$0xff]
        %v3960 = vld [vmem:[%s2 + $0xe8] sm:$0xff]
        %v3961 = vld [vmem:[%s2 + $0xf0] sm:$0xff]
        %v3962 = vld [vmem:[%s2 + $0xf8] sm:$0xff]
        %v3963 = vld [vmem:[%s2 + $0x100] sm:$0xff]
        %v3964 = vld [vmem:[%s2 + $0x108] sm:$0xff]
        %v3965 = vld [vmem:[%s2 + $0x110] sm:$0xff]
        %v3966 = vld [vmem:[%s2 + $0x118] sm:$0xff]
        %v3967 = vld [vmem:[%s2 + $0x120] sm:$0xff]
        %v3968 = vld [vmem:[%s2 + $0x128] sm:$0xff]
        %v3969 = vld [vmem:[%s2 + $0x130] sm:$0xff]
        %v3970 = vld [vmem:[%s2 + $0x138] sm:$0xff]
        %v3971 = vld [vmem:[%s2 + $0x140] sm:$0xff]
        %v3972 = vld [vmem:[%s2 + $0x148] sm:$0xff]
        %v3973 = vld [vmem:[%s2 + $0x150] sm:$0xff]
        %v3974 = vld [vmem:[%s2 + $0x158] sm:$0xff]
        %v3975 = vld [vmem:[%s2 + $0x160] sm:$0xff]
        %v3976 = vld [vmem:[%s2 + $0x168] sm:$0xff]
        %v3977 = vld [vmem:[%s2 + $0x170] sm:$0xff]
        %v3978 = vld [vmem:[%s2 + $0x178] sm:$0xff]
        %v3979 = vld [vmem:[%s2 + $0x180] sm:$0xff]
        %v3980 = vld [vmem:[%s2 + $0x188] sm:$0xff]
        %v3981 = vld [vmem:[%s2 + $0x190] sm:$0xff]
        %v3982 = vld [vmem:[%s2 + $0x198] sm:$0xff]
        %v3983 = vld [vmem:[%s2 + $0x1a0] sm:$0xff]
        %v3984 = vld [vmem:[%s2 + $0x1a8] sm:$0xff]
        %v3985 = vld [vmem:[%s2 + $0x1b0] sm:$0xff]
        %v3986 = vld [vmem:[%s2 + $0x1b8] sm:$0xff]
        %v3987 = vld [vmem:[%s2 + $0x1c0] sm:$0xff]
        %v3988 = vld [vmem:[%s2 + $0x1c8] sm:$0xff]
        %v3989 = vld [vmem:[%s2 + $0x1d0] sm:$0xff]
        %v3990 = vld [vmem:[%s2 + $0x1d8] sm:$0xff]
        %v3991 = vld [vmem:[%s2 + $0x1e0] sm:$0xff]
        %v3992 = vld [vmem:[%s2 + $0x1e8] sm:$0xff]
        %v3993 = vld [vmem:[%s2 + $0x1f0] sm:$0xff]
        %v3994 = vld [vmem:[%s2 + $0x1f8] sm:$0xff]
        %v3995 = vld [vmem:[%s2 + $0x200] sm:$0xff]
        %v3996 = vld [vmem:[%s2 + $0x208] sm:$0xff]
        %v3997 = vld [vmem:[%s2 + $0x210] sm:$0xff]
        %v3998 = vld [vmem:[%s2 + $0x218] sm:$0xff]
        %v3999 = vld [vmem:[%s2 + $0x220] sm:$0xff]
        %v4000 = vld [vmem:[%s2 + $0x228] sm:$0xff]
        %v4001 = vld [vmem:[%s2 + $0x230] sm:$0xff]
        %v4002 = vld [vmem:[%s2 + $0x238] sm:$0xff]
        %v4004 = vsel %vm1015, %v3763, 0
        %v4007 = vsel %vm1015, %v3764, 0
        %v4010 = vsel %vm1015, %v3765, 0
        %v4013 = vsel %vm1015, %v3766, 0
        %v4016 = vsel %vm1015, %v3767, 0
        %v4019 = vsel %vm1015, %v3768, 0
        %v4022 = vsel %vm1015, %v3769, 0
        %v4025 = vsel %vm1015, %v3770, 0
        %4027 = vmatprep.subr.mxu0 0.0
        %4028 = vmatpush1.msra.mxu0 %v3931
        %4029 = vmatprep.subr.mxu0 0.0
        %4030 = vmatpush1.msra.mxu0 %v3932
        %4031 = vmatprep.subr.mxu0 0.0
        %4032 = vmatpush1.msra.mxu0 %v3933
        %4033 = vmatprep.subr.mxu0 0.0
        %4034 = vmatpush1.msra.mxu0 %v3934
        %4035 = vmatprep.subr.mxu0 0.0
        %4036 = vmatpush1.msra.mxu0 %v3935
        %4037 = vmatprep.subr.mxu0 0.0
        %4038 = vmatpush1.msra.mxu0 %v3936
        %4039 = vmatprep.subr.mxu0 0.0
        %4040 = vmatpush1.msra.mxu0 %v3937
        %4041 = vmatprep.subr.mxu0 0.0
        %4042 = vmatpush1.msra.mxu0 %v3938
        %4043 = vmatprep.subr.mxu0 0.0
        %4044 = vmatpush1.msra.mxu0 %v3939
        %4045 = vmatprep.subr.mxu0 0.0
        %4046 = vmatpush1.msra.mxu0 %v3940
        %4047 = vmatprep.subr.mxu0 0.0
        %4048 = vmatpush1.msra.mxu0 %v3941
        %4049 = vmatprep.subr.mxu0 0.0
        %4050 = vmatpush1.msra.mxu0 %v3942
        %4051 = vmatprep.subr.mxu0 0.0
        %4052 = vmatpush1.msra.mxu0 %v3943
        %4053 = vmatprep.subr.mxu0 0.0
        %4054 = vmatpush1.msra.mxu0 %v3944
        %4055 = vmatprep.subr.mxu0 0.0
        %4056 = vmatpush1.msra.mxu0 %v3945
        %4057 = vmatprep.subr.mxu0 0.0
        %4058 = vmatpush1.msra.mxu0 %v3946
        %4059 = vmatprep.subr.mxu0 0.0
        %4060 = vmatpush1.msra.mxu0 %v3947
        %4061 = vmatprep.subr.mxu0 0.0
        %4062 = vmatpush1.msra.mxu0 %v3948
        %4063 = vmatprep.subr.mxu0 0.0
        %4064 = vmatpush1.msra.mxu0 %v3949
        %4065 = vmatprep.subr.mxu0 0.0
        %4066 = vmatpush1.msra.mxu0 %v3950
        %4067 = vmatprep.subr.mxu0 0.0
        %4068 = vmatpush1.msra.mxu0 %v3951
        %4069 = vmatprep.subr.mxu0 0.0
        %4070 = vmatpush1.msra.mxu0 %v3952
        %4071 = vmatprep.subr.mxu0 0.0
        %4072 = vmatpush1.msra.mxu0 %v3953
        %4073 = vmatprep.subr.mxu0 0.0
        %4074 = vmatpush1.msra.mxu0 %v3954
        %4075 = vmatprep.subr.mxu0 0.0
        %4076 = vmatpush1.msra.mxu0 %v3955
        %4077 = vmatprep.subr.mxu0 0.0
        %4078 = vmatpush1.msra.mxu0 %v3956
        %4079 = vmatprep.subr.mxu0 0.0
        %4080 = vmatpush1.msra.mxu0 %v3957
        %4081 = vmatprep.subr.mxu0 0.0
        %4082 = vmatpush1.msra.mxu0 %v3958
        %4083 = vmatprep.subr.mxu0 0.0
        %4084 = vmatpush1.msra.mxu0 %v3959
        %4085 = vmatprep.subr.mxu0 0.0
        %4086 = vmatpush1.msra.mxu0 %v3960
        %4087 = vmatprep.subr.mxu0 0.0
        %4088 = vmatpush1.msra.mxu0 %v3961
        %4089 = vmatprep.subr.mxu0 0.0
        %4090 = vmatpush1.msra.mxu0 %v3962
        %4091 = vmatprep.mubr.f32.mxu0 %v3907
        %4092 = vmatmul.mubr.f32.gmra.mrb[0].mxu0 %v3899
        %v4093 = vpop.f32.mrb[0].mxu0
        %v4094 = vadd.f32 %v1124, %v4093
        %v4095 = vpop.f32.mrb[0].mxu0
        %4096 = vmatprep.mubr.f32.mxu0 %v3908
        %4097 = vmatmul.mubr.f32.gmra.mrb[0].mxu0 %v3900
        %v4098 = vpop.f32.mrb[0].mxu0
        %v4099 = vadd.f32 %v1124, %v4098
        %v4100 = vpop.f32.mrb[0].mxu0
        %4101 = vmatprep.mubr.f32.mxu0 %v3909
        %4102 = vmatmul.mubr.f32.gmra.mrb[0].mxu0 %v3901
        %v4103 = vpop.f32.mrb[0].mxu0
        %v4104 = vadd.f32 %v1124, %v4103
        %v4105 = vpop.f32.mrb[0].mxu0
        %4106 = vmatprep.mubr.f32.mxu0 %v3910
        %4107 = vmatmul.mubr.f32.gmra.mrb[0].mxu0 %v3902
        %v4108 = vpop.f32.mrb[0].mxu0
        %v4109 = vadd.f32 %v1124, %v4108
        %v4110 = vpop.f32.mrb[0].mxu0
        %4111 = vmatprep.mubr.f32.mxu0 %v3911
        %4112 = vmatmul.mubr.f32.gmra.mrb[0].mxu0 %v3903
        %v4113 = vpop.f32.mrb[0].mxu0
        %v4114 = vadd.f32 %v1124, %v4113
        %v4115 = vpop.f32.mrb[0].mxu0
        %4116 = vmatprep.mubr.f32.mxu0 %v3912
        %4117 = vmatmul.mubr.f32.gmra.mrb[0].mxu0 %v3904
        %v4118 = vpop.f32.mrb[0].mxu0
        %v4119 = vadd.f32 %v1124, %v4118
        %v4120 = vpop.f32.mrb[0].mxu0
        %4121 = vmatprep.mubr.f32.mxu0 %v3913
        %4122 = vmatmul.mubr.f32.gmra.mrb[0].mxu0 %v3905
        %v4123 = vpop.f32.mrb[0].mxu0
        %v4124 = vadd.f32 %v1124, %v4123
        %v4125 = vpop.f32.mrb[0].mxu0
        %4126 = vmatprep.mubr.f32.mxu0 %v3914
        %4127 = vmatmul.mubr.f32.gmra.mrb[0].mxu0 %v3906
        %v4128 = vpop.f32.mrb[0].mxu0
        %v4129 = vadd.f32 %v1124, %v4128
        %v4130 = vpop.f32.mrb[0].mxu0
        %4131 = vdwg.mxu0
        %4132 = vmatprep.subr.mxu0 0.0
        %4133 = vmatpush1.msra.mxu0 %v3963
        %4134 = vmatprep.subr.mxu0 0.0
        %4135 = vmatpush1.msra.mxu0 %v3964
        %4136 = vmatprep.subr.mxu0 0.0
        %4137 = vmatpush1.msra.mxu0 %v3965
        %4138 = vmatprep.subr.mxu0 0.0
        %4139 = vmatpush1.msra.mxu0 %v3966
        %4140 = vmatprep.subr.mxu0 0.0
        %4141 = vmatpush1.msra.mxu0 %v3967
        %4142 = vmatprep.subr.mxu0 0.0
        %4143 = vmatpush1.msra.mxu0 %v3968
        %4144 = vmatprep.subr.mxu0 0.0
        %4145 = vmatpush1.msra.mxu0 %v3969
        %4146 = vmatprep.subr.mxu0 0.0
        %4147 = vmatpush1.msra.mxu0 %v3970
        %4148 = vmatprep.subr.mxu0 0.0
        %4149 = vmatpush1.msra.mxu0 %v3971
        %4150 = vmatprep.subr.mxu0 0.0
        %4151 = vmatpush1.msra.mxu0 %v3972
        %4152 = vmatprep.subr.mxu0 0.0
        %4153 = vmatpush1.msra.mxu0 %v3973
        %4154 = vmatprep.subr.mxu0 0.0
        %4155 = vmatpush1.msra.mxu0 %v3974
        %4156 = vmatprep.subr.mxu0 0.0
        %4157 = vmatpush1.msra.mxu0 %v3975
        %4158 = vmatprep.subr.mxu0 0.0
        %4159 = vmatpush1.msra.mxu0 %v3976
        %4160 = vmatprep.subr.mxu0 0.0
        %4161 = vmatpush1.msra.mxu0 %v3977
        %4162 = vmatprep.subr.mxu0 0.0
        %4163 = vmatpush1.msra.mxu0 %v3978
        %4164 = vmatprep.subr.mxu0 0.0
        %4165 = vmatpush1.msra.mxu0 %v3979
        %4166 = vmatprep.subr.mxu0 0.0
        %4167 = vmatpush1.msra.mxu0 %v3980
        %4168 = vmatprep.subr.mxu0 0.0
        %4169 = vmatpush1.msra.mxu0 %v3981
        %4170 = vmatprep.subr.mxu0 0.0
        %4171 = vmatpush1.msra.mxu0 %v3982
        %4172 = vmatprep.subr.mxu0 0.0
        %4173 = vmatpush1.msra.mxu0 %v3983
        %4174 = vmatprep.subr.mxu0 0.0
        %4175 = vmatpush1.msra.mxu0 %v3984
        %4176 = vmatprep.subr.mxu0 0.0
        %4177 = vmatpush1.msra.mxu0 %v3985
        %4178 = vmatprep.subr.mxu0 0.0
        %4179 = vmatpush1.msra.mxu0 %v3986
        %4180 = vmatprep.subr.mxu0 0.0
        %4181 = vmatpush1.msra.mxu0 %v3987
        %4182 = vmatprep.subr.mxu0 0.0
        %4183 = vmatpush1.msra.mxu0 %v3988
        %4184 = vmatprep.subr.mxu0 0.0
        %4185 = vmatpush1.msra.mxu0 %v3989
        %4186 = vmatprep.subr.mxu0 0.0
        %4187 = vmatpush1.msra.mxu0 %v3990
        %4188 = vmatprep.subr.mxu0 0.0
        %4189 = vmatpush1.msra.mxu0 %v3991
        %4190 = vmatprep.subr.mxu0 0.0
        %4191 = vmatpush1.msra.mxu0 %v3992
        %4192 = vmatprep.subr.mxu0 0.0
        %4193 = vmatpush1.msra.mxu0 %v3993
        %4194 = vmatprep.subr.mxu0 0.0
        %4195 = vmatpush1.msra.mxu0 %v3994
        %4196 = vmatprep.mubr.f32.mxu0 %v3923
        %4197 = vmatmul.mubr.f32.gmra.mrb[0].mxu0 %v3915
        %v4198 = vpop.f32.mrb[0].mxu0
        %v4199 = vadd.f32 %v4094, %v4198
        %v4200 = vpop.f32.mrb[0].mxu0
        %4201 = vmatprep.mubr.f32.mxu0 %v3924
        %4202 = vmatmul.mubr.f32.gmra.mrb[0].mxu0 %v3916
        %v4203 = vpop.f32.mrb[0].mxu0
        %v4204 = vadd.f32 %v4099, %v4203
        %v4205 = vpop.f32.mrb[0].mxu0
        %4206 = vmatprep.mubr.f32.mxu0 %v3925
        %4207 = vmatmul.mubr.f32.gmra.mrb[0].mxu0 %v3917
        %v4208 = vpop.f32.mrb[0].mxu0
        %v4209 = vadd.f32 %v4104, %v4208
        %v4210 = vpop.f32.mrb[0].mxu0
        %4211 = vmatprep.mubr.f32.mxu0 %v3926
        %4212 = vmatmul.mubr.f32.gmra.mrb[0].mxu0 %v3918
        %v4213 = vpop.f32.mrb[0].mxu0
        %v4214 = vadd.f32 %v4109, %v4213
        %v4215 = vpop.f32.mrb[0].mxu0
        %4216 = vmatprep.mubr.f32.mxu0 %v3927
        %4217 = vmatmul.mubr.f32.gmra.mrb[0].mxu0 %v3919
        %v4218 = vpop.f32.mrb[0].mxu0
        %v4219 = vadd.f32 %v4114, %v4218
        %v4220 = vpop.f32.mrb[0].mxu0
        %4221 = vmatprep.mubr.f32.mxu0 %v3928
        %4222 = vmatmul.mubr.f32.gmra.mrb[0].mxu0 %v3920
        %v4223 = vpop.f32.mrb[0].mxu0
        %v4224 = vadd.f32 %v4119, %v4223
        %v4225 = vpop.f32.mrb[0].mxu0
        %4226 = vmatprep.mubr.f32.mxu0 %v3929
        %4227 = vmatmul.mubr.f32.gmra.mrb[0].mxu0 %v3921
        %v4228 = vpop.f32.mrb[0].mxu0
        %v4229 = vadd.f32 %v4124, %v4228
        %v4230 = vpop.f32.mrb[0].mxu0
        %4231 = vmatprep.mubr.f32.mxu0 %v3930
        %4232 = vmatmul.mubr.f32.gmra.mrb[0].mxu0 %v3922
        %v4233 = vpop.f32.mrb[0].mxu0
        %v4234 = vadd.f32 %v4129, %v4233
        %v4235 = vpop.f32.mrb[0].mxu0
        %4236 = vdwg.mxu0
        %4237 = vmatprep.subr.mxu0 0.0
        %4238 = vmatpush1.msra.mxu0 %v3995
        %4239 = vmatprep.subr.mxu0 0.0
        %4240 = vmatpush1.msra.mxu0 %v3996
        %4241 = vmatprep.subr.mxu0 0.0
        %4242 = vmatpush1.msra.mxu0 %v3997
        %4243 = vmatprep.subr.mxu0 0.0
        %4244 = vmatpush1.msra.mxu0 %v3998
        %4245 = vmatprep.subr.mxu0 0.0
        %4246 = vmatpush1.msra.mxu0 %v3999
        %4247 = vmatprep.subr.mxu0 0.0
        %4248 = vmatpush1.msra.mxu0 %v4000
        %4249 = vmatprep.subr.mxu0 0.0
        %4250 = vmatpush1.msra.mxu0 %v4001
        %4251 = vmatprep.subr.mxu0 0.0
        %4252 = vmatpush1.msra.mxu0 %v4002
        %4253 = vmatprep.subr.mxu0 0.0
        %4254 = vmatpush1.msra.mxu0 0.0
        %4255 = vmatprep.subr.mxu0 0.0
        %4256 = vmatpush1.msra.mxu0 0.0
        %4257 = vmatprep.subr.mxu0 0.0
        %4258 = vmatpush1.msra.mxu0 0.0
        %4259 = vmatprep.subr.mxu0 0.0
        %4260 = vmatpush1.msra.mxu0 0.0
        %4261 = vmatprep.subr.mxu0 0.0
        %4262 = vmatpush1.msra.mxu0 0.0
        %4263 = vmatprep.subr.mxu0 0.0
        %4264 = vmatpush1.msra.mxu0 0.0
        %4265 = vmatprep.subr.mxu0 0.0
        %4266 = vmatpush1.msra.mxu0 0.0
        %4267 = vmatprep.subr.mxu0 0.0
        %4268 = vmatpush1.msra.mxu0 0.0
        %4269 = vmatprep.subr.mxu0 0.0
        %4270 = vmatpush1.msra.mxu0 0.0
        %4271 = vmatprep.subr.mxu0 0.0
        %4272 = vmatpush1.msra.mxu0 0.0
        %4273 = vmatprep.subr.mxu0 0.0
        %4274 = vmatpush1.msra.mxu0 0.0
        %4275 = vmatprep.subr.mxu0 0.0
        %4276 = vmatpush1.msra.mxu0 0.0
        %4277 = vmatprep.subr.mxu0 0.0
        %4278 = vmatpush1.msra.mxu0 0.0
        %4279 = vmatprep.subr.mxu0 0.0
        %4280 = vmatpush1.msra.mxu0 0.0
        %4281 = vmatprep.subr.mxu0 0.0
        %4282 = vmatpush1.msra.mxu0 0.0
        %4283 = vmatprep.subr.mxu0 0.0
        %4284 = vmatpush1.msra.mxu0 0.0
        %4285 = vmatprep.subr.mxu0 0.0
        %4286 = vmatpush1.msra.mxu0 0.0
        %4287 = vmatprep.subr.mxu0 0.0
        %4288 = vmatpush1.msra.mxu0 0.0
        %4289 = vmatprep.subr.mxu0 0.0
        %4290 = vmatpush1.msra.mxu0 0.0
        %4291 = vmatprep.subr.mxu0 0.0
        %4292 = vmatpush1.msra.mxu0 0.0
        %4293 = vmatprep.subr.mxu0 0.0
        %4294 = vmatpush1.msra.mxu0 0.0
        %4295 = vmatprep.subr.mxu0 0.0
        %4296 = vmatpush1.msra.mxu0 0.0
        %4297 = vmatprep.subr.mxu0 0.0
        %4298 = vmatpush1.msra.mxu0 0.0
        %4299 = vmatprep.subr.mxu0 0.0
        %4300 = vmatpush1.msra.mxu0 0.0
        %4301 = vmatprep.mubr.f32.mxu0 0.0
        %4302 = vmatmul.mubr.f32.gmra.mrb[0].mxu0 %v4004
        %v4303 = vpop.f32.mrb[0].mxu0
        %v4304 = vadd.f32 %v4199, %v4303
        %v4305 = vpop.f32.mrb[0].mxu0
        %4306 = vmatprep.mubr.f32.mxu0 0.0
        %4307 = vmatmul.mubr.f32.gmra.mrb[0].mxu0 %v4007
        %v4308 = vpop.f32.mrb[0].mxu0
        %v4309 = vadd.f32 %v4204, %v4308
        %v4310 = vpop.f32.mrb[0].mxu0
        %4311 = vmatprep.mubr.f32.mxu0 0.0
        %4312 = vmatmul.mubr.f32.gmra.mrb[0].mxu0 %v4010
        %v4313 = vpop.f32.mrb[0].mxu0
        %v4314 = vadd.f32 %v4209, %v4313
        %v4315 = vpop.f32.mrb[0].mxu0
        %4316 = vmatprep.mubr.f32.mxu0 0.0
        %4317 = vmatmul.mubr.f32.gmra.mrb[0].mxu0 %v4013
        %v4318 = vpop.f32.mrb[0].mxu0
        %v4319 = vadd.f32 %v4214, %v4318
        %v4320 = vpop.f32.mrb[0].mxu0
        %4321 = vmatprep.mubr.f32.mxu0 0.0
        %4322 = vmatmul.mubr.f32.gmra.mrb[0].mxu0 %v4016
        %v4323 = vpop.f32.mrb[0].mxu0
        %v4324 = vadd.f32 %v4219, %v4323
        %v4325 = vpop.f32.mrb[0].mxu0
        %4326 = vmatprep.mubr.f32.mxu0 0.0
        %4327 = vmatmul.mubr.f32.gmra.mrb[0].mxu0 %v4019
        %v4328 = vpop.f32.mrb[0].mxu0
        %v4329 = vadd.f32 %v4224, %v4328
        %v4330 = vpop.f32.mrb[0].mxu0
        %4331 = vmatprep.mubr.f32.mxu0 0.0
        %4332 = vmatmul.mubr.f32.gmra.mrb[0].mxu0 %v4022
        %v4333 = vpop.f32.mrb[0].mxu0
        %v4334 = vadd.f32 %v4229, %v4333
        %v4335 = vpop.f32.mrb[0].mxu0
        %4336 = vmatprep.mubr.f32.mxu0 0.0
        %4337 = vmatmul.mubr.f32.gmra.mrb[0].mxu0 %v4025
        %v4338 = vpop.f32.mrb[0].mxu0
        %v4339 = vadd.f32 %v4234, %v4338
        %v4340 = vpop.f32.mrb[0].mxu0
        %4341 = vdwg.mxu0
        %v4342 = vmul.f32 %v4304, 0.5
        %v4343 = vmul.f32 %v4309, 0.5
        %v4344 = vmul.f32 %v4314, 0.5
        %v4345 = vmul.f32 %v4319, 0.5
        %v4346 = vmul.f32 %v4324, 0.5
        %v4347 = vmul.f32 %v4329, 0.5
        %v4348 = vmul.f32 %v4334, 0.5
        %v4349 = vmul.f32 %v4339, 0.5
        %v4350 = vsel %vm1467, %v4342, %v4304
        %v4351 = vsel %vm1467, %v4343, %v4309
        %v4352 = vsel %vm1467, %v4344, %v4314
        %v4353 = vsel %vm1467, %v4345, %v4319
        %v4354 = vsel %vm1467, %v4346, %v4324
        %v4355 = vsel %vm1467, %v4347, %v4329
        %v4356 = vsel %vm1467, %v4348, %v4334
        %v4357 = vsel %vm1467, %v4349, %v4339
        %v4358 = vtanh.pop %v4350
        %v4359 = vtanh.pop %v4351
        %v4360 = vtanh.pop %v4352
        %v4361 = vtanh.pop %v4353
        %v4362 = vtanh.pop %v4354
        %v4363 = vtanh.pop %v4355
        %v4364 = vtanh.pop %v4356
        %v4365 = vtanh.pop %v4357
        %v4366 = vadd.f32 %v4358, 1.0
        %v4367 = vadd.f32 %v4359, 1.0
        %v4368 = vadd.f32 %v4360, 1.0
        %v4369 = vadd.f32 %v4361, 1.0
        %v4370 = vadd.f32 %v4362, 1.0
        %v4371 = vadd.f32 %v4363, 1.0
        %v4372 = vadd.f32 %v4364, 1.0
        %v4373 = vadd.f32 %v4365, 1.0
        %v4374 = vmul.f32 %v4366, 0.5
        %v4375 = vmul.f32 %v4367, 0.5
        %v4376 = vmul.f32 %v4368, 0.5
        %v4377 = vmul.f32 %v4369, 0.5
        %v4378 = vmul.f32 %v4370, 0.5
        %v4379 = vmul.f32 %v4371, 0.5
        %v4380 = vmul.f32 %v4372, 0.5
        %v4381 = vmul.f32 %v4373, 0.5
        %v4382 = vsel %vm1467, %v4374, %v4358
        %v4383 = vsel %vm1467, %v4375, %v4359
        %v4384 = vsel %vm1467, %v4376, %v4360
        %v4385 = vsel %vm1467, %v4377, %v4361
        %v4386 = vsel %vm1467, %v4378, %v4362
        %v4387 = vsel %vm1467, %v4379, %v4363
        %v4388 = vsel %vm1467, %v4380, %v4364
        %v4389 = vsel %vm1467, %v4381, %v4365
        %s4390 = smul.u32 12, 16
        %s4391 = scalar_lea.vmem [#allocation4], %s4390
        %v4392 = vld [vmem:[%s4391] sm:$0xff]
        %v4393 = vld [vmem:[%s4391 + $0x8] sm:$0xff]
        %v4394 = vld [vmem:[%s4391 + $0x10] sm:$0xff]
        %v4395 = vld [vmem:[%s4391 + $0x18] sm:$0xff]
        %v4396 = vld [vmem:[%s4391 + $0x20] sm:$0xff]
        %v4397 = vld [vmem:[%s4391 + $0x28] sm:$0xff]
        %v4398 = vld [vmem:[%s4391 + $0x30] sm:$0xff]
        %v4399 = vld [vmem:[%s4391 + $0x38] sm:$0xff]
        %4408 = vrot.lane.b32.xlu0 %v4392, 32
        %v4409 = vpop.permute.xlu0 %4408
        %4410 = vrot.lane.b32.xlu0 %v4393, 32
        %v4411 = vpop.permute.xlu0 %4410
        %4412 = vrot.lane.b32.xlu0 %v4394, 32
        %v4413 = vpop.permute.xlu0 %4412
        %4414 = vrot.lane.b32.xlu0 %v4395, 32
        %v4415 = vpop.permute.xlu0 %4414
        %4416 = vrot.lane.b32.xlu0 %v4396, 32
        %v4417 = vpop.permute.xlu0 %4416
        %4418 = vrot.lane.b32.xlu0 %v4397, 32
        %v4419 = vpop.permute.xlu0 %4418
        %4420 = vrot.lane.b32.xlu0 %v4398, 32
        %v4421 = vpop.permute.xlu0 %4420
        %4422 = vrot.lane.b32.xlu0 %v4399, 32
        %v4423 = vpop.permute.xlu0 %4422
        %v4432 = vmul.f32 %v4382, %v4409
        %v4433 = vmul.f32 %v4383, %v4411
        %v4434 = vmul.f32 %v4384, %v4413
        %v4435 = vmul.f32 %v4385, %v4415
        %v4436 = vmul.f32 %v4386, %v4417
        %v4437 = vmul.f32 %v4387, %v4419
        %v4438 = vmul.f32 %v4388, %v4421
        %v4439 = vmul.f32 %v4389, %v4423
        %4448 = vrot.lane.b32.xlu0 %v4382, 32
        %v4449 = vpop.permute.xlu0 %4448
        %4450 = vrot.lane.b32.xlu0 %v4383, 32
        %v4451 = vpop.permute.xlu0 %4450
        %4452 = vrot.lane.b32.xlu0 %v4384, 32
        %v4453 = vpop.permute.xlu0 %4452
        %4454 = vrot.lane.b32.xlu0 %v4385, 32
        %v4455 = vpop.permute.xlu0 %4454
        %4456 = vrot.lane.b32.xlu0 %v4386, 32
        %v4457 = vpop.permute.xlu0 %4456
        %4458 = vrot.lane.b32.xlu0 %v4387, 32
        %v4459 = vpop.permute.xlu0 %4458
        %4460 = vrot.lane.b32.xlu0 %v4388, 32
        %v4461 = vpop.permute.xlu0 %4460
        %4462 = vrot.lane.b32.xlu0 %v4389, 32
        %v4463 = vpop.permute.xlu0 %4462
        %v4472 = vmul.f32 %v4382, %v4449
        %v4473 = vmul.f32 %v4383, %v4451
        %v4474 = vmul.f32 %v4384, %v4453
        %v4475 = vmul.f32 %v4385, %v4455
        %v4476 = vmul.f32 %v4386, %v4457
        %v4477 = vmul.f32 %v4387, %v4459
        %v4478 = vmul.f32 %v4388, %v4461
        %v4479 = vmul.f32 %v4389, %v4463
        %4488 = vrot.lane.b32.xlu0 %v4472, 32
        %v4489 = vpop.permute.xlu0 %4488
        %4490 = vrot.lane.b32.xlu0 %v4473, 32
        %v4491 = vpop.permute.xlu0 %4490
        %4492 = vrot.lane.b32.xlu0 %v4474, 32
        %v4493 = vpop.permute.xlu0 %4492
        %4494 = vrot.lane.b32.xlu0 %v4475, 32
        %v4495 = vpop.permute.xlu0 %4494
        %4496 = vrot.lane.b32.xlu0 %v4476, 32
        %v4497 = vpop.permute.xlu0 %4496
        %4498 = vrot.lane.b32.xlu0 %v4477, 32
        %v4499 = vpop.permute.xlu0 %4498
        %4500 = vrot.lane.b32.xlu0 %v4478, 32
        %v4501 = vpop.permute.xlu0 %4500
        %4502 = vrot.lane.b32.xlu0 %v4479, 32
        %v4503 = vpop.permute.xlu0 %4502
        %v4512 = vadd.f32 %v4432, %v4489
        %v4513 = vadd.f32 %v4433, %v4491
        %v4514 = vadd.f32 %v4434, %v4493
        %v4515 = vadd.f32 %v4435, %v4495
        %v4516 = vadd.f32 %v4436, %v4497
        %v4517 = vadd.f32 %v4437, %v4499
        %v4518 = vadd.f32 %v4438, %v4501
        %v4519 = vadd.f32 %v4439, %v4503
        %v4520 = vtanh.pop %v4512
        %v4521 = vtanh.pop %v4513
        %v4522 = vtanh.pop %v4514
        %v4523 = vtanh.pop %v4515
        %v4524 = vtanh.pop %v4516
        %v4525 = vtanh.pop %v4517
        %v4526 = vtanh.pop %v4518
        %v4527 = vtanh.pop %v4519
        %4536 = vrot.lane.b32.xlu0 %v4520, 32
        %v4537 = vpop.permute.xlu0 %4536
        %4538 = vrot.lane.b32.xlu0 %v4521, 32
        %v4539 = vpop.permute.xlu0 %4538
        %4540 = vrot.lane.b32.xlu0 %v4522, 32
        %v4541 = vpop.permute.xlu0 %4540
        %4542 = vrot.lane.b32.xlu0 %v4523, 32
        %v4543 = vpop.permute.xlu0 %4542
        %4544 = vrot.lane.b32.xlu0 %v4524, 32
        %v4545 = vpop.permute.xlu0 %4544
        %4546 = vrot.lane.b32.xlu0 %v4525, 32
        %v4547 = vpop.permute.xlu0 %4546
        %4548 = vrot.lane.b32.xlu0 %v4526, 32
        %v4549 = vpop.permute.xlu0 %4548
        %4550 = vrot.lane.b32.xlu0 %v4527, 32
        %v4551 = vpop.permute.xlu0 %4550
        %v4560 = vmul.f32 %v4382, %v4537
        %v4561 = vmul.f32 %v4383, %v4539
        %v4562 = vmul.f32 %v4384, %v4541
        %v4563 = vmul.f32 %v4385, %v4543
        %v4564 = vmul.f32 %v4386, %v4545
        %v4565 = vmul.f32 %v4387, %v4547
        %v4566 = vmul.f32 %v4388, %v4549
        %v4567 = vmul.f32 %v4389, %v4551
        %4576 = vrot.lane.b32.xlu0 %v4512, 96
        %v4577 = vpop.permute.xlu0 %4576
        %4578 = vrot.lane.b32.xlu0 %v4513, 96
        %v4579 = vpop.permute.xlu0 %4578
        %4580 = vrot.lane.b32.xlu0 %v4514, 96
        %v4581 = vpop.permute.xlu0 %4580
        %4582 = vrot.lane.b32.xlu0 %v4515, 96
        %v4583 = vpop.permute.xlu0 %4582
        %4584 = vrot.lane.b32.xlu0 %v4516, 96
        %v4585 = vpop.permute.xlu0 %4584
        %4586 = vrot.lane.b32.xlu0 %v4517, 96
        %v4587 = vpop.permute.xlu0 %4586
        %4588 = vrot.lane.b32.xlu0 %v4518, 96
        %v4589 = vpop.permute.xlu0 %4588
        %4590 = vrot.lane.b32.xlu0 %v4519, 96
        %v4591 = vpop.permute.xlu0 %4590
        %4600 = vst.msk [vmem:[%s4391] sm:$0xff] %vm580, %v4577
        %4601 = vst.msk [vmem:[%s4391 + $0x8] sm:$0xff] %vm580, %v4579
        %4602 = vst.msk [vmem:[%s4391 + $0x10] sm:$0xff] %vm580, %v4581
        %4603 = vst.msk [vmem:[%s4391 + $0x18] sm:$0xff] %vm580, %v4583
        %4604 = vst.msk [vmem:[%s4391 + $0x20] sm:$0xff] %vm580, %v4585
        %4605 = vst.msk [vmem:[%s4391 + $0x28] sm:$0xff] %vm580, %v4587
        %4606 = vst.msk [vmem:[%s4391 + $0x30] sm:$0xff] %vm580, %v4589
        %4607 = vst.msk [vmem:[%s4391 + $0x38] sm:$0xff] %vm580, %v4591
        %4616 = vrot.lane.b32.xlu0 %v4560, 64
        %v4617 = vpop.permute.xlu0 %4616
        %4618 = vrot.lane.b32.xlu0 %v4561, 64
        %v4619 = vpop.permute.xlu0 %4618
        %4620 = vrot.lane.b32.xlu0 %v4562, 64
        %v4621 = vpop.permute.xlu0 %4620
        %4622 = vrot.lane.b32.xlu0 %v4563, 64
        %v4623 = vpop.permute.xlu0 %4622
        %4624 = vrot.lane.b32.xlu0 %v4564, 64
        %v4625 = vpop.permute.xlu0 %4624
        %4626 = vrot.lane.b32.xlu0 %v4565, 64
        %v4627 = vpop.permute.xlu0 %4626
        %4628 = vrot.lane.b32.xlu0 %v4566, 64
        %v4629 = vpop.permute.xlu0 %4628
        %4630 = vrot.lane.b32.xlu0 %v4567, 64
        %v4631 = vpop.permute.xlu0 %4630
        %s4640 = scalar_lea.vmem [#allocation3], %s4390
        %4641 = vst.msk [vmem:[%s4640] sm:$0xff] %vm580, %v4617
        %4642 = vst.msk [vmem:[%s4640 + $0x8] sm:$0xff] %vm580, %v4619
        %4643 = vst.msk [vmem:[%s4640 + $0x10] sm:$0xff] %vm580, %v4621
        %4644 = vst.msk [vmem:[%s4640 + $0x18] sm:$0xff] %vm580, %v4623
        %4645 = vst.msk [vmem:[%s4640 + $0x20] sm:$0xff] %vm580, %v4625
        %4646 = vst.msk [vmem:[%s4640 + $0x28] sm:$0xff] %vm580, %v4627
        %4647 = vst.msk [vmem:[%s4640 + $0x30] sm:$0xff] %vm580, %v4629
        %4648 = vst.msk [vmem:[%s4640 + $0x38] sm:$0xff] %vm580, %v4631
        // Predicated region
        $region45: #{convlstm_seq_fast.1} parent=35 // pred_check
          %p4649 = pneg %p262
        $region46: #{convlstm_seq_fast.1} parent=35 // pred_check_branch
          %4651 = sbr.rel (%p4649) target = $region48
        $region47: #{convlstm_seq_fast.1} parent=35 // pred_region
          %v4652 = vld [vmem:[#allocation3] sm:$0xff]
          %v4653 = vld [vmem:[#allocation3 + $0x8] sm:$0xff]
          %v4654 = vld [vmem:[#allocation3 + $0x10] sm:$0xff]
          %v4655 = vld [vmem:[#allocation3 + $0x18] sm:$0xff]
          %v4656 = vld [vmem:[#allocation3 + $0x20] sm:$0xff]
          %v4657 = vld [vmem:[#allocation3 + $0x28] sm:$0xff]
          %v4658 = vld [vmem:[#allocation3 + $0x30] sm:$0xff]
          %v4659 = vld [vmem:[#allocation3 + $0x38] sm:$0xff]
          %v4660 = vld [vmem:[#allocation3 + $0x40] sm:$0xff]
          %v4661 = vld [vmem:[#allocation3 + $0x48] sm:$0xff]
          %v4662 = vld [vmem:[#allocation3 + $0x50] sm:$0xff]
          %v4663 = vld [vmem:[#allocation3 + $0x58] sm:$0xff]
          %v4664 = vld [vmem:[#allocation3 + $0x60] sm:$0xff]
          %v4665 = vld [vmem:[#allocation3 + $0x68] sm:$0xff]
          %v4666 = vld [vmem:[#allocation3 + $0x70] sm:$0xff]
          %v4667 = vld [vmem:[#allocation3 + $0x78] sm:$0xff]
          %v4668 = vld [vmem:[#allocation3 + $0x80] sm:$0xff]
          %v4669 = vld [vmem:[#allocation3 + $0x88] sm:$0xff]
          %v4670 = vld [vmem:[#allocation3 + $0x90] sm:$0xff]
          %v4671 = vld [vmem:[#allocation3 + $0x98] sm:$0xff]
          %v4672 = vld [vmem:[#allocation3 + $0xa0] sm:$0xff]
          %v4673 = vld [vmem:[#allocation3 + $0xa8] sm:$0xff]
          %v4674 = vld [vmem:[#allocation3 + $0xb0] sm:$0xff]
          %v4675 = vld [vmem:[#allocation3 + $0xb8] sm:$0xff]
          %v4676 = vld [vmem:[#allocation3 + $0xc0] sm:$0xff]
          %v4677 = vld [vmem:[#allocation3 + $0xc8] sm:$0xff]
          %v4678 = vld [vmem:[#allocation3 + $0xd0] sm:$0xff]
          %v4679 = vld [vmem:[#allocation3 + $0xd8] sm:$0xff]
          %v4680 = vld [vmem:[#allocation3 + $0xe0] sm:$0xff]
          %v4681 = vld [vmem:[#allocation3 + $0xe8] sm:$0xff]
          %v4682 = vld [vmem:[#allocation3 + $0xf0] sm:$0xff]
          %v4683 = vld [vmem:[#allocation3 + $0xf8] sm:$0xff]
          %v4684 = vld [vmem:[#allocation4] sm:$0xff]
          %v4685 = vld [vmem:[#allocation4 + $0x8] sm:$0xff]
          %v4686 = vld [vmem:[#allocation4 + $0x10] sm:$0xff]
          %v4687 = vld [vmem:[#allocation4 + $0x18] sm:$0xff]
          %v4688 = vld [vmem:[#allocation4 + $0x20] sm:$0xff]
          %v4689 = vld [vmem:[#allocation4 + $0x28] sm:$0xff]
          %v4690 = vld [vmem:[#allocation4 + $0x30] sm:$0xff]
          %v4691 = vld [vmem:[#allocation4 + $0x38] sm:$0xff]
          %v4692 = vld [vmem:[#allocation4 + $0x40] sm:$0xff]
          %v4693 = vld [vmem:[#allocation4 + $0x48] sm:$0xff]
          %v4694 = vld [vmem:[#allocation4 + $0x50] sm:$0xff]
          %v4695 = vld [vmem:[#allocation4 + $0x58] sm:$0xff]
          %v4696 = vld [vmem:[#allocation4 + $0x60] sm:$0xff]
          %v4697 = vld [vmem:[#allocation4 + $0x68] sm:$0xff]
          %v4698 = vld [vmem:[#allocation4 + $0x70] sm:$0xff]
          %v4699 = vld [vmem:[#allocation4 + $0x78] sm:$0xff]
          %v4700 = vld [vmem:[#allocation4 + $0x80] sm:$0xff]
          %v4701 = vld [vmem:[#allocation4 + $0x88] sm:$0xff]
          %v4702 = vld [vmem:[#allocation4 + $0x90] sm:$0xff]
          %v4703 = vld [vmem:[#allocation4 + $0x98] sm:$0xff]
          %v4704 = vld [vmem:[#allocation4 + $0xa0] sm:$0xff]
          %v4705 = vld [vmem:[#allocation4 + $0xa8] sm:$0xff]
          %v4706 = vld [vmem:[#allocation4 + $0xb0] sm:$0xff]
          %v4707 = vld [vmem:[#allocation4 + $0xb8] sm:$0xff]
          %v4708 = vld [vmem:[#allocation4 + $0xc0] sm:$0xff]
          %v4709 = vld [vmem:[#allocation4 + $0xc8] sm:$0xff]
          %v4710 = vld [vmem:[#allocation4 + $0xd0] sm:$0xff]
          %v4711 = vld [vmem:[#allocation4 + $0xd8] sm:$0xff]
          %v4712 = vld [vmem:[#allocation4 + $0xe0] sm:$0xff]
          %v4713 = vld [vmem:[#allocation4 + $0xe8] sm:$0xff]
          %v4714 = vld [vmem:[#allocation4 + $0xf0] sm:$0xff]
          %v4715 = vld [vmem:[#allocation4 + $0xf8] sm:$0xff]
          %4748 = vrot.lane.b32.xlu0 %v4684, 32
          %v4749 = vpop.permute.xlu0 %4748
          %4750 = vrot.lane.b32.xlu0 %v4685, 32
          %v4751 = vpop.permute.xlu0 %4750
          %4752 = vrot.lane.b32.xlu0 %v4686, 32
          %v4753 = vpop.permute.xlu0 %4752
          %4754 = vrot.lane.b32.xlu0 %v4687, 32
          %v4755 = vpop.permute.xlu0 %4754
          %4756 = vrot.lane.b32.xlu0 %v4688, 32
          %v4757 = vpop.permute.xlu0 %4756
          %4758 = vrot.lane.b32.xlu0 %v4689, 32
          %v4759 = vpop.permute.xlu0 %4758
          %4760 = vrot.lane.b32.xlu0 %v4690, 32
          %v4761 = vpop.permute.xlu0 %4760
          %4762 = vrot.lane.b32.xlu0 %v4691, 32
          %v4763 = vpop.permute.xlu0 %4762
          %4764 = vrot.lane.b32.xlu0 %v4692, 32
          %v4765 = vpop.permute.xlu0 %4764
          %4766 = vrot.lane.b32.xlu0 %v4693, 32
          %v4767 = vpop.permute.xlu0 %4766
          %4768 = vrot.lane.b32.xlu0 %v4694, 32
          %v4769 = vpop.permute.xlu0 %4768
          %4770 = vrot.lane.b32.xlu0 %v4695, 32
          %v4771 = vpop.permute.xlu0 %4770
          %4772 = vrot.lane.b32.xlu0 %v4696, 32
          %v4773 = vpop.permute.xlu0 %4772
          %4774 = vrot.lane.b32.xlu0 %v4697, 32
          %v4775 = vpop.permute.xlu0 %4774
          %4776 = vrot.lane.b32.xlu0 %v4698, 32
          %v4777 = vpop.permute.xlu0 %4776
          %4778 = vrot.lane.b32.xlu0 %v4699, 32
          %v4779 = vpop.permute.xlu0 %4778
          %4780 = vrot.lane.b32.xlu0 %v4700, 32
          %v4781 = vpop.permute.xlu0 %4780
          %4782 = vrot.lane.b32.xlu0 %v4701, 32
          %v4783 = vpop.permute.xlu0 %4782
          %4784 = vrot.lane.b32.xlu0 %v4702, 32
          %v4785 = vpop.permute.xlu0 %4784
          %4786 = vrot.lane.b32.xlu0 %v4703, 32
          %v4787 = vpop.permute.xlu0 %4786
          %4788 = vrot.lane.b32.xlu0 %v4704, 32
          %v4789 = vpop.permute.xlu0 %4788
          %4790 = vrot.lane.b32.xlu0 %v4705, 32
          %v4791 = vpop.permute.xlu0 %4790
          %4792 = vrot.lane.b32.xlu0 %v4706, 32
          %v4793 = vpop.permute.xlu0 %4792
          %4794 = vrot.lane.b32.xlu0 %v4707, 32
          %v4795 = vpop.permute.xlu0 %4794
          %4796 = vrot.lane.b32.xlu0 %v4708, 32
          %v4797 = vpop.permute.xlu0 %4796
          %4798 = vrot.lane.b32.xlu0 %v4709, 32
          %v4799 = vpop.permute.xlu0 %4798
          %4800 = vrot.lane.b32.xlu0 %v4710, 32
          %v4801 = vpop.permute.xlu0 %4800
          %4802 = vrot.lane.b32.xlu0 %v4711, 32
          %v4803 = vpop.permute.xlu0 %4802
          %4804 = vrot.lane.b32.xlu0 %v4712, 32
          %v4805 = vpop.permute.xlu0 %4804
          %4806 = vrot.lane.b32.xlu0 %v4713, 32
          %v4807 = vpop.permute.xlu0 %4806
          %4808 = vrot.lane.b32.xlu0 %v4714, 32
          %v4809 = vpop.permute.xlu0 %4808
          %4810 = vrot.lane.b32.xlu0 %v4715, 32
          %v4811 = vpop.permute.xlu0 %4810
          %v4844 = vsel %vm580, %v4652, %v4749
          %v4845 = vsel %vm580, %v4653, %v4751
          %v4846 = vsel %vm580, %v4654, %v4753
          %v4847 = vsel %vm580, %v4655, %v4755
          %v4848 = vsel %vm580, %v4656, %v4757
          %v4849 = vsel %vm580, %v4657, %v4759
          %v4850 = vsel %vm580, %v4658, %v4761
          %v4851 = vsel %vm580, %v4659, %v4763
          %v4852 = vsel %vm580, %v4660, %v4765
          %v4853 = vsel %vm580, %v4661, %v4767
          %v4854 = vsel %vm580, %v4662, %v4769
          %v4855 = vsel %vm580, %v4663, %v4771
          %v4856 = vsel %vm580, %v4664, %v4773
          %v4857 = vsel %vm580, %v4665, %v4775
          %v4858 = vsel %vm580, %v4666, %v4777
          %v4859 = vsel %vm580, %v4667, %v4779
          %v4860 = vsel %vm580, %v4668, %v4781
          %v4861 = vsel %vm580, %v4669, %v4783
          %v4862 = vsel %vm580, %v4670, %v4785
          %v4863 = vsel %vm580, %v4671, %v4787
          %v4864 = vsel %vm580, %v4672, %v4789
          %v4865 = vsel %vm580, %v4673, %v4791
          %v4866 = vsel %vm580, %v4674, %v4793
          %v4867 = vsel %vm580, %v4675, %v4795
          %v4868 = vsel %vm580, %v4676, %v4797
          %v4869 = vsel %vm580, %v4677, %v4799
          %v4870 = vsel %vm580, %v4678, %v4801
          %v4871 = vsel %vm580, %v4679, %v4803
          %v4872 = vsel %vm580, %v4680, %v4805
          %v4873 = vsel %vm580, %v4681, %v4807
          %v4874 = vsel %vm580, %v4682, %v4809
          %v4875 = vsel %vm580, %v4683, %v4811
          %4876 = vst.msk [vmem:[%s252] sm:$0xff] %vm1015, %v4844
          %4877 = vst.msk [vmem:[%s252 + $0x8] sm:$0xff] %vm1015, %v4845
          %4878 = vst.msk [vmem:[%s252 + $0x10] sm:$0xff] %vm1015, %v4846
          %4879 = vst.msk [vmem:[%s252 + $0x18] sm:$0xff] %vm1015, %v4847
          %4880 = vst.msk [vmem:[%s252 + $0x20] sm:$0xff] %vm1015, %v4848
          %4881 = vst.msk [vmem:[%s252 + $0x28] sm:$0xff] %vm1015, %v4849
          %4882 = vst.msk [vmem:[%s252 + $0x30] sm:$0xff] %vm1015, %v4850
          %4883 = vst.msk [vmem:[%s252 + $0x38] sm:$0xff] %vm1015, %v4851
          %4884 = vst.msk [vmem:[%s252 + $0x40] sm:$0xff] %vm1015, %v4852
          %4885 = vst.msk [vmem:[%s252 + $0x48] sm:$0xff] %vm1015, %v4853
          %4886 = vst.msk [vmem:[%s252 + $0x50] sm:$0xff] %vm1015, %v4854
          %4887 = vst.msk [vmem:[%s252 + $0x58] sm:$0xff] %vm1015, %v4855
          %4888 = vst.msk [vmem:[%s252 + $0x60] sm:$0xff] %vm1015, %v4856
          %4889 = vst.msk [vmem:[%s252 + $0x68] sm:$0xff] %vm1015, %v4857
          %4890 = vst.msk [vmem:[%s252 + $0x70] sm:$0xff] %vm1015, %v4858
          %4891 = vst.msk [vmem:[%s252 + $0x78] sm:$0xff] %vm1015, %v4859
          %4892 = vst.msk [vmem:[%s252 + $0x80] sm:$0xff] %vm1015, %v4860
          %4893 = vst.msk [vmem:[%s252 + $0x88] sm:$0xff] %vm1015, %v4861
          %4894 = vst.msk [vmem:[%s252 + $0x90] sm:$0xff] %vm1015, %v4862
          %4895 = vst.msk [vmem:[%s252 + $0x98] sm:$0xff] %vm1015, %v4863
          %4896 = vst.msk [vmem:[%s252 + $0xa0] sm:$0xff] %vm1015, %v4864
          %4897 = vst.msk [vmem:[%s252 + $0xa8] sm:$0xff] %vm1015, %v4865
          %4898 = vst.msk [vmem:[%s252 + $0xb0] sm:$0xff] %vm1015, %v4866
          %4899 = vst.msk [vmem:[%s252 + $0xb8] sm:$0xff] %vm1015, %v4867
          %4900 = vst.msk [vmem:[%s252 + $0xc0] sm:$0xff] %vm1015, %v4868
          %4901 = vst.msk [vmem:[%s252 + $0xc8] sm:$0xff] %vm1015, %v4869
          %4902 = vst.msk [vmem:[%s252 + $0xd0] sm:$0xff] %vm1015, %v4870
          %4903 = vst.msk [vmem:[%s252 + $0xd8] sm:$0xff] %vm1015, %v4871
          %4904 = vst.msk [vmem:[%s252 + $0xe0] sm:$0xff] %vm1015, %v4872
          %4905 = vst.msk [vmem:[%s252 + $0xe8] sm:$0xff] %vm1015, %v4873
          %4906 = vst.msk [vmem:[%s252 + $0xf0] sm:$0xff] %vm1015, %v4874
          %4907 = vst.msk [vmem:[%s252 + $0xf8] sm:$0xff] %vm1015, %v4875
        $region48: #{convlstm_seq_fast.1} parent=35 // pred_fallthru
          _
        %s4908 = sand.u32 %s137, 1
        %s4909 = scalar_lea.sflag [#allocation7], %s4908
        %s4910 = sand.u32 %s137, 1
        %s4911 = smul.addr %s4910, 256
        %s4912 = scalar_lea.vmem [#allocation8], %s4911
        // Predicated region
        $region49: #{convlstm_seq_fast.1} parent=35 // pred_check
          %p4913 = pneg %p147
        $region50: #{convlstm_seq_fast.1} parent=35 // pred_check_branch
          %4915 = sbr.rel (%p4913) target = $region52
        $region51: #{convlstm_seq_fast.1} parent=35 // pred_region
          %s4917 = ssub.s32 4096, 4096
          %4918 = vsyncadd %s4909, %s4917
          %s4919 = smul.addr %s25, 32
          %s4920 = smul.addr %s4919, 128
          %s4921 = scalar_lea.hbm %s4, %s4920
          %s4922 = sshll.u32 %s4912, 4
          %s4923 = int_to_ptr.vmem [resolvable:$true] %s4922
          %4928 = dma.vmem_to_hbm [thread:$0]  %s4923, 4096, %s4921, %s4909, 128, 128, 8
        $region52: #{convlstm_seq_fast.1} parent=35 // pred_fallthru
          _
      $region36: #{convlstm_seq_fast.1} parent=5 // pred_fallthru
        _
      %p4929 = scmp.le.s32.totalorder 2, %s16
      // Predicated region
      $region53: #{convlstm_seq_fast.1} parent=5 // pred_check
        %p4930 = pneg %p4929
      $region54: #{convlstm_seq_fast.1} parent=5 // pred_check_branch
        %4932 = sbr.rel (%p4930) target = $region56
      $region55: #{convlstm_seq_fast.1} parent=5 // pred_region
        %s4933 = ssub.s32 %s16, 2
        // Predicated region
        $region57: #{convlstm_seq_fast.1} parent=55 // pred_check
          %p4934 = pneg %p153
        $region58: #{convlstm_seq_fast.1} parent=55 // pred_check_branch
          %4936 = sbr.rel (%p4934) target = $region60
        $region59: #{convlstm_seq_fast.1} parent=55 // pred_region
          %s4937 = sand.u32 %s138, 1
          %s4938 = scalar_lea.sflag [#allocation7], %s4937
          %s4939 = sand.u32 %s138, 1
          %s4940 = smul.addr %s4939, 256
          %s4941 = scalar_lea.vmem [#allocation8], %s4940
          %4942 = dma.done %s4938, 4096
        $region60: #{convlstm_seq_fast.1} parent=55 // pred_fallthru
          _
      $region56: #{convlstm_seq_fast.1} parent=5 // pred_fallthru
        _
    $region6: #{convlstm_seq_fast.1} parent=1 // loop_footer
      %s20 = sadd.s32 1, %s16
    $region7: #{convlstm_seq_fast.1} parent=1 // loop_footer_branch
      %15 = sbr.rel target = $region3
    $region8: #{convlstm_seq_fast.1} parent=1 // loop_exit
      _
    %4943 = vsyncpa [#allocation6], 1
    %s4944 = scalar_lea.sflag [#allocation6], 1
    %4945 = vsyncpa %s4944, 1
    %4946 = vsyncpa [#allocation7], 1
    %s4947 = scalar_lea.sflag [#allocation7], 1
    %4948 = vsyncpa %s4947, 1

</llo_original>
